<compile_context>
chip_gen: v5e
topology: v5e:2x2
jax: 0.10.0
libtpu: 0.0.40
codegen_flags: <defaults>
</compile_context>

<pallas_src>
import functools

import jax
import jax.numpy as jnp
from jax.experimental import pallas as pl
from jax.experimental.pallas import tpu as pltpu

DIM = 128  # hidden width fixed by the PyTorch module


def nerf_kernel(num_layers, x_ref, *refs):
    """Forward for one tile of rows.

    refs = (w_in, b_in,
            per hidden layer i:  [w_x, w_skip, b] if skip else [w, b],
            w_out, b_out,
            o_ref)
    Weights are bf16 [in_f, out_f]; biases are f32 [1, out_f].
    """
    o_ref = refs[-1]
    p = refs[:-1]

    inputs = x_ref[...]  # bf16 [tile, d_in_pad]

    idx = 0
    w_in = p[idx][...]
    b_in = p[idx + 1][...]
    idx += 2
    x = jnp.maximum(
        jnp.dot(inputs, w_in, preferred_element_type=jnp.float32) + b_in, 0.0
    )

    for i in range(num_layers):
        if i % 4 == 0 and i > 0:
            # Skip connection without lane-axis concat:
            #   relu([x, inputs] @ W + b) == relu(x @ W[:dim] + inputs @ W[dim:] + b)
            w_x = p[idx][...]
            w_s = p[idx + 1][...]
            b = p[idx + 2][...]
            idx += 3
            acc = jnp.dot(x.astype(jnp.bfloat16), w_x,
                          preferred_element_type=jnp.float32)
            acc = acc + jnp.dot(inputs, w_s,
                                preferred_element_type=jnp.float32)
        else:
            w = p[idx][...]
            b = p[idx + 1][...]
            idx += 2
            acc = jnp.dot(x.astype(jnp.bfloat16), w,
                          preferred_element_type=jnp.float32)
        x = jnp.maximum(acc + b, 0.0)

    w_out = p[idx][...]
    b_out = p[idx + 1][...]
    out = jnp.dot(x.astype(jnp.bfloat16), w_out,
                  preferred_element_type=jnp.float32) + b_out
    o_ref[...] = out.astype(o_ref.dtype)


def _pad_rows(w, rows):
    return jnp.zeros((rows, w.shape[1]), w.dtype).at[: w.shape[0]].set(w)


def prepare_params(params, num_layers, d_in_pad, dim=DIM):
    """Pad/split/cast the f32 [in_f,out_f]/[1,out_f] params for the kernel."""
    out = []
    w_in, b_in = params[0], params[1]
    out += [_pad_rows(w_in, d_in_pad).astype(jnp.bfloat16),
            b_in.astype(jnp.float32)]
    for i in range(num_layers):
        w, b = params[2 + 2 * i], params[3 + 2 * i]
        if i % 4 == 0 and i > 0:
            # Row-split the skip weight: rows [:dim] act on x, rows [dim:] on inputs.
            out += [w[:dim].astype(jnp.bfloat16),
                    _pad_rows(w[dim:], d_in_pad).astype(jnp.bfloat16),
                    b.astype(jnp.float32)]
        else:
            out += [w.astype(jnp.bfloat16), b.astype(jnp.float32)]
    w_out, b_out = params[-2], params[-1]
    out += [w_out.astype(jnp.bfloat16), b_out.astype(jnp.float32)]
    return out


def _const_index_map(ndim):
    # Factory avoids the late-binding-lambda pitfall.
    return lambda i: (0,) * ndim


def nerf_forward(inputs, params, *, num_layers, tile=1024):
    """inputs: [N, d_in] float32.  params: flat list of (W, b) in f32."""
    n, d_in = inputs.shape
    d_in_pad = ((d_in + 127) // 128) * 128
    n_pad = ((n + tile - 1) // tile) * tile

    # Zero-pad rows (ragged N) and feature lanes (99 -> 128), cast to bf16.
    x = jnp.zeros((n_pad, d_in_pad), jnp.bfloat16)
    x = x.at[:n, :d_in].set(inputs.astype(jnp.bfloat16))

    kparams = prepare_params(params, num_layers, d_in_pad)
    out_dim = params[-1].shape[-1]

    param_specs = [
        pl.BlockSpec(p.shape, _const_index_map(p.ndim)) for p in kparams
    ]

    kernel = functools.partial(nerf_kernel, num_layers)

    out = pl.pallas_call(
        kernel,
        out_shape=jax.ShapeDtypeStruct((n_pad, out_dim), jnp.float32),
        grid_spec=pltpu.PrefetchScalarGridSpec(
            num_scalar_prefetch=0,
            grid=(n_pad // tile,),
            in_specs=[pl.BlockSpec((tile, d_in_pad), lambda i: (i, 0))]
            + param_specs,
            out_specs=pl.BlockSpec((tile, out_dim), lambda i: (i, 0)),
        ),
        compiler_params=pltpu.CompilerParams(
            dimension_semantics=("parallel",),
            vmem_limit_bytes=48 * 1024 * 1024,
        ),
    )(x, *kparams)
    return out[:n]


def init_nerf_params(key, num_layers, pos_encode_dims=16, dim=DIM):
    """Synthetic init matching the PyTorch module's shapes.

    Weights stored [in_features, out_features]; biases [1, out_features]. f32.
    """
    d_in = 2 * 3 * pos_encode_dims + 3  # 99 for pos_encode_dims=16
    params = []

    def linear(key, fan_in, fan_out):
        kw, kb = jax.random.split(key)
        bound = 1.0 / jnp.sqrt(fan_in)
        w = jax.random.uniform(kw, (fan_in, fan_out), jnp.float32, -bound, bound)
        b = jax.random.uniform(kb, (1, fan_out), jnp.float32, -bound, bound)
        return w, b

    keys = jax.random.split(key, num_layers + 2)

    w, b = linear(keys[0], d_in, dim)
    params += [w, b]
    for i in range(num_layers):
        fan_in = d_in + dim if (i % 4 == 0 and i > 0) else dim
        w, b = linear(keys[1 + i], fan_in, dim)
        params += [w, b]
    w, b = linear(keys[-1], dim, 4)
    params += [w, b]
    return params, d_in


def nerf_reference_f32(inputs, params, num_layers):
    """Plain-JAX f32 reference identical to the PyTorch forward."""
    x = jax.nn.relu(inputs @ params[0] + params[1])
    for i in range(num_layers):
        w_i, b_i = params[2 + 2 * i], params[3 + 2 * i]
        if i % 4 == 0 and i > 0:
            x = jnp.concatenate([x, inputs], axis=-1)
        x = jax.nn.relu(x @ w_i + b_i)
    return x @ params[-2] + params[-1]


def nerf_reference_bf16(inputs, params, num_layers):
    """Same math with bf16 matmul operands / f32 accumulation (kernel dtype path)."""

    def mm(a, w):
        return jnp.dot(a.astype(jnp.bfloat16), w.astype(jnp.bfloat16),
                       preferred_element_type=jnp.float32)

    x = jax.nn.relu(mm(inputs, params[0]) + params[1])
    for i in range(num_layers):
        w_i, b_i = params[2 + 2 * i], params[3 + 2 * i]
        if i % 4 == 0 and i > 0:
            x = jnp.concatenate([x, inputs], axis=-1)
        x = jax.nn.relu(mm(x, w_i) + b_i)
    return mm(x, params[-2]) + params[-1]


if __name__ == "__main__":
    num_layers = 8          # exercises the skip-connection branch at i == 4
    num_pos = 32            # unused in forward (matches the PyTorch module)
    pos_encode_dims = 16
    n_samples = 4096        # 8 row-tiles of 512 (>= 2 grid steps for megacore)
    tile = 512

    key = jax.random.PRNGKey(0)
    k_params, k_inputs = jax.random.split(key)

    params, d_in = init_nerf_params(k_params, num_layers, pos_encode_dims)
    inputs = jax.random.normal(k_inputs, (n_samples, d_in), jnp.float32)

    out = nerf_forward(inputs, params, num_layers=num_layers, tile=tile)
    out = jax.block_until_ready(out)
    assert out.shape == (n_samples, 4)

    ref_bf16 = nerf_reference_bf16(inputs, params, num_layers)
    ref_f32 = nerf_reference_f32(inputs, params, num_layers)
    assert jnp.allclose(out, ref_bf16, atol=2e-2, rtol=2e-2), \
        "mismatch vs bf16-path reference"
    assert jnp.allclose(out, ref_f32, atol=1e-1, rtol=1e-1), \
        "mismatch vs f32 reference"

    # TODO(synk): save_param/load_param are host-side file I/O (no Pallas equivalent).
    print("KERNEL_OK")
</pallas_src>

<mosaic_0001>
module attributes {stable_mosaic.version = 11 : i64} {
  func.func @nerf_kernel(%arg0: i32, %arg1: memref<512x128xbf16, #tpu.memory_space<vmem>>, %arg2: memref<128x128xbf16, #tpu.memory_space<vmem>>, %arg3: memref<1x128xf32, #tpu.memory_space<vmem>>, %arg4: memref<128x128xbf16, #tpu.memory_space<vmem>>, %arg5: memref<1x128xf32, #tpu.memory_space<vmem>>, %arg6: memref<128x128xbf16, #tpu.memory_space<vmem>>, %arg7: memref<1x128xf32, #tpu.memory_space<vmem>>, %arg8: memref<128x128xbf16, #tpu.memory_space<vmem>>, %arg9: memref<1x128xf32, #tpu.memory_space<vmem>>, %arg10: memref<128x128xbf16, #tpu.memory_space<vmem>>, %arg11: memref<1x128xf32, #tpu.memory_space<vmem>>, %arg12: memref<128x128xbf16, #tpu.memory_space<vmem>>, %arg13: memref<128x128xbf16, #tpu.memory_space<vmem>>, %arg14: memref<1x128xf32, #tpu.memory_space<vmem>>, %arg15: memref<128x128xbf16, #tpu.memory_space<vmem>>, %arg16: memref<1x128xf32, #tpu.memory_space<vmem>>, %arg17: memref<128x128xbf16, #tpu.memory_space<vmem>>, %arg18: memref<1x128xf32, #tpu.memory_space<vmem>>, %arg19: memref<128x128xbf16, #tpu.memory_space<vmem>>, %arg20: memref<1x128xf32, #tpu.memory_space<vmem>>, %arg21: memref<128x4xbf16, #tpu.memory_space<vmem>>, %arg22: memref<1x4xf32, #tpu.memory_space<vmem>>, %arg23: memref<512x4xf32, #tpu.memory_space<vmem>>) attributes {dimension_semantics = [#tpu.dimension_semantics<parallel>], iteration_bounds = array<i64: 8>, scalar_prefetch = 0 : i64, scratch_operands = 0 : i64, tpu.core_type = #tpu.core_type<tc>, window_params = [{transform_indices = @transform_0, window_bounds = array<i64: 512, 128>}, {pipeline_mode = #tpu.pipeline_mode<synchronous>, transform_indices = @transform_1, window_bounds = array<i64: 128, 128>}, {pipeline_mode = #tpu.pipeline_mode<synchronous>, transform_indices = @transform_2, window_bounds = array<i64: 1, 128>}, {pipeline_mode = #tpu.pipeline_mode<synchronous>, transform_indices = @transform_3, window_bounds = array<i64: 128, 128>}, {pipeline_mode = #tpu.pipeline_mode<synchronous>, transform_indices = @transform_4, window_bounds = array<i64: 1, 128>}, {pipeline_mode = #tpu.pipeline_mode<synchronous>, transform_indices = @transform_5, window_bounds = array<i64: 128, 128>}, {pipeline_mode = #tpu.pipeline_mode<synchronous>, transform_indices = @transform_6, window_bounds = array<i64: 1, 128>}, {pipeline_mode = #tpu.pipeline_mode<synchronous>, transform_indices = @transform_7, window_bounds = array<i64: 128, 128>}, {pipeline_mode = #tpu.pipeline_mode<synchronous>, transform_indices = @transform_8, window_bounds = array<i64: 1, 128>}, {pipeline_mode = #tpu.pipeline_mode<synchronous>, transform_indices = @transform_9, window_bounds = array<i64: 128, 128>}, {pipeline_mode = #tpu.pipeline_mode<synchronous>, transform_indices = @transform_10, window_bounds = array<i64: 1, 128>}, {pipeline_mode = #tpu.pipeline_mode<synchronous>, transform_indices = @transform_11, window_bounds = array<i64: 128, 128>}, {pipeline_mode = #tpu.pipeline_mode<synchronous>, transform_indices = @transform_12, window_bounds = array<i64: 128, 128>}, {pipeline_mode = #tpu.pipeline_mode<synchronous>, transform_indices = @transform_13, window_bounds = array<i64: 1, 128>}, {pipeline_mode = #tpu.pipeline_mode<synchronous>, transform_indices = @transform_14, window_bounds = array<i64: 128, 128>}, {pipeline_mode = #tpu.pipeline_mode<synchronous>, transform_indices = @transform_15, window_bounds = array<i64: 1, 128>}, {pipeline_mode = #tpu.pipeline_mode<synchronous>, transform_indices = @transform_16, window_bounds = array<i64: 128, 128>}, {pipeline_mode = #tpu.pipeline_mode<synchronous>, transform_indices = @transform_17, window_bounds = array<i64: 1, 128>}, {pipeline_mode = #tpu.pipeline_mode<synchronous>, transform_indices = @transform_18, window_bounds = array<i64: 128, 128>}, {pipeline_mode = #tpu.pipeline_mode<synchronous>, transform_indices = @transform_19, window_bounds = array<i64: 1, 128>}, {pipeline_mode = #tpu.pipeline_mode<synchronous>, transform_indices = @transform_20, window_bounds = array<i64: 128, 4>}, {pipeline_mode = #tpu.pipeline_mode<synchronous>, transform_indices = @transform_21, window_bounds = array<i64: 1, 4>}, {transform_indices = @transform_22, window_bounds = array<i64: 512, 4>}]} {
    %c0 = arith.constant 0 : index
    %c0_0 = arith.constant 0 : index
    %0 = vector.load %arg1[%c0, %c0_0] : memref<512x128xbf16, #tpu.memory_space<vmem>>, vector<512x128xbf16>
    %c0_1 = arith.constant 0 : index
    %c0_2 = arith.constant 0 : index
    %1 = vector.load %arg2[%c0_1, %c0_2] : memref<128x128xbf16, #tpu.memory_space<vmem>>, vector<128x128xbf16>
    %c0_3 = arith.constant 0 : index
    %c0_4 = arith.constant 0 : index
    %2 = vector.load %arg3[%c0_3, %c0_4] : memref<1x128xf32, #tpu.memory_space<vmem>>, vector<1x128xf32>
    %cst = arith.constant dense<0.000000e+00> : vector<512x128xf32>
    %3 = tpu.matmul %0, %1, %cst {dimension_numbers = #tpu.dot_dimension_numbers<[1], [0], [0], [1], [0, 0, 1, 1], [], []>} : vector<512x128xbf16>, vector<128x128xbf16>, vector<512x128xf32> -> vector<512x128xf32>
    %4 = vector.broadcast %2 : vector<1x128xf32> to vector<512x128xf32>
    %5 = arith.addf %3, %4 : vector<512x128xf32>
    %cst_5 = arith.constant 0.000000e+00 : f32
    %6 = vector.broadcast %cst_5 : f32 to vector<512x128xf32>
    %7 = arith.maximumf %5, %6 : vector<512x128xf32>
    %c0_6 = arith.constant 0 : index
    %c0_7 = arith.constant 0 : index
    %8 = vector.load %arg4[%c0_6, %c0_7] : memref<128x128xbf16, #tpu.memory_space<vmem>>, vector<128x128xbf16>
    %c0_8 = arith.constant 0 : index
    %c0_9 = arith.constant 0 : index
    %9 = vector.load %arg5[%c0_8, %c0_9] : memref<1x128xf32, #tpu.memory_space<vmem>>, vector<1x128xf32>
    %10 = arith.truncf %7 : vector<512x128xf32> to vector<512x128xbf16>
    %cst_10 = arith.constant dense<0.000000e+00> : vector<512x128xf32>
    %11 = tpu.matmul %10, %8, %cst_10 {dimension_numbers = #tpu.dot_dimension_numbers<[1], [0], [0], [1], [0, 0, 1, 1], [], []>} : vector<512x128xbf16>, vector<128x128xbf16>, vector<512x128xf32> -> vector<512x128xf32>
    %12 = vector.broadcast %9 : vector<1x128xf32> to vector<512x128xf32>
    %13 = arith.addf %11, %12 : vector<512x128xf32>
    %cst_11 = arith.constant 0.000000e+00 : f32
    %14 = vector.broadcast %cst_11 : f32 to vector<512x128xf32>
    %15 = arith.maximumf %13, %14 : vector<512x128xf32>
    %c0_12 = arith.constant 0 : index
    %c0_13 = arith.constant 0 : index
    %16 = vector.load %arg6[%c0_12, %c0_13] : memref<128x128xbf16, #tpu.memory_space<vmem>>, vector<128x128xbf16>
    %c0_14 = arith.constant 0 : index
    %c0_15 = arith.constant 0 : index
    %17 = vector.load %arg7[%c0_14, %c0_15] : memref<1x128xf32, #tpu.memory_space<vmem>>, vector<1x128xf32>
    %18 = arith.truncf %15 : vector<512x128xf32> to vector<512x128xbf16>
    %cst_16 = arith.constant dense<0.000000e+00> : vector<512x128xf32>
    %19 = tpu.matmul %18, %16, %cst_16 {dimension_numbers = #tpu.dot_dimension_numbers<[1], [0], [0], [1], [0, 0, 1, 1], [], []>} : vector<512x128xbf16>, vector<128x128xbf16>, vector<512x128xf32> -> vector<512x128xf32>
    %20 = vector.broadcast %17 : vector<1x128xf32> to vector<512x128xf32>
    %21 = arith.addf %19, %20 : vector<512x128xf32>
    %cst_17 = arith.constant 0.000000e+00 : f32
    %22 = vector.broadcast %cst_17 : f32 to vector<512x128xf32>
    %23 = arith.maximumf %21, %22 : vector<512x128xf32>
    %c0_18 = arith.constant 0 : index
    %c0_19 = arith.constant 0 : index
    %24 = vector.load %arg8[%c0_18, %c0_19] : memref<128x128xbf16, #tpu.memory_space<vmem>>, vector<128x128xbf16>
    %c0_20 = arith.constant 0 : index
    %c0_21 = arith.constant 0 : index
    %25 = vector.load %arg9[%c0_20, %c0_21] : memref<1x128xf32, #tpu.memory_space<vmem>>, vector<1x128xf32>
    %26 = arith.truncf %23 : vector<512x128xf32> to vector<512x128xbf16>
    %cst_22 = arith.constant dense<0.000000e+00> : vector<512x128xf32>
    %27 = tpu.matmul %26, %24, %cst_22 {dimension_numbers = #tpu.dot_dimension_numbers<[1], [0], [0], [1], [0, 0, 1, 1], [], []>} : vector<512x128xbf16>, vector<128x128xbf16>, vector<512x128xf32> -> vector<512x128xf32>
    %28 = vector.broadcast %25 : vector<1x128xf32> to vector<512x128xf32>
    %29 = arith.addf %27, %28 : vector<512x128xf32>
    %cst_23 = arith.constant 0.000000e+00 : f32
    %30 = vector.broadcast %cst_23 : f32 to vector<512x128xf32>
    %31 = arith.maximumf %29, %30 : vector<512x128xf32>
    %c0_24 = arith.constant 0 : index
    %c0_25 = arith.constant 0 : index
    %32 = vector.load %arg10[%c0_24, %c0_25] : memref<128x128xbf16, #tpu.memory_space<vmem>>, vector<128x128xbf16>
    %c0_26 = arith.constant 0 : index
    %c0_27 = arith.constant 0 : index
    %33 = vector.load %arg11[%c0_26, %c0_27] : memref<1x128xf32, #tpu.memory_space<vmem>>, vector<1x128xf32>
    %34 = arith.truncf %31 : vector<512x128xf32> to vector<512x128xbf16>
    %cst_28 = arith.constant dense<0.000000e+00> : vector<512x128xf32>
    %35 = tpu.matmul %34, %32, %cst_28 {dimension_numbers = #tpu.dot_dimension_numbers<[1], [0], [0], [1], [0, 0, 1, 1], [], []>} : vector<512x128xbf16>, vector<128x128xbf16>, vector<512x128xf32> -> vector<512x128xf32>
    %36 = vector.broadcast %33 : vector<1x128xf32> to vector<512x128xf32>
    %37 = arith.addf %35, %36 : vector<512x128xf32>
    %cst_29 = arith.constant 0.000000e+00 : f32
    %38 = vector.broadcast %cst_29 : f32 to vector<512x128xf32>
    %39 = arith.maximumf %37, %38 : vector<512x128xf32>
    %c0_30 = arith.constant 0 : index
    %c0_31 = arith.constant 0 : index
    %40 = vector.load %arg12[%c0_30, %c0_31] : memref<128x128xbf16, #tpu.memory_space<vmem>>, vector<128x128xbf16>
    %c0_32 = arith.constant 0 : index
    %c0_33 = arith.constant 0 : index
    %41 = vector.load %arg13[%c0_32, %c0_33] : memref<128x128xbf16, #tpu.memory_space<vmem>>, vector<128x128xbf16>
    %c0_34 = arith.constant 0 : index
    %c0_35 = arith.constant 0 : index
    %42 = vector.load %arg14[%c0_34, %c0_35] : memref<1x128xf32, #tpu.memory_space<vmem>>, vector<1x128xf32>
    %43 = arith.truncf %39 : vector<512x128xf32> to vector<512x128xbf16>
    %cst_36 = arith.constant dense<0.000000e+00> : vector<512x128xf32>
    %44 = tpu.matmul %43, %40, %cst_36 {dimension_numbers = #tpu.dot_dimension_numbers<[1], [0], [0], [1], [0, 0, 1, 1], [], []>} : vector<512x128xbf16>, vector<128x128xbf16>, vector<512x128xf32> -> vector<512x128xf32>
    %cst_37 = arith.constant dense<0.000000e+00> : vector<512x128xf32>
    %45 = tpu.matmul %0, %41, %cst_37 {dimension_numbers = #tpu.dot_dimension_numbers<[1], [0], [0], [1], [0, 0, 1, 1], [], []>} : vector<512x128xbf16>, vector<128x128xbf16>, vector<512x128xf32> -> vector<512x128xf32>
    %46 = arith.addf %44, %45 : vector<512x128xf32>
    %47 = vector.broadcast %42 : vector<1x128xf32> to vector<512x128xf32>
    %48 = arith.addf %46, %47 : vector<512x128xf32>
    %cst_38 = arith.constant 0.000000e+00 : f32
    %49 = vector.broadcast %cst_38 : f32 to vector<512x128xf32>
    %50 = arith.maximumf %48, %49 : vector<512x128xf32>
    %c0_39 = arith.constant 0 : index
    %c0_40 = arith.constant 0 : index
    %51 = vector.load %arg15[%c0_39, %c0_40] : memref<128x128xbf16, #tpu.memory_space<vmem>>, vector<128x128xbf16>
    %c0_41 = arith.constant 0 : index
    %c0_42 = arith.constant 0 : index
    %52 = vector.load %arg16[%c0_41, %c0_42] : memref<1x128xf32, #tpu.memory_space<vmem>>, vector<1x128xf32>
    %53 = arith.truncf %50 : vector<512x128xf32> to vector<512x128xbf16>
    %cst_43 = arith.constant dense<0.000000e+00> : vector<512x128xf32>
    %54 = tpu.matmul %53, %51, %cst_43 {dimension_numbers = #tpu.dot_dimension_numbers<[1], [0], [0], [1], [0, 0, 1, 1], [], []>} : vector<512x128xbf16>, vector<128x128xbf16>, vector<512x128xf32> -> vector<512x128xf32>
    %55 = vector.broadcast %52 : vector<1x128xf32> to vector<512x128xf32>
    %56 = arith.addf %54, %55 : vector<512x128xf32>
    %cst_44 = arith.constant 0.000000e+00 : f32
    %57 = vector.broadcast %cst_44 : f32 to vector<512x128xf32>
    %58 = arith.maximumf %56, %57 : vector<512x128xf32>
    %c0_45 = arith.constant 0 : index
    %c0_46 = arith.constant 0 : index
    %59 = vector.load %arg17[%c0_45, %c0_46] : memref<128x128xbf16, #tpu.memory_space<vmem>>, vector<128x128xbf16>
    %c0_47 = arith.constant 0 : index
    %c0_48 = arith.constant 0 : index
    %60 = vector.load %arg18[%c0_47, %c0_48] : memref<1x128xf32, #tpu.memory_space<vmem>>, vector<1x128xf32>
    %61 = arith.truncf %58 : vector<512x128xf32> to vector<512x128xbf16>
    %cst_49 = arith.constant dense<0.000000e+00> : vector<512x128xf32>
    %62 = tpu.matmul %61, %59, %cst_49 {dimension_numbers = #tpu.dot_dimension_numbers<[1], [0], [0], [1], [0, 0, 1, 1], [], []>} : vector<512x128xbf16>, vector<128x128xbf16>, vector<512x128xf32> -> vector<512x128xf32>
    %63 = vector.broadcast %60 : vector<1x128xf32> to vector<512x128xf32>
    %64 = arith.addf %62, %63 : vector<512x128xf32>
    %cst_50 = arith.constant 0.000000e+00 : f32
    %65 = vector.broadcast %cst_50 : f32 to vector<512x128xf32>
    %66 = arith.maximumf %64, %65 : vector<512x128xf32>
    %c0_51 = arith.constant 0 : index
    %c0_52 = arith.constant 0 : index
    %67 = vector.load %arg19[%c0_51, %c0_52] : memref<128x128xbf16, #tpu.memory_space<vmem>>, vector<128x128xbf16>
    %c0_53 = arith.constant 0 : index
    %c0_54 = arith.constant 0 : index
    %68 = vector.load %arg20[%c0_53, %c0_54] : memref<1x128xf32, #tpu.memory_space<vmem>>, vector<1x128xf32>
    %69 = arith.truncf %66 : vector<512x128xf32> to vector<512x128xbf16>
    %cst_55 = arith.constant dense<0.000000e+00> : vector<512x128xf32>
    %70 = tpu.matmul %69, %67, %cst_55 {dimension_numbers = #tpu.dot_dimension_numbers<[1], [0], [0], [1], [0, 0, 1, 1], [], []>} : vector<512x128xbf16>, vector<128x128xbf16>, vector<512x128xf32> -> vector<512x128xf32>
    %71 = vector.broadcast %68 : vector<1x128xf32> to vector<512x128xf32>
    %72 = arith.addf %70, %71 : vector<512x128xf32>
    %cst_56 = arith.constant 0.000000e+00 : f32
    %73 = vector.broadcast %cst_56 : f32 to vector<512x128xf32>
    %74 = arith.maximumf %72, %73 : vector<512x128xf32>
    %c0_57 = arith.constant 0 : index
    %c0_58 = arith.constant 0 : index
    %75 = vector.load %arg21[%c0_57, %c0_58] : memref<128x4xbf16, #tpu.memory_space<vmem>>, vector<128x4xbf16>
    %c0_59 = arith.constant 0 : index
    %c0_60 = arith.constant 0 : index
    %76 = vector.load %arg22[%c0_59, %c0_60] : memref<1x4xf32, #tpu.memory_space<vmem>>, vector<1x4xf32>
    %77 = arith.truncf %74 : vector<512x128xf32> to vector<512x128xbf16>
    %cst_61 = arith.constant dense<0.000000e+00> : vector<512x4xf32>
    %78 = tpu.matmul %77, %75, %cst_61 {dimension_numbers = #tpu.dot_dimension_numbers<[1], [0], [0], [1], [0, 0, 1, 1], [], []>} : vector<512x128xbf16>, vector<128x4xbf16>, vector<512x4xf32> -> vector<512x4xf32>
    %79 = vector.broadcast %76 : vector<1x4xf32> to vector<512x4xf32>
    %80 = arith.addf %78, %79 : vector<512x4xf32>
    %c0_62 = arith.constant 0 : index
    %c0_63 = arith.constant 0 : index
    %81 = vector.load %arg23[%c0_62, %c0_63] : memref<512x4xf32, #tpu.memory_space<vmem>>, vector<512x4xf32>
    tpu.vector_store %arg23[%c0_62, %c0_63], %80 {strides = array<i32>} : memref<512x4xf32, #tpu.memory_space<vmem>>, vector<512x4xf32>,
    return
  }
  func.func @transform_0(%arg0: i32) -> (i32, i32) {
    %c0_i32 = arith.constant 0 : i32
    %c0_i32_0 = arith.constant 0 : i32
    return %arg0, %c0_i32 : i32, i32
  }
  func.func @transform_1(%arg0: i32) -> (i32, i32) {
    %c0_i32 = arith.constant 0 : i32
    %c0_i32_0 = arith.constant 0 : i32
    %c0_i32_1 = arith.constant 0 : i32
    return %c0_i32, %c0_i32_0 : i32, i32
  }
  func.func @transform_2(%arg0: i32) -> (i32, i32) {
    %c0_i32 = arith.constant 0 : i32
    %c0_i32_0 = arith.constant 0 : i32
    %c0_i32_1 = arith.constant 0 : i32
    return %c0_i32, %c0_i32_0 : i32, i32
  }
  func.func @transform_3(%arg0: i32) -> (i32, i32) {
    %c0_i32 = arith.constant 0 : i32
    %c0_i32_0 = arith.constant 0 : i32
    %c0_i32_1 = arith.constant 0 : i32
    return %c0_i32, %c0_i32_0 : i32, i32
  }
  func.func @transform_4(%arg0: i32) -> (i32, i32) {
    %c0_i32 = arith.constant 0 : i32
    %c0_i32_0 = arith.constant 0 : i32
    %c0_i32_1 = arith.constant 0 : i32
    return %c0_i32, %c0_i32_0 : i32, i32
  }
  func.func @transform_5(%arg0: i32) -> (i32, i32) {
    %c0_i32 = arith.constant 0 : i32
    %c0_i32_0 = arith.constant 0 : i32
    %c0_i32_1 = arith.constant 0 : i32
    return %c0_i32, %c0_i32_0 : i32, i32
  }
  func.func @transform_6(%arg0: i32) -> (i32, i32) {
    %c0_i32 = arith.constant 0 : i32
    %c0_i32_0 = arith.constant 0 : i32
    %c0_i32_1 = arith.constant 0 : i32
    return %c0_i32, %c0_i32_0 : i32, i32
  }
  func.func @transform_7(%arg0: i32) -> (i32, i32) {
    %c0_i32 = arith.constant 0 : i32
    %c0_i32_0 = arith.constant 0 : i32
    %c0_i32_1 = arith.constant 0 : i32
    return %c0_i32, %c0_i32_0 : i32, i32
  }
  func.func @transform_8(%arg0: i32) -> (i32, i32) {
    %c0_i32 = arith.constant 0 : i32
    %c0_i32_0 = arith.constant 0 : i32
    %c0_i32_1 = arith.constant 0 : i32
    return %c0_i32, %c0_i32_0 : i32, i32
  }
  func.func @transform_9(%arg0: i32) -> (i32, i32) {
    %c0_i32 = arith.constant 0 : i32
    %c0_i32_0 = arith.constant 0 : i32
    %c0_i32_1 = arith.constant 0 : i32
    return %c0_i32, %c0_i32_0 : i32, i32
  }
  func.func @transform_10(%arg0: i32) -> (i32, i32) {
    %c0_i32 = arith.constant 0 : i32
    %c0_i32_0 = arith.constant 0 : i32
    %c0_i32_1 = arith.constant 0 : i32
    return %c0_i32, %c0_i32_0 : i32, i32
  }
  func.func @transform_11(%arg0: i32) -> (i32, i32) {
    %c0_i32 = arith.constant 0 : i32
    %c0_i32_0 = arith.constant 0 : i32
    %c0_i32_1 = arith.constant 0 : i32
    return %c0_i32, %c0_i32_0 : i32, i32
  }
  func.func @transform_12(%arg0: i32) -> (i32, i32) {
    %c0_i32 = arith.constant 0 : i32
    %c0_i32_0 = arith.constant 0 : i32
    %c0_i32_1 = arith.constant 0 : i32
    return %c0_i32, %c0_i32_0 : i32, i32
  }
  func.func @transform_13(%arg0: i32) -> (i32, i32) {
    %c0_i32 = arith.constant 0 : i32
    %c0_i32_0 = arith.constant 0 : i32
    %c0_i32_1 = arith.constant 0 : i32
    return %c0_i32, %c0_i32_0 : i32, i32
  }
  func.func @transform_14(%arg0: i32) -> (i32, i32) {
    %c0_i32 = arith.constant 0 : i32
    %c0_i32_0 = arith.constant 0 : i32
    %c0_i32_1 = arith.constant 0 : i32
    return %c0_i32, %c0_i32_0 : i32, i32
  }
  func.func @transform_15(%arg0: i32) -> (i32, i32) {
    %c0_i32 = arith.constant 0 : i32
    %c0_i32_0 = arith.constant 0 : i32
    %c0_i32_1 = arith.constant 0 : i32
    return %c0_i32, %c0_i32_0 : i32, i32
  }
  func.func @transform_16(%arg0: i32) -> (i32, i32) {
    %c0_i32 = arith.constant 0 : i32
    %c0_i32_0 = arith.constant 0 : i32
    %c0_i32_1 = arith.constant 0 : i32
    return %c0_i32, %c0_i32_0 : i32, i32
  }
  func.func @transform_17(%arg0: i32) -> (i32, i32) {
    %c0_i32 = arith.constant 0 : i32
    %c0_i32_0 = arith.constant 0 : i32
    %c0_i32_1 = arith.constant 0 : i32
    return %c0_i32, %c0_i32_0 : i32, i32
  }
  func.func @transform_18(%arg0: i32) -> (i32, i32) {
    %c0_i32 = arith.constant 0 : i32
    %c0_i32_0 = arith.constant 0 : i32
    %c0_i32_1 = arith.constant 0 : i32
    return %c0_i32, %c0_i32_0 : i32, i32
  }
  func.func @transform_19(%arg0: i32) -> (i32, i32) {
    %c0_i32 = arith.constant 0 : i32
    %c0_i32_0 = arith.constant 0 : i32
    %c0_i32_1 = arith.constant 0 : i32
    return %c0_i32, %c0_i32_0 : i32, i32
  }
  func.func @transform_20(%arg0: i32) -> (i32, i32) {
    %c0_i32 = arith.constant 0 : i32
    %c0_i32_0 = arith.constant 0 : i32
    %c0_i32_1 = arith.constant 0 : i32
    return %c0_i32, %c0_i32_0 : i32, i32
  }
  func.func @transform_21(%arg0: i32) -> (i32, i32) {
    %c0_i32 = arith.constant 0 : i32
    %c0_i32_0 = arith.constant 0 : i32
    %c0_i32_1 = arith.constant 0 : i32
    return %c0_i32, %c0_i32_0 : i32, i32
  }
  func.func @transform_22(%arg0: i32) -> (i32, i32) {
    %c0_i32 = arith.constant 0 : i32
    %c0_i32_0 = arith.constant 0 : i32
    return %arg0, %c0_i32 : i32, i32
  }
}

</mosaic_0001>

<llo_original>
// kernel: tpu_custom_call.1
$region0: #{tpu_custom_call.1}
  #allocation0 [shape = 'u32[]', space=smem, size = 0x4, offset = 0x4, fixed_abs, tag = 'smem constant byte address 0x4 - core index']
  #allocation1 [shape = 'u32[72,128]{1,0:T(1,128)}', space=vmem, size = 0x9000, scoped, tag = 'internal scratch']
  %s0 = inlined_call_operand.hbm [shape: bf16[4096,128], index: 0, kind: input, shape index: {}]
  %s1 = inlined_call_operand.hbm [shape: bf16[128,128], index: 1, kind: input, shape index: {}]
  %s2 = inlined_call_operand.hbm [shape: f32[1,128], index: 2, kind: input, shape index: {}]
  %s3 = inlined_call_operand.hbm [shape: bf16[128,128], index: 3, kind: input, shape index: {}]
  %s4 = inlined_call_operand.hbm [shape: f32[1,128], index: 4, kind: input, shape index: {}]
  %s5 = inlined_call_operand.hbm [shape: bf16[128,128], index: 5, kind: input, shape index: {}]
  %s6 = inlined_call_operand.hbm [shape: f32[1,128], index: 6, kind: input, shape index: {}]
  %s7 = inlined_call_operand.hbm [shape: bf16[128,128], index: 7, kind: input, shape index: {}]
  %s8 = inlined_call_operand.hbm [shape: f32[1,128], index: 8, kind: input, shape index: {}]
  %s9 = inlined_call_operand.hbm [shape: bf16[128,128], index: 9, kind: input, shape index: {}]
  %s10 = inlined_call_operand.hbm [shape: f32[1,128], index: 10, kind: input, shape index: {}]
  %s11 = inlined_call_operand.hbm [shape: bf16[128,128], index: 11, kind: input, shape index: {}]
  %s12 = inlined_call_operand.hbm [shape: bf16[128,128], index: 12, kind: input, shape index: {}]
  %s13 = inlined_call_operand.hbm [shape: f32[1,128], index: 13, kind: input, shape index: {}]
  %s14 = inlined_call_operand.hbm [shape: bf16[128,128], index: 14, kind: input, shape index: {}]
  %s15 = inlined_call_operand.hbm [shape: f32[1,128], index: 15, kind: input, shape index: {}]
  %s16 = inlined_call_operand.hbm [shape: bf16[128,128], index: 16, kind: input, shape index: {}]
  %s17 = inlined_call_operand.hbm [shape: f32[1,128], index: 17, kind: input, shape index: {}]
  %s18 = inlined_call_operand.hbm [shape: bf16[128,128], index: 18, kind: input, shape index: {}]
  %s19 = inlined_call_operand.hbm [shape: f32[1,128], index: 19, kind: input, shape index: {}]
  %s20 = inlined_call_operand.vmem [shape: bf16[128,4], index: 20, kind: input, shape index: {}]
  %s21 = inlined_call_operand.hbm [shape: f32[1,4], index: 21, kind: input, shape index: {}]
  %s22 = inlined_call_operand.vmem [shape: f32[4096,4], index: 22, kind: output, shape index: {}]
  %s23 = sld [smem:[#allocation0]]
  $region205: #{tpu_custom_call.1} parent=0
    _
  %s25 = ssub.s32 1, %s23
  %s26 = scalar_select 0, %s25, %s23
  $region1: #{tpu_custom_call.1} parent=0
    #allocation2 [shape = 'u8[262144]{0}', space=vmem, size = 0x40000, scoped, tag = 'input window, operand 0']
    #allocation3 [shape = 's32[2]{0}', space=sflag, size = 0x8, scoped, tag = 'scoped memory for tpu_custom_call.1']
    #allocation4 [shape = 'u8[32768]{0}', space=vmem, size = 0x8000, scoped, tag = 'input window, operand 1, single buffered']
    #allocation5 [shape = 's32[1]{0}', space=sflag, size = 0x4, scoped, tag = 'scoped memory for tpu_custom_call.1']
    #allocation6 [shape = 'u8[512]{0}', space=vmem, size = 0x400, scoped, tag = 'input window, operand 2, single buffered']
    #allocation7 [shape = 'u8[32768]{0}', space=vmem, size = 0x8000, scoped, tag = 'input window, operand 3, single buffered']
    #allocation8 [shape = 's32[1]{0}', space=sflag, size = 0x4, scoped, tag = 'scoped memory for tpu_custom_call.1']
    #allocation9 [shape = 'u8[512]{0}', space=vmem, size = 0x400, scoped, tag = 'input window, operand 4, single buffered']
    #allocation10 [shape = 'u8[32768]{0}', space=vmem, size = 0x8000, scoped, tag = 'input window, operand 5, single buffered']
    #allocation11 [shape = 's32[1]{0}', space=sflag, size = 0x4, scoped, tag = 'scoped memory for tpu_custom_call.1']
    #allocation12 [shape = 'u8[512]{0}', space=vmem, size = 0x400, scoped, tag = 'input window, operand 6, single buffered']
    #allocation13 [shape = 'u8[32768]{0}', space=vmem, size = 0x8000, scoped, tag = 'input window, operand 7, single buffered']
    #allocation14 [shape = 's32[1]{0}', space=sflag, size = 0x4, scoped, tag = 'scoped memory for tpu_custom_call.1']
    #allocation15 [shape = 'u8[512]{0}', space=vmem, size = 0x400, scoped, tag = 'input window, operand 8, single buffered']
    #allocation16 [shape = 'u8[32768]{0}', space=vmem, size = 0x8000, scoped, tag = 'input window, operand 9, single buffered']
    #allocation17 [shape = 's32[1]{0}', space=sflag, size = 0x4, scoped, tag = 'scoped memory for tpu_custom_call.1']
    #allocation18 [shape = 'u8[512]{0}', space=vmem, size = 0x400, scoped, tag = 'input window, operand 10, single buffered']
    #allocation19 [shape = 'u8[32768]{0}', space=vmem, size = 0x8000, scoped, tag = 'input window, operand 11, single buffered']
    #allocation20 [shape = 's32[1]{0}', space=sflag, size = 0x4, scoped, tag = 'scoped memory for tpu_custom_call.1']
    #allocation21 [shape = 'u8[32768]{0}', space=vmem, size = 0x8000, scoped, tag = 'input window, operand 12, single buffered']
    #allocation22 [shape = 'u8[512]{0}', space=vmem, size = 0x400, scoped, tag = 'input window, operand 13, single buffered']
    #allocation23 [shape = 's32[1]{0}', space=sflag, size = 0x4, scoped, tag = 'scoped memory for tpu_custom_call.1']
    #allocation24 [shape = 'u8[32768]{0}', space=vmem, size = 0x8000, scoped, tag = 'input window, operand 14, single buffered']
    #allocation25 [shape = 'u8[512]{0}', space=vmem, size = 0x400, scoped, tag = 'input window, operand 15, single buffered']
    #allocation26 [shape = 's32[1]{0}', space=sflag, size = 0x4, scoped, tag = 'scoped memory for tpu_custom_call.1']
    #allocation27 [shape = 'u8[32768]{0}', space=vmem, size = 0x8000, scoped, tag = 'input window, operand 16, single buffered']
    #allocation28 [shape = 'u8[512]{0}', space=vmem, size = 0x400, scoped, tag = 'input window, operand 17, single buffered']
    #allocation29 [shape = 's32[1]{0}', space=sflag, size = 0x4, scoped, tag = 'scoped memory for tpu_custom_call.1']
    #allocation30 [shape = 'u8[32768]{0}', space=vmem, size = 0x8000, scoped, tag = 'input window, operand 18, single buffered']
    #allocation31 [shape = 'u8[512]{0}', space=vmem, size = 0x400, scoped, tag = 'input window, operand 19, single buffered']
    #allocation32 [shape = 's32[1]{0}', space=sflag, size = 0x4, scoped, tag = 'scoped memory for tpu_custom_call.1']
    #allocation33 [shape = 'u8[512]{0}', space=vmem, size = 0x400, scoped, tag = 'input window, operand 21, single buffered']
    %27 = vsyncpa [#allocation3], 0
    %s28 = scalar_lea.sflag [#allocation3], 1
    %29 = vsyncpa %s28, 0
    %30 = vsyncpa [#allocation5], 0
    %31 = vsyncpa [#allocation8], 0
    %32 = vsyncpa [#allocation11], 0
    %33 = vsyncpa [#allocation14], 0
    %34 = vsyncpa [#allocation17], 0
    %35 = vsyncpa [#allocation20], 0
    %36 = vsyncpa [#allocation23], 0
    %37 = vsyncpa [#allocation26], 0
    %38 = vsyncpa [#allocation29], 0
    %39 = vsyncpa [#allocation32], 0
    loop: start=0, step=1, limit=10
    $region2: #{tpu_custom_call.1} parent=1 // loop_pre_header
      _
    $region3: #{tpu_custom_call.1} parent=1 // loop_header
      %s41 = sphi 0, %s45
      %p42 = scmp.ge.s32.totalorder %s41, 10
      %s51 = sphi 0, %s53
      %s54 = sphi 0, %s51
      %s55 = sphi 0, %s54
      %s71 = sphi 0, %s55
      %s75 = sphi 0, %s75
      %s77 = sphi 0, %s75
      %s78 = sphi 0, %s77
      %s92 = sphi 0, %s78
      %s96 = sphi 0, %s96
      %s98 = sphi 0, %s96
      %s99 = sphi 0, %s98
      %s113 = sphi 0, %s99
      %s117 = sphi 0, %s117
      %s119 = sphi 0, %s117
      %s120 = sphi 0, %s119
      %s134 = sphi 0, %s120
      %s138 = sphi 0, %s138
      %s140 = sphi 0, %s138
      %s141 = sphi 0, %s140
      %s155 = sphi 0, %s141
      %s159 = sphi 0, %s159
      %s161 = sphi 0, %s159
      %s162 = sphi 0, %s161
      %s176 = sphi 0, %s162
      %s180 = sphi 0, %s180
      %s182 = sphi 0, %s180
      %s183 = sphi 0, %s182
      %s197 = sphi 0, %s183
      %s201 = sphi 0, %s201
      %s203 = sphi 0, %s201
      %s204 = sphi 0, %s203
      %s218 = sphi 0, %s204
      %s222 = sphi 0, %s222
      %s224 = sphi 0, %s222
      %s225 = sphi 0, %s224
      %s239 = sphi 0, %s225
      %s243 = sphi 0, %s243
      %s245 = sphi 0, %s243
      %s246 = sphi 0, %s245
      %s260 = sphi 0, %s246
      %s264 = sphi 0, %s264
      %s266 = sphi 0, %s264
      %s267 = sphi 0, %s266
      %s281 = sphi 0, %s267
      %s285 = sphi 0, %s285
      %s287 = sphi 0, %s285
      %s288 = sphi 0, %s287
      %s302 = sphi 0, %s288
      %s306 = sphi 0, %s306
      %s308 = sphi 0, %s306
      %s309 = sphi 0, %s308
      %s323 = sphi 0, %s309
      %s327 = sphi 0, %s327
      %s329 = sphi 0, %s327
      %s330 = sphi 0, %s329
      %s344 = sphi 0, %s330
      %s348 = sphi 0, %s348
      %s350 = sphi 0, %s348
      %s351 = sphi 0, %s350
      %s365 = sphi 0, %s351
      %s369 = sphi 0, %s369
      %s371 = sphi 0, %s369
      %s372 = sphi 0, %s371
      %s386 = sphi 0, %s372
      %s390 = sphi 0, %s390
      %s392 = sphi 0, %s390
      %s393 = sphi 0, %s392
      %s407 = sphi 0, %s393
      %s411 = sphi 0, %s411
      %s413 = sphi 0, %s411
      %s414 = sphi 0, %s413
      %s428 = sphi 0, %s414
      %s432 = sphi 0, %s432
      %s434 = sphi 0, %s432
      %s435 = sphi 0, %s434
      %s449 = sphi 0, %s435
      %s453 = sphi 0, %s453
      %s455 = sphi 0, %s453
      %s456 = sphi 0, %s455
      %s470 = sphi 0, %s456
      %s474 = sphi 0, %s474
      %s476 = sphi 0, %s474
      %s477 = sphi 0, %s476
      %s491 = sphi 0, %s477
      %s495 = sphi 0, %s495
      %s497 = sphi 0, %s495
      %s498 = sphi 0, %s497
      %s512 = sphi 0, %s498
      %s518 = sphi 0, %s520
      %s521 = sphi 0, %s518
      %s522 = sphi 0, %s521
      %s538 = sphi 0, %s522
    $region4: #{tpu_custom_call.1} parent=1 // loop_header_branch
      %44 = sbr.rel (%p42) target = $region8
    $region5: #{tpu_custom_call.1} parent=1 // loop_body
      %s46 = ssub.s32 %s41, 1
      %s47 = ssub.s32 %s41, 2
      %s48 = sadd.s32 %s41, 1
      %s49 = ssub.s32 %s41, %s48
      %p50 = scmp.eq.s32.totalorder %s49, 0
      %s52 = sadd.s32 %s51, 1
      %s53 = scalar_select %p50, %s51, %s52
      %p56 = pneg %p50
      %p57 = scmp.eq.s32.totalorder %s41, 7
      %p58 = por %p56, %p57
      %p59 = scmp.ne.s32.totalorder %s51, %s54
      %p60 = scmp.eq.s32.totalorder %s41, 0
      %p61 = por %p59, %p60
      %p62 = scmp.ne.s32.totalorder %s51, %s54
      %p63 = scmp.eq.s32.totalorder %s46, 7
      %p64 = por %p62, %p63
      %p65 = scmp.ne.s32.totalorder %s54, %s55
      %p66 = scmp.eq.s32.totalorder %s46, 0
      %p67 = por %p65, %p66
      %p68 = scmp.ne.s32.totalorder %s54, %s55
      %p69 = scmp.eq.s32.totalorder %s47, 7
      %p70 = por %p68, %p69
      %p72 = scmp.ne.s32.totalorder %s55, %s71
      %p73 = scmp.eq.s32.totalorder %s47, 0
      %p74 = por %p72, %p73
      %s76 = sadd.s32 %s75, 1
      %p79 = scmp.eq.s32.totalorder %s41, 7
      %p80 = scmp.ne.s32.totalorder %s75, %s77
      %p81 = scmp.eq.s32.totalorder %s41, 0
      %p82 = por %p80, %p81
      %p83 = scmp.ne.s32.totalorder %s75, %s77
      %p84 = scmp.eq.s32.totalorder %s46, 7
      %p85 = por %p83, %p84
      %p86 = scmp.ne.s32.totalorder %s77, %s78
      %p87 = scmp.eq.s32.totalorder %s46, 0
      %p88 = por %p86, %p87
      %p89 = scmp.ne.s32.totalorder %s77, %s78
      %p90 = scmp.eq.s32.totalorder %s47, 7
      %p91 = por %p89, %p90
      %p93 = scmp.ne.s32.totalorder %s78, %s92
      %p94 = scmp.eq.s32.totalorder %s47, 0
      %p95 = por %p93, %p94
      %s97 = sadd.s32 %s96, 1
      %p100 = scmp.eq.s32.totalorder %s41, 7
      %p101 = scmp.ne.s32.totalorder %s96, %s98
      %p102 = scmp.eq.s32.totalorder %s41, 0
      %p103 = por %p101, %p102
      %p104 = scmp.ne.s32.totalorder %s96, %s98
      %p105 = scmp.eq.s32.totalorder %s46, 7
      %p106 = por %p104, %p105
      %p107 = scmp.ne.s32.totalorder %s98, %s99
      %p108 = scmp.eq.s32.totalorder %s46, 0
      %p109 = por %p107, %p108
      %p110 = scmp.ne.s32.totalorder %s98, %s99
      %p111 = scmp.eq.s32.totalorder %s47, 7
      %p112 = por %p110, %p111
      %p114 = scmp.ne.s32.totalorder %s99, %s113
      %p115 = scmp.eq.s32.totalorder %s47, 0
      %p116 = por %p114, %p115
      %s118 = sadd.s32 %s117, 1
      %p121 = scmp.eq.s32.totalorder %s41, 7
      %p122 = scmp.ne.s32.totalorder %s117, %s119
      %p123 = scmp.eq.s32.totalorder %s41, 0
      %p124 = por %p122, %p123
      %p125 = scmp.ne.s32.totalorder %s117, %s119
      %p126 = scmp.eq.s32.totalorder %s46, 7
      %p127 = por %p125, %p126
      %p128 = scmp.ne.s32.totalorder %s119, %s120
      %p129 = scmp.eq.s32.totalorder %s46, 0
      %p130 = por %p128, %p129
      %p131 = scmp.ne.s32.totalorder %s119, %s120
      %p132 = scmp.eq.s32.totalorder %s47, 7
      %p133 = por %p131, %p132
      %p135 = scmp.ne.s32.totalorder %s120, %s134
      %p136 = scmp.eq.s32.totalorder %s47, 0
      %p137 = por %p135, %p136
      %s139 = sadd.s32 %s138, 1
      %p142 = scmp.eq.s32.totalorder %s41, 7
      %p143 = scmp.ne.s32.totalorder %s138, %s140
      %p144 = scmp.eq.s32.totalorder %s41, 0
      %p145 = por %p143, %p144
      %p146 = scmp.ne.s32.totalorder %s138, %s140
      %p147 = scmp.eq.s32.totalorder %s46, 7
      %p148 = por %p146, %p147
      %p149 = scmp.ne.s32.totalorder %s140, %s141
      %p150 = scmp.eq.s32.totalorder %s46, 0
      %p151 = por %p149, %p150
      %p152 = scmp.ne.s32.totalorder %s140, %s141
      %p153 = scmp.eq.s32.totalorder %s47, 7
      %p154 = por %p152, %p153
      %p156 = scmp.ne.s32.totalorder %s141, %s155
      %p157 = scmp.eq.s32.totalorder %s47, 0
      %p158 = por %p156, %p157
      %s160 = sadd.s32 %s159, 1
      %p163 = scmp.eq.s32.totalorder %s41, 7
      %p164 = scmp.ne.s32.totalorder %s159, %s161
      %p165 = scmp.eq.s32.totalorder %s41, 0
      %p166 = por %p164, %p165
      %p167 = scmp.ne.s32.totalorder %s159, %s161
      %p168 = scmp.eq.s32.totalorder %s46, 7
      %p169 = por %p167, %p168
      %p170 = scmp.ne.s32.totalorder %s161, %s162
      %p171 = scmp.eq.s32.totalorder %s46, 0
      %p172 = por %p170, %p171
      %p173 = scmp.ne.s32.totalorder %s161, %s162
      %p174 = scmp.eq.s32.totalorder %s47, 7
      %p175 = por %p173, %p174
      %p177 = scmp.ne.s32.totalorder %s162, %s176
      %p178 = scmp.eq.s32.totalorder %s47, 0
      %p179 = por %p177, %p178
      %s181 = sadd.s32 %s180, 1
      %p184 = scmp.eq.s32.totalorder %s41, 7
      %p185 = scmp.ne.s32.totalorder %s180, %s182
      %p186 = scmp.eq.s32.totalorder %s41, 0
      %p187 = por %p185, %p186
      %p188 = scmp.ne.s32.totalorder %s180, %s182
      %p189 = scmp.eq.s32.totalorder %s46, 7
      %p190 = por %p188, %p189
      %p191 = scmp.ne.s32.totalorder %s182, %s183
      %p192 = scmp.eq.s32.totalorder %s46, 0
      %p193 = por %p191, %p192
      %p194 = scmp.ne.s32.totalorder %s182, %s183
      %p195 = scmp.eq.s32.totalorder %s47, 7
      %p196 = por %p194, %p195
      %p198 = scmp.ne.s32.totalorder %s183, %s197
      %p199 = scmp.eq.s32.totalorder %s47, 0
      %p200 = por %p198, %p199
      %s202 = sadd.s32 %s201, 1
      %p205 = scmp.eq.s32.totalorder %s41, 7
      %p206 = scmp.ne.s32.totalorder %s201, %s203
      %p207 = scmp.eq.s32.totalorder %s41, 0
      %p208 = por %p206, %p207
      %p209 = scmp.ne.s32.totalorder %s201, %s203
      %p210 = scmp.eq.s32.totalorder %s46, 7
      %p211 = por %p209, %p210
      %p212 = scmp.ne.s32.totalorder %s203, %s204
      %p213 = scmp.eq.s32.totalorder %s46, 0
      %p214 = por %p212, %p213
      %p215 = scmp.ne.s32.totalorder %s203, %s204
      %p216 = scmp.eq.s32.totalorder %s47, 7
      %p217 = por %p215, %p216
      %p219 = scmp.ne.s32.totalorder %s204, %s218
      %p220 = scmp.eq.s32.totalorder %s47, 0
      %p221 = por %p219, %p220
      %s223 = sadd.s32 %s222, 1
      %p226 = scmp.eq.s32.totalorder %s41, 7
      %p227 = scmp.ne.s32.totalorder %s222, %s224
      %p228 = scmp.eq.s32.totalorder %s41, 0
      %p229 = por %p227, %p228
      %p230 = scmp.ne.s32.totalorder %s222, %s224
      %p231 = scmp.eq.s32.totalorder %s46, 7
      %p232 = por %p230, %p231
      %p233 = scmp.ne.s32.totalorder %s224, %s225
      %p234 = scmp.eq.s32.totalorder %s46, 0
      %p235 = por %p233, %p234
      %p236 = scmp.ne.s32.totalorder %s224, %s225
      %p237 = scmp.eq.s32.totalorder %s47, 7
      %p238 = por %p236, %p237
      %p240 = scmp.ne.s32.totalorder %s225, %s239
      %p241 = scmp.eq.s32.totalorder %s47, 0
      %p242 = por %p240, %p241
      %s244 = sadd.s32 %s243, 1
      %p247 = scmp.eq.s32.totalorder %s41, 7
      %p248 = scmp.ne.s32.totalorder %s243, %s245
      %p249 = scmp.eq.s32.totalorder %s41, 0
      %p250 = por %p248, %p249
      %p251 = scmp.ne.s32.totalorder %s243, %s245
      %p252 = scmp.eq.s32.totalorder %s46, 7
      %p253 = por %p251, %p252
      %p254 = scmp.ne.s32.totalorder %s245, %s246
      %p255 = scmp.eq.s32.totalorder %s46, 0
      %p256 = por %p254, %p255
      %p257 = scmp.ne.s32.totalorder %s245, %s246
      %p258 = scmp.eq.s32.totalorder %s47, 7
      %p259 = por %p257, %p258
      %p261 = scmp.ne.s32.totalorder %s246, %s260
      %p262 = scmp.eq.s32.totalorder %s47, 0
      %p263 = por %p261, %p262
      %s265 = sadd.s32 %s264, 1
      %p268 = scmp.eq.s32.totalorder %s41, 7
      %p269 = scmp.ne.s32.totalorder %s264, %s266
      %p270 = scmp.eq.s32.totalorder %s41, 0
      %p271 = por %p269, %p270
      %p272 = scmp.ne.s32.totalorder %s264, %s266
      %p273 = scmp.eq.s32.totalorder %s46, 7
      %p274 = por %p272, %p273
      %p275 = scmp.ne.s32.totalorder %s266, %s267
      %p276 = scmp.eq.s32.totalorder %s46, 0
      %p277 = por %p275, %p276
      %p278 = scmp.ne.s32.totalorder %s266, %s267
      %p279 = scmp.eq.s32.totalorder %s47, 7
      %p280 = por %p278, %p279
      %p282 = scmp.ne.s32.totalorder %s267, %s281
      %p283 = scmp.eq.s32.totalorder %s47, 0
      %p284 = por %p282, %p283
      %s286 = sadd.s32 %s285, 1
      %p289 = scmp.eq.s32.totalorder %s41, 7
      %p290 = scmp.ne.s32.totalorder %s285, %s287
      %p291 = scmp.eq.s32.totalorder %s41, 0
      %p292 = por %p290, %p291
      %p293 = scmp.ne.s32.totalorder %s285, %s287
      %p294 = scmp.eq.s32.totalorder %s46, 7
      %p295 = por %p293, %p294
      %p296 = scmp.ne.s32.totalorder %s287, %s288
      %p297 = scmp.eq.s32.totalorder %s46, 0
      %p298 = por %p296, %p297
      %p299 = scmp.ne.s32.totalorder %s287, %s288
      %p300 = scmp.eq.s32.totalorder %s47, 7
      %p301 = por %p299, %p300
      %p303 = scmp.ne.s32.totalorder %s288, %s302
      %p304 = scmp.eq.s32.totalorder %s47, 0
      %p305 = por %p303, %p304
      %s307 = sadd.s32 %s306, 1
      %p310 = scmp.eq.s32.totalorder %s41, 7
      %p311 = scmp.ne.s32.totalorder %s306, %s308
      %p312 = scmp.eq.s32.totalorder %s41, 0
      %p313 = por %p311, %p312
      %p314 = scmp.ne.s32.totalorder %s306, %s308
      %p315 = scmp.eq.s32.totalorder %s46, 7
      %p316 = por %p314, %p315
      %p317 = scmp.ne.s32.totalorder %s308, %s309
      %p318 = scmp.eq.s32.totalorder %s46, 0
      %p319 = por %p317, %p318
      %p320 = scmp.ne.s32.totalorder %s308, %s309
      %p321 = scmp.eq.s32.totalorder %s47, 7
      %p322 = por %p320, %p321
      %p324 = scmp.ne.s32.totalorder %s309, %s323
      %p325 = scmp.eq.s32.totalorder %s47, 0
      %p326 = por %p324, %p325
      %s328 = sadd.s32 %s327, 1
      %p331 = scmp.eq.s32.totalorder %s41, 7
      %p332 = scmp.ne.s32.totalorder %s327, %s329
      %p333 = scmp.eq.s32.totalorder %s41, 0
      %p334 = por %p332, %p333
      %p335 = scmp.ne.s32.totalorder %s327, %s329
      %p336 = scmp.eq.s32.totalorder %s46, 7
      %p337 = por %p335, %p336
      %p338 = scmp.ne.s32.totalorder %s329, %s330
      %p339 = scmp.eq.s32.totalorder %s46, 0
      %p340 = por %p338, %p339
      %p341 = scmp.ne.s32.totalorder %s329, %s330
      %p342 = scmp.eq.s32.totalorder %s47, 7
      %p343 = por %p341, %p342
      %p345 = scmp.ne.s32.totalorder %s330, %s344
      %p346 = scmp.eq.s32.totalorder %s47, 0
      %p347 = por %p345, %p346
      %s349 = sadd.s32 %s348, 1
      %p352 = scmp.eq.s32.totalorder %s41, 7
      %p353 = scmp.ne.s32.totalorder %s348, %s350
      %p354 = scmp.eq.s32.totalorder %s41, 0
      %p355 = por %p353, %p354
      %p356 = scmp.ne.s32.totalorder %s348, %s350
      %p357 = scmp.eq.s32.totalorder %s46, 7
      %p358 = por %p356, %p357
      %p359 = scmp.ne.s32.totalorder %s350, %s351
      %p360 = scmp.eq.s32.totalorder %s46, 0
      %p361 = por %p359, %p360
      %p362 = scmp.ne.s32.totalorder %s350, %s351
      %p363 = scmp.eq.s32.totalorder %s47, 7
      %p364 = por %p362, %p363
      %p366 = scmp.ne.s32.totalorder %s351, %s365
      %p367 = scmp.eq.s32.totalorder %s47, 0
      %p368 = por %p366, %p367
      %s370 = sadd.s32 %s369, 1
      %p373 = scmp.eq.s32.totalorder %s41, 7
      %p374 = scmp.ne.s32.totalorder %s369, %s371
      %p375 = scmp.eq.s32.totalorder %s41, 0
      %p376 = por %p374, %p375
      %p377 = scmp.ne.s32.totalorder %s369, %s371
      %p378 = scmp.eq.s32.totalorder %s46, 7
      %p379 = por %p377, %p378
      %p380 = scmp.ne.s32.totalorder %s371, %s372
      %p381 = scmp.eq.s32.totalorder %s46, 0
      %p382 = por %p380, %p381
      %p383 = scmp.ne.s32.totalorder %s371, %s372
      %p384 = scmp.eq.s32.totalorder %s47, 7
      %p385 = por %p383, %p384
      %p387 = scmp.ne.s32.totalorder %s372, %s386
      %p388 = scmp.eq.s32.totalorder %s47, 0
      %p389 = por %p387, %p388
      %s391 = sadd.s32 %s390, 1
      %p394 = scmp.eq.s32.totalorder %s41, 7
      %p395 = scmp.ne.s32.totalorder %s390, %s392
      %p396 = scmp.eq.s32.totalorder %s41, 0
      %p397 = por %p395, %p396
      %p398 = scmp.ne.s32.totalorder %s390, %s392
      %p399 = scmp.eq.s32.totalorder %s46, 7
      %p400 = por %p398, %p399
      %p401 = scmp.ne.s32.totalorder %s392, %s393
      %p402 = scmp.eq.s32.totalorder %s46, 0
      %p403 = por %p401, %p402
      %p404 = scmp.ne.s32.totalorder %s392, %s393
      %p405 = scmp.eq.s32.totalorder %s47, 7
      %p406 = por %p404, %p405
      %p408 = scmp.ne.s32.totalorder %s393, %s407
      %p409 = scmp.eq.s32.totalorder %s47, 0
      %p410 = por %p408, %p409
      %s412 = sadd.s32 %s411, 1
      %p415 = scmp.eq.s32.totalorder %s41, 7
      %p416 = scmp.ne.s32.totalorder %s411, %s413
      %p417 = scmp.eq.s32.totalorder %s41, 0
      %p418 = por %p416, %p417
      %p419 = scmp.ne.s32.totalorder %s411, %s413
      %p420 = scmp.eq.s32.totalorder %s46, 7
      %p421 = por %p419, %p420
      %p422 = scmp.ne.s32.totalorder %s413, %s414
      %p423 = scmp.eq.s32.totalorder %s46, 0
      %p424 = por %p422, %p423
      %p425 = scmp.ne.s32.totalorder %s413, %s414
      %p426 = scmp.eq.s32.totalorder %s47, 7
      %p427 = por %p425, %p426
      %p429 = scmp.ne.s32.totalorder %s414, %s428
      %p430 = scmp.eq.s32.totalorder %s47, 0
      %p431 = por %p429, %p430
      %s433 = sadd.s32 %s432, 1
      %p436 = scmp.eq.s32.totalorder %s41, 7
      %p437 = scmp.ne.s32.totalorder %s432, %s434
      %p438 = scmp.eq.s32.totalorder %s41, 0
      %p439 = por %p437, %p438
      %p440 = scmp.ne.s32.totalorder %s432, %s434
      %p441 = scmp.eq.s32.totalorder %s46, 7
      %p442 = por %p440, %p441
      %p443 = scmp.ne.s32.totalorder %s434, %s435
      %p444 = scmp.eq.s32.totalorder %s46, 0
      %p445 = por %p443, %p444
      %p446 = scmp.ne.s32.totalorder %s434, %s435
      %p447 = scmp.eq.s32.totalorder %s47, 7
      %p448 = por %p446, %p447
      %p450 = scmp.ne.s32.totalorder %s435, %s449
      %p451 = scmp.eq.s32.totalorder %s47, 0
      %p452 = por %p450, %p451
      %s454 = sadd.s32 %s453, 1
      %p457 = scmp.eq.s32.totalorder %s41, 7
      %p458 = scmp.ne.s32.totalorder %s453, %s455
      %p459 = scmp.eq.s32.totalorder %s41, 0
      %p460 = por %p458, %p459
      %p461 = scmp.ne.s32.totalorder %s453, %s455
      %p462 = scmp.eq.s32.totalorder %s46, 7
      %p463 = por %p461, %p462
      %p464 = scmp.ne.s32.totalorder %s455, %s456
      %p465 = scmp.eq.s32.totalorder %s46, 0
      %p466 = por %p464, %p465
      %p467 = scmp.ne.s32.totalorder %s455, %s456
      %p468 = scmp.eq.s32.totalorder %s47, 7
      %p469 = por %p467, %p468
      %p471 = scmp.ne.s32.totalorder %s456, %s470
      %p472 = scmp.eq.s32.totalorder %s47, 0
      %p473 = por %p471, %p472
      %s475 = sadd.s32 %s474, 1
      %p478 = scmp.eq.s32.totalorder %s41, 7
      %p479 = scmp.ne.s32.totalorder %s474, %s476
      %p480 = scmp.eq.s32.totalorder %s41, 0
      %p481 = por %p479, %p480
      %p482 = scmp.ne.s32.totalorder %s474, %s476
      %p483 = scmp.eq.s32.totalorder %s46, 7
      %p484 = por %p482, %p483
      %p485 = scmp.ne.s32.totalorder %s476, %s477
      %p486 = scmp.eq.s32.totalorder %s46, 0
      %p487 = por %p485, %p486
      %p488 = scmp.ne.s32.totalorder %s476, %s477
      %p489 = scmp.eq.s32.totalorder %s47, 7
      %p490 = por %p488, %p489
      %p492 = scmp.ne.s32.totalorder %s477, %s491
      %p493 = scmp.eq.s32.totalorder %s47, 0
      %p494 = por %p492, %p493
      %s496 = sadd.s32 %s495, 1
      %p499 = scmp.eq.s32.totalorder %s41, 7
      %p500 = scmp.ne.s32.totalorder %s495, %s497
      %p501 = scmp.eq.s32.totalorder %s41, 0
      %p502 = por %p500, %p501
      %p503 = scmp.ne.s32.totalorder %s495, %s497
      %p504 = scmp.eq.s32.totalorder %s46, 7
      %p505 = por %p503, %p504
      %p506 = scmp.ne.s32.totalorder %s497, %s498
      %p507 = scmp.eq.s32.totalorder %s46, 0
      %p508 = por %p506, %p507
      %p509 = scmp.ne.s32.totalorder %s497, %s498
      %p510 = scmp.eq.s32.totalorder %s47, 7
      %p511 = por %p509, %p510
      %p513 = scmp.ne.s32.totalorder %s498, %s512
      %p514 = scmp.eq.s32.totalorder %s47, 0
      %p515 = por %p513, %p514
      %s516 = ssub.s32 %s41, %s48
      %p517 = scmp.eq.s32.totalorder %s516, 0
      %s519 = sadd.s32 %s518, 1
      %s520 = scalar_select %p517, %s518, %s519
      %p523 = pneg %p517
      %p524 = scmp.eq.s32.totalorder %s41, 7
      %p525 = por %p523, %p524
      %p526 = scmp.ne.s32.totalorder %s518, %s521
      %p527 = scmp.eq.s32.totalorder %s41, 0
      %p528 = por %p526, %p527
      %p529 = scmp.ne.s32.totalorder %s518, %s521
      %p530 = scmp.eq.s32.totalorder %s46, 7
      %p531 = por %p529, %p530
      %p532 = scmp.ne.s32.totalorder %s521, %s522
      %p533 = scmp.eq.s32.totalorder %s46, 0
      %p534 = por %p532, %p533
      %p535 = scmp.ne.s32.totalorder %s521, %s522
      %p536 = scmp.eq.s32.totalorder %s47, 7
      %p537 = por %p535, %p536
      %p539 = scmp.ne.s32.totalorder %s522, %s538
      %p540 = scmp.eq.s32.totalorder %s47, 0
      %p541 = por %p539, %p540
      %p542 = scmp.le.s32.totalorder 1, %s41
      %p543 = scmp.lt.s32.totalorder %s41, 9
      %p544 = pnand %p542, %p543
      %p545 = pneg %p544
      // Predicated region
      $region9: #{tpu_custom_call.1} parent=5 // pred_check
        _
      $region10: #{tpu_custom_call.1} parent=5 // pred_check_branch
        %547 = sbr.rel (%p544) target = $region12
      $region11: #{tpu_custom_call.1} parent=5 // pred_region
        %s548 = ssub.s32 %s41, 1
        // Predicated region
        $region13: #{tpu_custom_call.1} parent=11 // pred_check
          %p549 = pneg %p88
        $region14: #{tpu_custom_call.1} parent=11 // pred_check_branch
          %551 = sbr.rel (%p549) target = $region16
        $region15: #{tpu_custom_call.1} parent=11 // pred_region
          %553 = vsyncadd [#allocation5], 0
          %s554 = sshll.u32 %s1, 4
          %s555 = int_to_ptr.hbm [resolvable:$true] %s554
          %s556 = sshll.u32 [#allocation4], 4
          %s557 = int_to_ptr.vmem [resolvable:$true] %s556
          %562 = dma.hbm_to_vmem [thread:$0]  %s555, 1024, %s557, [#allocation5], 64, 64, 4
        $region16: #{tpu_custom_call.1} parent=11 // pred_fallthru
          _
        // Predicated region
        $region17: #{tpu_custom_call.1} parent=11 // pred_check
          %p563 = pneg %p109
        $region18: #{tpu_custom_call.1} parent=11 // pred_check_branch
          %565 = sbr.rel (%p563) target = $region20
        $region19: #{tpu_custom_call.1} parent=11 // pred_region
          %567 = vsyncadd [#allocation5], 0
          %s569 = sshll.u32 %s2, 4
          %s570 = int_to_ptr.hbm [resolvable:$true] %s569
          %s571 = sshll.u32 [#allocation6], 4
          %s572 = int_to_ptr.vmem [resolvable:$true] %s571
          %574 = dma.hbm_to_vmem [thread:$0]  %s570, 16, %s572, [#allocation5]
        $region20: #{tpu_custom_call.1} parent=11 // pred_fallthru
          _
        // Predicated region
        $region21: #{tpu_custom_call.1} parent=11 // pred_check
          %p575 = pneg %p130
        $region22: #{tpu_custom_call.1} parent=11 // pred_check_branch
          %577 = sbr.rel (%p575) target = $region24
        $region23: #{tpu_custom_call.1} parent=11 // pred_region
          %579 = vsyncadd [#allocation8], 0
          %s580 = sshll.u32 %s3, 4
          %s581 = int_to_ptr.hbm [resolvable:$true] %s580
          %s582 = sshll.u32 [#allocation7], 4
          %s583 = int_to_ptr.vmem [resolvable:$true] %s582
          %588 = dma.hbm_to_vmem [thread:$0]  %s581, 1024, %s583, [#allocation8], 64, 64, 4
        $region24: #{tpu_custom_call.1} parent=11 // pred_fallthru
          _
        // Predicated region
        $region25: #{tpu_custom_call.1} parent=11 // pred_check
          %p589 = pneg %p151
        $region26: #{tpu_custom_call.1} parent=11 // pred_check_branch
          %591 = sbr.rel (%p589) target = $region28
        $region27: #{tpu_custom_call.1} parent=11 // pred_region
          %593 = vsyncadd [#allocation8], 0
          %s595 = sshll.u32 %s4, 4
          %s596 = int_to_ptr.hbm [resolvable:$true] %s595
          %s597 = sshll.u32 [#allocation9], 4
          %s598 = int_to_ptr.vmem [resolvable:$true] %s597
          %600 = dma.hbm_to_vmem [thread:$0]  %s596, 16, %s598, [#allocation8]
        $region28: #{tpu_custom_call.1} parent=11 // pred_fallthru
          _
        // Predicated region
        $region29: #{tpu_custom_call.1} parent=11 // pred_check
          %p601 = pneg %p172
        $region30: #{tpu_custom_call.1} parent=11 // pred_check_branch
          %603 = sbr.rel (%p601) target = $region32
        $region31: #{tpu_custom_call.1} parent=11 // pred_region
          %605 = vsyncadd [#allocation11], 0
          %s606 = sshll.u32 %s5, 4
          %s607 = int_to_ptr.hbm [resolvable:$true] %s606
          %s608 = sshll.u32 [#allocation10], 4
          %s609 = int_to_ptr.vmem [resolvable:$true] %s608
          %614 = dma.hbm_to_vmem [thread:$0]  %s607, 1024, %s609, [#allocation11], 64, 64, 4
        $region32: #{tpu_custom_call.1} parent=11 // pred_fallthru
          _
        // Predicated region
        $region33: #{tpu_custom_call.1} parent=11 // pred_check
          %p615 = pneg %p193
        $region34: #{tpu_custom_call.1} parent=11 // pred_check_branch
          %617 = sbr.rel (%p615) target = $region36
        $region35: #{tpu_custom_call.1} parent=11 // pred_region
          %619 = vsyncadd [#allocation11], 0
          %s621 = sshll.u32 %s6, 4
          %s622 = int_to_ptr.hbm [resolvable:$true] %s621
          %s623 = sshll.u32 [#allocation12], 4
          %s624 = int_to_ptr.vmem [resolvable:$true] %s623
          %626 = dma.hbm_to_vmem [thread:$0]  %s622, 16, %s624, [#allocation11]
        $region36: #{tpu_custom_call.1} parent=11 // pred_fallthru
          _
        // Predicated region
        $region37: #{tpu_custom_call.1} parent=11 // pred_check
          %p627 = pneg %p214
        $region38: #{tpu_custom_call.1} parent=11 // pred_check_branch
          %629 = sbr.rel (%p627) target = $region40
        $region39: #{tpu_custom_call.1} parent=11 // pred_region
          %631 = vsyncadd [#allocation14], 0
          %s632 = sshll.u32 %s7, 4
          %s633 = int_to_ptr.hbm [resolvable:$true] %s632
          %s634 = sshll.u32 [#allocation13], 4
          %s635 = int_to_ptr.vmem [resolvable:$true] %s634
          %640 = dma.hbm_to_vmem [thread:$0]  %s633, 1024, %s635, [#allocation14], 64, 64, 4
        $region40: #{tpu_custom_call.1} parent=11 // pred_fallthru
          _
        // Predicated region
        $region41: #{tpu_custom_call.1} parent=11 // pred_check
          %p641 = pneg %p235
        $region42: #{tpu_custom_call.1} parent=11 // pred_check_branch
          %643 = sbr.rel (%p641) target = $region44
        $region43: #{tpu_custom_call.1} parent=11 // pred_region
          %645 = vsyncadd [#allocation14], 0
          %s647 = sshll.u32 %s8, 4
          %s648 = int_to_ptr.hbm [resolvable:$true] %s647
          %s649 = sshll.u32 [#allocation15], 4
          %s650 = int_to_ptr.vmem [resolvable:$true] %s649
          %652 = dma.hbm_to_vmem [thread:$0]  %s648, 16, %s650, [#allocation14]
        $region44: #{tpu_custom_call.1} parent=11 // pred_fallthru
          _
        // Predicated region
        $region45: #{tpu_custom_call.1} parent=11 // pred_check
          %p653 = pneg %p256
        $region46: #{tpu_custom_call.1} parent=11 // pred_check_branch
          %655 = sbr.rel (%p653) target = $region48
        $region47: #{tpu_custom_call.1} parent=11 // pred_region
          %657 = vsyncadd [#allocation17], 0
          %s658 = sshll.u32 %s9, 4
          %s659 = int_to_ptr.hbm [resolvable:$true] %s658
          %s660 = sshll.u32 [#allocation16], 4
          %s661 = int_to_ptr.vmem [resolvable:$true] %s660
          %666 = dma.hbm_to_vmem [thread:$0]  %s659, 1024, %s661, [#allocation17], 64, 64, 4
        $region48: #{tpu_custom_call.1} parent=11 // pred_fallthru
          _
        // Predicated region
        $region49: #{tpu_custom_call.1} parent=11 // pred_check
          %p667 = pneg %p277
        $region50: #{tpu_custom_call.1} parent=11 // pred_check_branch
          %669 = sbr.rel (%p667) target = $region52
        $region51: #{tpu_custom_call.1} parent=11 // pred_region
          %671 = vsyncadd [#allocation17], 0
          %s673 = sshll.u32 %s10, 4
          %s674 = int_to_ptr.hbm [resolvable:$true] %s673
          %s675 = sshll.u32 [#allocation18], 4
          %s676 = int_to_ptr.vmem [resolvable:$true] %s675
          %678 = dma.hbm_to_vmem [thread:$0]  %s674, 16, %s676, [#allocation17]
        $region52: #{tpu_custom_call.1} parent=11 // pred_fallthru
          _
        // Predicated region
        $region53: #{tpu_custom_call.1} parent=11 // pred_check
          %p679 = pneg %p298
        $region54: #{tpu_custom_call.1} parent=11 // pred_check_branch
          %681 = sbr.rel (%p679) target = $region56
        $region55: #{tpu_custom_call.1} parent=11 // pred_region
          %683 = vsyncadd [#allocation20], 0
          %s684 = sshll.u32 %s11, 4
          %s685 = int_to_ptr.hbm [resolvable:$true] %s684
          %s686 = sshll.u32 [#allocation19], 4
          %s687 = int_to_ptr.vmem [resolvable:$true] %s686
          %692 = dma.hbm_to_vmem [thread:$0]  %s685, 1024, %s687, [#allocation20], 64, 64, 4
        $region56: #{tpu_custom_call.1} parent=11 // pred_fallthru
          _
        // Predicated region
        $region57: #{tpu_custom_call.1} parent=11 // pred_check
          %p693 = pneg %p319
        $region58: #{tpu_custom_call.1} parent=11 // pred_check_branch
          %695 = sbr.rel (%p693) target = $region60
        $region59: #{tpu_custom_call.1} parent=11 // pred_region
          %697 = vsyncadd [#allocation20], 0
          %s698 = sshll.u32 %s12, 4
          %s699 = int_to_ptr.hbm [resolvable:$true] %s698
          %s700 = sshll.u32 [#allocation21], 4
          %s701 = int_to_ptr.vmem [resolvable:$true] %s700
          %706 = dma.hbm_to_vmem [thread:$0]  %s699, 1024, %s701, [#allocation20], 64, 64, 4
        $region60: #{tpu_custom_call.1} parent=11 // pred_fallthru
          _
        // Predicated region
        $region61: #{tpu_custom_call.1} parent=11 // pred_check
          %p707 = pneg %p340
        $region62: #{tpu_custom_call.1} parent=11 // pred_check_branch
          %709 = sbr.rel (%p707) target = $region64
        $region63: #{tpu_custom_call.1} parent=11 // pred_region
          %711 = vsyncadd [#allocation23], 0
          %s713 = sshll.u32 %s13, 4
          %s714 = int_to_ptr.hbm [resolvable:$true] %s713
          %s715 = sshll.u32 [#allocation22], 4
          %s716 = int_to_ptr.vmem [resolvable:$true] %s715
          %718 = dma.hbm_to_vmem [thread:$0]  %s714, 16, %s716, [#allocation23]
        $region64: #{tpu_custom_call.1} parent=11 // pred_fallthru
          _
        // Predicated region
        $region65: #{tpu_custom_call.1} parent=11 // pred_check
          %p719 = pneg %p361
        $region66: #{tpu_custom_call.1} parent=11 // pred_check_branch
          %721 = sbr.rel (%p719) target = $region68
        $region67: #{tpu_custom_call.1} parent=11 // pred_region
          %723 = vsyncadd [#allocation23], 0
          %s724 = sshll.u32 %s14, 4
          %s725 = int_to_ptr.hbm [resolvable:$true] %s724
          %s726 = sshll.u32 [#allocation24], 4
          %s727 = int_to_ptr.vmem [resolvable:$true] %s726
          %732 = dma.hbm_to_vmem [thread:$0]  %s725, 1024, %s727, [#allocation23], 64, 64, 4
        $region68: #{tpu_custom_call.1} parent=11 // pred_fallthru
          _
        // Predicated region
        $region69: #{tpu_custom_call.1} parent=11 // pred_check
          %p733 = pneg %p382
        $region70: #{tpu_custom_call.1} parent=11 // pred_check_branch
          %735 = sbr.rel (%p733) target = $region72
        $region71: #{tpu_custom_call.1} parent=11 // pred_region
          %737 = vsyncadd [#allocation26], 0
          %s739 = sshll.u32 %s15, 4
          %s740 = int_to_ptr.hbm [resolvable:$true] %s739
          %s741 = sshll.u32 [#allocation25], 4
          %s742 = int_to_ptr.vmem [resolvable:$true] %s741
          %744 = dma.hbm_to_vmem [thread:$0]  %s740, 16, %s742, [#allocation26]
        $region72: #{tpu_custom_call.1} parent=11 // pred_fallthru
          _
        // Predicated region
        $region73: #{tpu_custom_call.1} parent=11 // pred_check
          %p745 = pneg %p403
        $region74: #{tpu_custom_call.1} parent=11 // pred_check_branch
          %747 = sbr.rel (%p745) target = $region76
        $region75: #{tpu_custom_call.1} parent=11 // pred_region
          %749 = vsyncadd [#allocation26], 0
          %s750 = sshll.u32 %s16, 4
          %s751 = int_to_ptr.hbm [resolvable:$true] %s750
          %s752 = sshll.u32 [#allocation27], 4
          %s753 = int_to_ptr.vmem [resolvable:$true] %s752
          %758 = dma.hbm_to_vmem [thread:$0]  %s751, 1024, %s753, [#allocation26], 64, 64, 4
        $region76: #{tpu_custom_call.1} parent=11 // pred_fallthru
          _
        // Predicated region
        $region77: #{tpu_custom_call.1} parent=11 // pred_check
          %p759 = pneg %p424
        $region78: #{tpu_custom_call.1} parent=11 // pred_check_branch
          %761 = sbr.rel (%p759) target = $region80
        $region79: #{tpu_custom_call.1} parent=11 // pred_region
          %763 = vsyncadd [#allocation29], 0
          %s765 = sshll.u32 %s17, 4
          %s766 = int_to_ptr.hbm [resolvable:$true] %s765
          %s767 = sshll.u32 [#allocation28], 4
          %s768 = int_to_ptr.vmem [resolvable:$true] %s767
          %770 = dma.hbm_to_vmem [thread:$0]  %s766, 16, %s768, [#allocation29]
        $region80: #{tpu_custom_call.1} parent=11 // pred_fallthru
          _
        // Predicated region
        $region81: #{tpu_custom_call.1} parent=11 // pred_check
          %p771 = pneg %p445
        $region82: #{tpu_custom_call.1} parent=11 // pred_check_branch
          %773 = sbr.rel (%p771) target = $region84
        $region83: #{tpu_custom_call.1} parent=11 // pred_region
          %775 = vsyncadd [#allocation29], 0
          %s776 = sshll.u32 %s18, 4
          %s777 = int_to_ptr.hbm [resolvable:$true] %s776
          %s778 = sshll.u32 [#allocation30], 4
          %s779 = int_to_ptr.vmem [resolvable:$true] %s778
          %784 = dma.hbm_to_vmem [thread:$0]  %s777, 1024, %s779, [#allocation29], 64, 64, 4
        $region84: #{tpu_custom_call.1} parent=11 // pred_fallthru
          _
        // Predicated region
        $region85: #{tpu_custom_call.1} parent=11 // pred_check
          %p785 = pneg %p466
        $region86: #{tpu_custom_call.1} parent=11 // pred_check_branch
          %787 = sbr.rel (%p785) target = $region88
        $region87: #{tpu_custom_call.1} parent=11 // pred_region
          %789 = vsyncadd [#allocation32], 0
          %s791 = sshll.u32 %s19, 4
          %s792 = int_to_ptr.hbm [resolvable:$true] %s791
          %s793 = sshll.u32 [#allocation31], 4
          %s794 = int_to_ptr.vmem [resolvable:$true] %s793
          %796 = dma.hbm_to_vmem [thread:$0]  %s792, 16, %s794, [#allocation32]
        $region88: #{tpu_custom_call.1} parent=11 // pred_fallthru
          _
        // Predicated region
        $region89: #{tpu_custom_call.1} parent=11 // pred_check
          %p797 = pneg %p487
        $region90: #{tpu_custom_call.1} parent=11 // pred_check_branch
          %799 = sbr.rel (%p797) target = $region92
        $region91: #{tpu_custom_call.1} parent=11 // pred_region
          _
        $region92: #{tpu_custom_call.1} parent=11 // pred_fallthru
          _
        // Predicated region
        $region93: #{tpu_custom_call.1} parent=11 // pred_check
          %p800 = pneg %p508
        $region94: #{tpu_custom_call.1} parent=11 // pred_check_branch
          %802 = sbr.rel (%p800) target = $region96
        $region95: #{tpu_custom_call.1} parent=11 // pred_region
          %804 = vsyncadd [#allocation32], 0
          %s806 = sshll.u32 %s21, 4
          %s807 = int_to_ptr.hbm [resolvable:$true] %s806
          %s808 = sshll.u32 [#allocation33], 4
          %s809 = int_to_ptr.vmem [resolvable:$true] %s808
          %811 = dma.hbm_to_vmem [thread:$0]  %s807, 16, %s809, [#allocation32]
        $region96: #{tpu_custom_call.1} parent=11 // pred_fallthru
          _
      $region12: #{tpu_custom_call.1} parent=5 // pred_fallthru
        _
      %p812 = scmp.lt.s32.totalorder %s41, 8
      // Predicated region
      $region97: #{tpu_custom_call.1} parent=5 // pred_check
        %p813 = pneg %p812
      $region98: #{tpu_custom_call.1} parent=5 // pred_check_branch
        %815 = sbr.rel (%p813) target = $region100
      $region99: #{tpu_custom_call.1} parent=5 // pred_region
        // Predicated region
        $region101: #{tpu_custom_call.1} parent=99 // pred_check
          %p816 = pneg %p61
        $region102: #{tpu_custom_call.1} parent=99 // pred_check_branch
          %818 = sbr.rel (%p816) target = $region104
        $region103: #{tpu_custom_call.1} parent=99 // pred_region
          %s819 = sand.u32 %s51, 1
          %s820 = scalar_lea.sflag [#allocation3], %s819
          %s821 = sand.u32 %s51, 1
          %s822 = smul.addr %s821, 256
          %s823 = scalar_lea.vmem [#allocation2], %s822
          %s824 = smul.u32 64, %s41
          %826 = vsyncadd %s820, 0
          %s827 = smul.addr %s824, 4
          %s828 = scalar_lea.hbm %s0, %s827
          %s829 = sshll.u32 %s828, 4
          %s830 = int_to_ptr.hbm [resolvable:$true] %s829
          %s831 = sshll.u32 %s823, 4
          %s832 = int_to_ptr.vmem [resolvable:$true] %s831
          %837 = dma.hbm_to_vmem [thread:$0]  %s830, 4096, %s832, %s820, 64, 64, 4
        $region104: #{tpu_custom_call.1} parent=99 // pred_fallthru
          _
      $region100: #{tpu_custom_call.1} parent=5 // pred_fallthru
        _
      %p838 = scmp.le.s32.totalorder 1, %s41
      %p839 = scmp.lt.s32.totalorder %s41, 9
      %p840 = pnand %p838, %p839
      %p841 = pneg %p840
      // Predicated region
      $region105: #{tpu_custom_call.1} parent=5 // pred_check
        _
      $region106: #{tpu_custom_call.1} parent=5 // pred_check_branch
        %843 = sbr.rel (%p840) target = $region108
      $region107: #{tpu_custom_call.1} parent=5 // pred_region
        %s844 = ssub.s32 %s41, 1
        %s845 = sand.u32 %s54, 1
        %s846 = scalar_lea.sflag [#allocation3], %s845
        %s847 = sand.u32 %s54, 1
        %s848 = smul.addr %s847, 256
        %s849 = scalar_lea.vmem [#allocation2], %s848
        // Predicated region
        $region109: #{tpu_custom_call.1} parent=107 // pred_check
          %p850 = pneg %p67
        $region110: #{tpu_custom_call.1} parent=107 // pred_check_branch
          %852 = sbr.rel (%p850) target = $region112
        $region111: #{tpu_custom_call.1} parent=107 // pred_region
          %854 = dma.done %s846, 4096
        $region112: #{tpu_custom_call.1} parent=107 // pred_fallthru
          _
        // Predicated region
        $region113: #{tpu_custom_call.1} parent=107 // pred_check
          %p855 = pneg %p88
        $region114: #{tpu_custom_call.1} parent=107 // pred_check_branch
          %857 = sbr.rel (%p855) target = $region116
        $region115: #{tpu_custom_call.1} parent=107 // pred_region
          %859 = dma.done [#allocation5], 1024
        $region116: #{tpu_custom_call.1} parent=107 // pred_fallthru
          _
        // Predicated region
        $region117: #{tpu_custom_call.1} parent=107 // pred_check
          %p860 = pneg %p109
        $region118: #{tpu_custom_call.1} parent=107 // pred_check_branch
          %862 = sbr.rel (%p860) target = $region120
        $region119: #{tpu_custom_call.1} parent=107 // pred_region
          %864 = dma.done [#allocation5], 16
        $region120: #{tpu_custom_call.1} parent=107 // pred_fallthru
          _
        // Predicated region
        $region121: #{tpu_custom_call.1} parent=107 // pred_check
          %p865 = pneg %p130
        $region122: #{tpu_custom_call.1} parent=107 // pred_check_branch
          %867 = sbr.rel (%p865) target = $region124
        $region123: #{tpu_custom_call.1} parent=107 // pred_region
          %869 = dma.done [#allocation8], 1024
        $region124: #{tpu_custom_call.1} parent=107 // pred_fallthru
          _
        // Predicated region
        $region125: #{tpu_custom_call.1} parent=107 // pred_check
          %p870 = pneg %p151
        $region126: #{tpu_custom_call.1} parent=107 // pred_check_branch
          %872 = sbr.rel (%p870) target = $region128
        $region127: #{tpu_custom_call.1} parent=107 // pred_region
          %874 = dma.done [#allocation8], 16
        $region128: #{tpu_custom_call.1} parent=107 // pred_fallthru
          _
        // Predicated region
        $region129: #{tpu_custom_call.1} parent=107 // pred_check
          %p875 = pneg %p172
        $region130: #{tpu_custom_call.1} parent=107 // pred_check_branch
          %877 = sbr.rel (%p875) target = $region132
        $region131: #{tpu_custom_call.1} parent=107 // pred_region
          %879 = dma.done [#allocation11], 1024
        $region132: #{tpu_custom_call.1} parent=107 // pred_fallthru
          _
        // Predicated region
        $region133: #{tpu_custom_call.1} parent=107 // pred_check
          %p880 = pneg %p193
        $region134: #{tpu_custom_call.1} parent=107 // pred_check_branch
          %882 = sbr.rel (%p880) target = $region136
        $region135: #{tpu_custom_call.1} parent=107 // pred_region
          %884 = dma.done [#allocation11], 16
        $region136: #{tpu_custom_call.1} parent=107 // pred_fallthru
          _
        // Predicated region
        $region137: #{tpu_custom_call.1} parent=107 // pred_check
          %p885 = pneg %p214
        $region138: #{tpu_custom_call.1} parent=107 // pred_check_branch
          %887 = sbr.rel (%p885) target = $region140
        $region139: #{tpu_custom_call.1} parent=107 // pred_region
          %889 = dma.done [#allocation14], 1024
        $region140: #{tpu_custom_call.1} parent=107 // pred_fallthru
          _
        // Predicated region
        $region141: #{tpu_custom_call.1} parent=107 // pred_check
          %p890 = pneg %p235
        $region142: #{tpu_custom_call.1} parent=107 // pred_check_branch
          %892 = sbr.rel (%p890) target = $region144
        $region143: #{tpu_custom_call.1} parent=107 // pred_region
          %894 = dma.done [#allocation14], 16
        $region144: #{tpu_custom_call.1} parent=107 // pred_fallthru
          _
        // Predicated region
        $region145: #{tpu_custom_call.1} parent=107 // pred_check
          %p895 = pneg %p256
        $region146: #{tpu_custom_call.1} parent=107 // pred_check_branch
          %897 = sbr.rel (%p895) target = $region148
        $region147: #{tpu_custom_call.1} parent=107 // pred_region
          %899 = dma.done [#allocation17], 1024
        $region148: #{tpu_custom_call.1} parent=107 // pred_fallthru
          _
        // Predicated region
        $region149: #{tpu_custom_call.1} parent=107 // pred_check
          %p900 = pneg %p277
        $region150: #{tpu_custom_call.1} parent=107 // pred_check_branch
          %902 = sbr.rel (%p900) target = $region152
        $region151: #{tpu_custom_call.1} parent=107 // pred_region
          %904 = dma.done [#allocation17], 16
        $region152: #{tpu_custom_call.1} parent=107 // pred_fallthru
          _
        // Predicated region
        $region153: #{tpu_custom_call.1} parent=107 // pred_check
          %p905 = pneg %p298
        $region154: #{tpu_custom_call.1} parent=107 // pred_check_branch
          %907 = sbr.rel (%p905) target = $region156
        $region155: #{tpu_custom_call.1} parent=107 // pred_region
          %909 = dma.done [#allocation20], 1024
        $region156: #{tpu_custom_call.1} parent=107 // pred_fallthru
          _
        // Predicated region
        $region157: #{tpu_custom_call.1} parent=107 // pred_check
          %p910 = pneg %p319
        $region158: #{tpu_custom_call.1} parent=107 // pred_check_branch
          %912 = sbr.rel (%p910) target = $region160
        $region159: #{tpu_custom_call.1} parent=107 // pred_region
          %914 = dma.done [#allocation20], 1024
        $region160: #{tpu_custom_call.1} parent=107 // pred_fallthru
          _
        // Predicated region
        $region161: #{tpu_custom_call.1} parent=107 // pred_check
          %p915 = pneg %p340
        $region162: #{tpu_custom_call.1} parent=107 // pred_check_branch
          %917 = sbr.rel (%p915) target = $region164
        $region163: #{tpu_custom_call.1} parent=107 // pred_region
          %919 = dma.done [#allocation23], 16
        $region164: #{tpu_custom_call.1} parent=107 // pred_fallthru
          _
        // Predicated region
        $region165: #{tpu_custom_call.1} parent=107 // pred_check
          %p920 = pneg %p361
        $region166: #{tpu_custom_call.1} parent=107 // pred_check_branch
          %922 = sbr.rel (%p920) target = $region168
        $region167: #{tpu_custom_call.1} parent=107 // pred_region
          %924 = dma.done [#allocation23], 1024
        $region168: #{tpu_custom_call.1} parent=107 // pred_fallthru
          _
        // Predicated region
        $region169: #{tpu_custom_call.1} parent=107 // pred_check
          %p925 = pneg %p382
        $region170: #{tpu_custom_call.1} parent=107 // pred_check_branch
          %927 = sbr.rel (%p925) target = $region172
        $region171: #{tpu_custom_call.1} parent=107 // pred_region
          %929 = dma.done [#allocation26], 16
        $region172: #{tpu_custom_call.1} parent=107 // pred_fallthru
          _
        // Predicated region
        $region173: #{tpu_custom_call.1} parent=107 // pred_check
          %p930 = pneg %p403
        $region174: #{tpu_custom_call.1} parent=107 // pred_check_branch
          %932 = sbr.rel (%p930) target = $region176
        $region175: #{tpu_custom_call.1} parent=107 // pred_region
          %934 = dma.done [#allocation26], 1024
        $region176: #{tpu_custom_call.1} parent=107 // pred_fallthru
          _
        // Predicated region
        $region177: #{tpu_custom_call.1} parent=107 // pred_check
          %p935 = pneg %p424
        $region178: #{tpu_custom_call.1} parent=107 // pred_check_branch
          %937 = sbr.rel (%p935) target = $region180
        $region179: #{tpu_custom_call.1} parent=107 // pred_region
          %939 = dma.done [#allocation29], 16
        $region180: #{tpu_custom_call.1} parent=107 // pred_fallthru
          _
        // Predicated region
        $region181: #{tpu_custom_call.1} parent=107 // pred_check
          %p940 = pneg %p445
        $region182: #{tpu_custom_call.1} parent=107 // pred_check_branch
          %942 = sbr.rel (%p940) target = $region184
        $region183: #{tpu_custom_call.1} parent=107 // pred_region
          %944 = dma.done [#allocation29], 1024
        $region184: #{tpu_custom_call.1} parent=107 // pred_fallthru
          _
        // Predicated region
        $region185: #{tpu_custom_call.1} parent=107 // pred_check
          %p945 = pneg %p466
        $region186: #{tpu_custom_call.1} parent=107 // pred_check_branch
          %947 = sbr.rel (%p945) target = $region188
        $region187: #{tpu_custom_call.1} parent=107 // pred_region
          %949 = dma.done [#allocation32], 16
        $region188: #{tpu_custom_call.1} parent=107 // pred_fallthru
          _
        // Predicated region
        $region189: #{tpu_custom_call.1} parent=107 // pred_check
          %p950 = pneg %p508
        $region190: #{tpu_custom_call.1} parent=107 // pred_check_branch
          %952 = sbr.rel (%p950) target = $region192
        $region191: #{tpu_custom_call.1} parent=107 // pred_region
          %954 = dma.done [#allocation32], 16
        $region192: #{tpu_custom_call.1} parent=107 // pred_fallthru
          _
        %s955 = sand.u32 %s54, 1
        %s956 = scalar_lea.sflag [#allocation3], %s955
        %s957 = sand.u32 %s54, 1
        %s958 = smul.addr %s957, 256
        %s959 = scalar_lea.vmem [#allocation2], %s958
        %p960 = pneg %p67
        %p961 = pneg %p64
        %p962 = pneg %p88
        %p963 = pneg %p85
        %p964 = pneg %p109
        %p965 = pneg %p106
        %p966 = pneg %p130
        %p967 = pneg %p127
        %p968 = pneg %p151
        %p969 = pneg %p148
        %p970 = pneg %p172
        %p971 = pneg %p169
        %p972 = pneg %p193
        %p973 = pneg %p190
        %p974 = pneg %p214
        %p975 = pneg %p211
        %p976 = pneg %p235
        %p977 = pneg %p232
        %p978 = pneg %p256
        %p979 = pneg %p253
        %p980 = pneg %p277
        %p981 = pneg %p274
        %p982 = pneg %p298
        %p983 = pneg %p295
        %p984 = pneg %p319
        %p985 = pneg %p316
        %p986 = pneg %p340
        %p987 = pneg %p337
        %p988 = pneg %p361
        %p989 = pneg %p358
        %p990 = pneg %p382
        %p991 = pneg %p379
        %p992 = pneg %p403
        %p993 = pneg %p400
        %p994 = pneg %p424
        %p995 = pneg %p421
        %p996 = pneg %p445
        %p997 = pneg %p442
        %p998 = pneg %p466
        %p999 = pneg %p463
        %p1000 = pneg %p487
        %p1001 = pneg %p484
        %p1002 = pneg %p508
        %p1003 = pneg %p505
        %p1004 = pneg %p534
        %p1005 = pneg %p531
        %s1006 = smul.u32 64, %s46
        %p1007 = scmp.lt.s32.totalorder %s1006, 511
        %s1008 = scalar_select %p1007, %s1006, 511
        %s1009 = smul.addr %s1008, 8
        %s1010 = scalar_lea.vmem %s22, %s1009
        %s1011 = smul.u32 64, %s46
        %s1012 = smul.u32 64, %s46
        %p1013 = scmp.lt.s32.totalorder %s1012, 511
        %s1014 = scalar_select %p1013, %s1012, 511
        %s1015 = smul.addr %s1014, 8
        %s1016 = scalar_lea.vmem %s22, %s1015
        %s1017 = smul.u32 64, %s46
        %v1018 = vld [vmem:[%s849] sm:$0xf]
        %v1019 = vld [vmem:[%s849 + $0x4] sm:$0xf]
        %v1020 = vld [vmem:[%s849 + $0x8] sm:$0xf]
        %v1021 = vld [vmem:[%s849 + $0xc] sm:$0xf]
        %v1022 = vld [vmem:[%s849 + $0x10] sm:$0xf]
        %v1023 = vld [vmem:[%s849 + $0x14] sm:$0xf]
        %v1024 = vld [vmem:[%s849 + $0x18] sm:$0xf]
        %v1025 = vld [vmem:[%s849 + $0x1c] sm:$0xf]
        %v1026 = vld [vmem:[%s849 + $0x20] sm:$0xf]
        %v1027 = vld [vmem:[%s849 + $0x24] sm:$0xf]
        %v1028 = vld [vmem:[%s849 + $0x28] sm:$0xf]
        %v1029 = vld [vmem:[%s849 + $0x2c] sm:$0xf]
        %v1030 = vld [vmem:[%s849 + $0x30] sm:$0xf]
        %v1031 = vld [vmem:[%s849 + $0x34] sm:$0xf]
        %v1032 = vld [vmem:[%s849 + $0x38] sm:$0xf]
        %v1033 = vld [vmem:[%s849 + $0x3c] sm:$0xf]
        %v1034 = vld [vmem:[%s849 + $0x40] sm:$0xf]
        %v1035 = vld [vmem:[%s849 + $0x44] sm:$0xf]
        %v1036 = vld [vmem:[%s849 + $0x48] sm:$0xf]
        %v1037 = vld [vmem:[%s849 + $0x4c] sm:$0xf]
        %v1038 = vld [vmem:[%s849 + $0x50] sm:$0xf]
        %v1039 = vld [vmem:[%s849 + $0x54] sm:$0xf]
        %v1040 = vld [vmem:[%s849 + $0x58] sm:$0xf]
        %v1041 = vld [vmem:[%s849 + $0x5c] sm:$0xf]
        %v1042 = vld [vmem:[%s849 + $0x60] sm:$0xf]
        %v1043 = vld [vmem:[%s849 + $0x64] sm:$0xf]
        %v1044 = vld [vmem:[%s849 + $0x68] sm:$0xf]
        %v1045 = vld [vmem:[%s849 + $0x6c] sm:$0xf]
        %v1046 = vld [vmem:[%s849 + $0x70] sm:$0xf]
        %v1047 = vld [vmem:[%s849 + $0x74] sm:$0xf]
        %v1048 = vld [vmem:[%s849 + $0x78] sm:$0xf]
        %v1049 = vld [vmem:[%s849 + $0x7c] sm:$0xf]
        %v1050 = vld [vmem:[%s849 + $0x80] sm:$0xf]
        %v1051 = vld [vmem:[%s849 + $0x84] sm:$0xf]
        %v1052 = vld [vmem:[%s849 + $0x88] sm:$0xf]
        %v1053 = vld [vmem:[%s849 + $0x8c] sm:$0xf]
        %v1054 = vld [vmem:[%s849 + $0x90] sm:$0xf]
        %v1055 = vld [vmem:[%s849 + $0x94] sm:$0xf]
        %v1056 = vld [vmem:[%s849 + $0x98] sm:$0xf]
        %v1057 = vld [vmem:[%s849 + $0x9c] sm:$0xf]
        %v1058 = vld [vmem:[%s849 + $0xa0] sm:$0xf]
        %v1059 = vld [vmem:[%s849 + $0xa4] sm:$0xf]
        %v1060 = vld [vmem:[%s849 + $0xa8] sm:$0xf]
        %v1061 = vld [vmem:[%s849 + $0xac] sm:$0xf]
        %v1062 = vld [vmem:[%s849 + $0xb0] sm:$0xf]
        %v1063 = vld [vmem:[%s849 + $0xb4] sm:$0xf]
        %v1064 = vld [vmem:[%s849 + $0xb8] sm:$0xf]
        %v1065 = vld [vmem:[%s849 + $0xbc] sm:$0xf]
        %v1066 = vld [vmem:[%s849 + $0xc0] sm:$0xf]
        %v1067 = vld [vmem:[%s849 + $0xc4] sm:$0xf]
        %v1068 = vld [vmem:[%s849 + $0xc8] sm:$0xf]
        %v1069 = vld [vmem:[%s849 + $0xcc] sm:$0xf]
        %v1070 = vld [vmem:[%s849 + $0xd0] sm:$0xf]
        %v1071 = vld [vmem:[%s849 + $0xd4] sm:$0xf]
        %v1072 = vld [vmem:[%s849 + $0xd8] sm:$0xf]
        %v1073 = vld [vmem:[%s849 + $0xdc] sm:$0xf]
        %v1074 = vld [vmem:[%s849 + $0xe0] sm:$0xf]
        %v1075 = vld [vmem:[%s849 + $0xe4] sm:$0xf]
        %v1076 = vld [vmem:[%s849 + $0xe8] sm:$0xf]
        %v1077 = vld [vmem:[%s849 + $0xec] sm:$0xf]
        %v1078 = vld [vmem:[%s849 + $0xf0] sm:$0xf]
        %v1079 = vld [vmem:[%s849 + $0xf4] sm:$0xf]
        %v1080 = vld [vmem:[%s849 + $0xf8] sm:$0xf]
        %v1081 = vld [vmem:[%s849 + $0xfc] sm:$0xf]
        %v1082 = vld [vmem:[#allocation4] sm:$0xf]
        %v1083 = vld [vmem:[#allocation4 + $0x4] sm:$0xf]
        %v1084 = vld [vmem:[#allocation4 + $0x8] sm:$0xf]
        %v1085 = vld [vmem:[#allocation4 + $0xc] sm:$0xf]
        %v1086 = vld [vmem:[#allocation4 + $0x10] sm:$0xf]
        %v1087 = vld [vmem:[#allocation4 + $0x14] sm:$0xf]
        %v1088 = vld [vmem:[#allocation4 + $0x18] sm:$0xf]
        %v1089 = vld [vmem:[#allocation4 + $0x1c] sm:$0xf]
        %v1090 = vld [vmem:[#allocation4 + $0x20] sm:$0xf]
        %v1091 = vld [vmem:[#allocation4 + $0x24] sm:$0xf]
        %v1092 = vld [vmem:[#allocation4 + $0x28] sm:$0xf]
        %v1093 = vld [vmem:[#allocation4 + $0x2c] sm:$0xf]
        %v1094 = vld [vmem:[#allocation4 + $0x30] sm:$0xf]
        %v1095 = vld [vmem:[#allocation4 + $0x34] sm:$0xf]
        %v1096 = vld [vmem:[#allocation4 + $0x38] sm:$0xf]
        %v1097 = vld [vmem:[#allocation4 + $0x3c] sm:$0xf]
        %v1098 = vld [vmem:[#allocation6] sm:$0x1]
        %v1100 = vperm.slane %v1098, 0
        %v1166 = vunpack.c.l.b16 %v1018
        %v1167 = vunpack.c.l.b16 %v1019
        %v1168 = vunpack.c.l.b16 %v1020
        %v1169 = vunpack.c.l.b16 %v1021
        %v1170 = vunpack.c.l.b16 %v1022
        %v1171 = vunpack.c.l.b16 %v1023
        %v1172 = vunpack.c.l.b16 %v1024
        %v1173 = vunpack.c.l.b16 %v1025
        %v1174 = vunpack.c.l.b16 %v1026
        %v1175 = vunpack.c.l.b16 %v1027
        %v1176 = vunpack.c.l.b16 %v1028
        %v1177 = vunpack.c.l.b16 %v1029
        %v1178 = vunpack.c.l.b16 %v1030
        %v1179 = vunpack.c.l.b16 %v1031
        %v1180 = vunpack.c.l.b16 %v1032
        %v1181 = vunpack.c.l.b16 %v1033
        %v1182 = vunpack.c.l.b16 %v1034
        %v1183 = vunpack.c.l.b16 %v1035
        %v1184 = vunpack.c.l.b16 %v1036
        %v1185 = vunpack.c.l.b16 %v1037
        %v1186 = vunpack.c.l.b16 %v1038
        %v1187 = vunpack.c.l.b16 %v1039
        %v1188 = vunpack.c.l.b16 %v1040
        %v1189 = vunpack.c.l.b16 %v1041
        %v1190 = vunpack.c.l.b16 %v1042
        %v1191 = vunpack.c.l.b16 %v1043
        %v1192 = vunpack.c.l.b16 %v1044
        %v1193 = vunpack.c.l.b16 %v1045
        %v1194 = vunpack.c.l.b16 %v1046
        %v1195 = vunpack.c.l.b16 %v1047
        %v1196 = vunpack.c.l.b16 %v1048
        %v1197 = vunpack.c.l.b16 %v1049
        %v1198 = vunpack.c.l.b16 %v1050
        %v1199 = vunpack.c.l.b16 %v1051
        %v1200 = vunpack.c.l.b16 %v1052
        %v1201 = vunpack.c.l.b16 %v1053
        %v1202 = vunpack.c.l.b16 %v1054
        %v1203 = vunpack.c.l.b16 %v1055
        %v1204 = vunpack.c.l.b16 %v1056
        %v1205 = vunpack.c.l.b16 %v1057
        %v1206 = vunpack.c.l.b16 %v1058
        %v1207 = vunpack.c.l.b16 %v1059
        %v1208 = vunpack.c.l.b16 %v1060
        %v1209 = vunpack.c.l.b16 %v1061
        %v1210 = vunpack.c.l.b16 %v1062
        %v1211 = vunpack.c.l.b16 %v1063
        %v1212 = vunpack.c.l.b16 %v1064
        %v1213 = vunpack.c.l.b16 %v1065
        %v1214 = vunpack.c.l.b16 %v1066
        %v1215 = vunpack.c.l.b16 %v1067
        %v1216 = vunpack.c.l.b16 %v1068
        %v1217 = vunpack.c.l.b16 %v1069
        %v1218 = vunpack.c.l.b16 %v1070
        %v1219 = vunpack.c.l.b16 %v1071
        %v1220 = vunpack.c.l.b16 %v1072
        %v1221 = vunpack.c.l.b16 %v1073
        %v1222 = vunpack.c.l.b16 %v1074
        %v1223 = vunpack.c.l.b16 %v1075
        %v1224 = vunpack.c.l.b16 %v1076
        %v1225 = vunpack.c.l.b16 %v1077
        %v1226 = vunpack.c.l.b16 %v1078
        %v1227 = vunpack.c.l.b16 %v1079
        %v1228 = vunpack.c.l.b16 %v1080
        %v1229 = vunpack.c.l.b16 %v1081
        %v1230 = vpack.c.b16 %v1167, %v1166
        %v1231 = vpack.c.b16 %v1169, %v1168
        %v1232 = vpack.c.b16 %v1171, %v1170
        %v1233 = vpack.c.b16 %v1173, %v1172
        %v1234 = vpack.c.b16 %v1175, %v1174
        %v1235 = vpack.c.b16 %v1177, %v1176
        %v1236 = vpack.c.b16 %v1179, %v1178
        %v1237 = vpack.c.b16 %v1181, %v1180
        %v1238 = vpack.c.b16 %v1183, %v1182
        %v1239 = vpack.c.b16 %v1185, %v1184
        %v1240 = vpack.c.b16 %v1187, %v1186
        %v1241 = vpack.c.b16 %v1189, %v1188
        %v1242 = vpack.c.b16 %v1191, %v1190
        %v1243 = vpack.c.b16 %v1193, %v1192
        %v1244 = vpack.c.b16 %v1195, %v1194
        %v1245 = vpack.c.b16 %v1197, %v1196
        %v1246 = vpack.c.b16 %v1199, %v1198
        %v1247 = vpack.c.b16 %v1201, %v1200
        %v1248 = vpack.c.b16 %v1203, %v1202
        %v1249 = vpack.c.b16 %v1205, %v1204
        %v1250 = vpack.c.b16 %v1207, %v1206
        %v1251 = vpack.c.b16 %v1209, %v1208
        %v1252 = vpack.c.b16 %v1211, %v1210
        %v1253 = vpack.c.b16 %v1213, %v1212
        %v1254 = vpack.c.b16 %v1215, %v1214
        %v1255 = vpack.c.b16 %v1217, %v1216
        %v1256 = vpack.c.b16 %v1219, %v1218
        %v1257 = vpack.c.b16 %v1221, %v1220
        %v1258 = vpack.c.b16 %v1223, %v1222
        %v1259 = vpack.c.b16 %v1225, %v1224
        %v1260 = vpack.c.b16 %v1227, %v1226
        %v1261 = vpack.c.b16 %v1229, %v1228
        %v1310 = vunpack.c.l.b16 %v1082
        %v1311 = vunpack.c.l.b16 %v1083
        %v1312 = vunpack.c.l.b16 %v1084
        %v1313 = vunpack.c.l.b16 %v1085
        %v1314 = vunpack.c.l.b16 %v1086
        %v1315 = vunpack.c.l.b16 %v1087
        %v1316 = vunpack.c.l.b16 %v1088
        %v1317 = vunpack.c.l.b16 %v1089
        %v1318 = vunpack.c.l.b16 %v1090
        %v1319 = vunpack.c.l.b16 %v1091
        %v1320 = vunpack.c.l.b16 %v1092
        %v1321 = vunpack.c.l.b16 %v1093
        %v1322 = vunpack.c.l.b16 %v1094
        %v1323 = vunpack.c.l.b16 %v1095
        %v1324 = vunpack.c.l.b16 %v1096
        %v1325 = vunpack.c.l.b16 %v1097
        %v1326 = vpack.c.b16 %v1311, %v1310
        %v1327 = vpack.c.b16 %v1313, %v1312
        %v1328 = vpack.c.b16 %v1315, %v1314
        %v1329 = vpack.c.b16 %v1317, %v1316
        %v1330 = vpack.c.b16 %v1319, %v1318
        %v1331 = vpack.c.b16 %v1321, %v1320
        %v1332 = vpack.c.b16 %v1323, %v1322
        %v1333 = vpack.c.b16 %v1325, %v1324
        %1342 = vmatpush.bf16.msra.mxu0 %v1333
        %1343 = vmatpush.bf16.msra.mxu0 %v1332
        %1344 = vmatpush.bf16.msra.mxu0 %v1331
        %1345 = vmatpush.bf16.msra.mxu0 %v1330
        %1346 = vmatpush.bf16.msra.mxu0 %v1329
        %1347 = vmatpush.bf16.msra.mxu0 %v1328
        %1348 = vmatpush.bf16.msra.mxu0 %v1327
        %1349 = vmatpush.bf16.msra.mxu0 %v1326
        %1350 = vmatmul.bf16.gmra.mxu0 %v1230
        %v1351 = vpop.f32.mrf.mxu0
        %v1352 = vadd.f32 %v1100, %v1351
        %v1353 = vpop.f32.mrf.mxu0
        %v1354 = vadd.f32 %v1100, %v1353
        %1355 = vmatmul.bf16.gmra.mxu0 %v1231
        %v1356 = vpop.f32.mrf.mxu0
        %v1357 = vadd.f32 %v1100, %v1356
        %v1358 = vpop.f32.mrf.mxu0
        %v1359 = vadd.f32 %v1100, %v1358
        %1360 = vmatmul.bf16.gmra.mxu0 %v1232
        %v1361 = vpop.f32.mrf.mxu0
        %v1362 = vadd.f32 %v1100, %v1361
        %v1363 = vpop.f32.mrf.mxu0
        %v1364 = vadd.f32 %v1100, %v1363
        %1365 = vmatmul.bf16.gmra.mxu0 %v1233
        %v1366 = vpop.f32.mrf.mxu0
        %v1367 = vadd.f32 %v1100, %v1366
        %v1368 = vpop.f32.mrf.mxu0
        %v1369 = vadd.f32 %v1100, %v1368
        %1370 = vmatmul.bf16.gmra.mxu0 %v1234
        %v1371 = vpop.f32.mrf.mxu0
        %v1372 = vadd.f32 %v1100, %v1371
        %v1373 = vpop.f32.mrf.mxu0
        %v1374 = vadd.f32 %v1100, %v1373
        %1375 = vmatmul.bf16.gmra.mxu0 %v1235
        %v1376 = vpop.f32.mrf.mxu0
        %v1377 = vadd.f32 %v1100, %v1376
        %v1378 = vpop.f32.mrf.mxu0
        %v1379 = vadd.f32 %v1100, %v1378
        %1380 = vmatmul.bf16.gmra.mxu0 %v1236
        %v1381 = vpop.f32.mrf.mxu0
        %v1382 = vadd.f32 %v1100, %v1381
        %v1383 = vpop.f32.mrf.mxu0
        %v1384 = vadd.f32 %v1100, %v1383
        %1385 = vmatmul.bf16.gmra.mxu0 %v1237
        %v1386 = vpop.f32.mrf.mxu0
        %v1387 = vadd.f32 %v1100, %v1386
        %v1388 = vpop.f32.mrf.mxu0
        %v1389 = vadd.f32 %v1100, %v1388
        %1390 = vmatmul.bf16.gmra.mxu0 %v1238
        %v1391 = vpop.f32.mrf.mxu0
        %v1392 = vadd.f32 %v1100, %v1391
        %v1393 = vpop.f32.mrf.mxu0
        %v1394 = vadd.f32 %v1100, %v1393
        %1395 = vmatmul.bf16.gmra.mxu0 %v1239
        %v1396 = vpop.f32.mrf.mxu0
        %v1397 = vadd.f32 %v1100, %v1396
        %v1398 = vpop.f32.mrf.mxu0
        %v1399 = vadd.f32 %v1100, %v1398
        %1400 = vmatmul.bf16.gmra.mxu0 %v1240
        %v1401 = vpop.f32.mrf.mxu0
        %v1402 = vadd.f32 %v1100, %v1401
        %v1403 = vpop.f32.mrf.mxu0
        %v1404 = vadd.f32 %v1100, %v1403
        %1405 = vmatmul.bf16.gmra.mxu0 %v1241
        %v1406 = vpop.f32.mrf.mxu0
        %v1407 = vadd.f32 %v1100, %v1406
        %v1408 = vpop.f32.mrf.mxu0
        %v1409 = vadd.f32 %v1100, %v1408
        %1410 = vmatmul.bf16.gmra.mxu0 %v1242
        %v1411 = vpop.f32.mrf.mxu0
        %v1412 = vadd.f32 %v1100, %v1411
        %v1413 = vpop.f32.mrf.mxu0
        %v1414 = vadd.f32 %v1100, %v1413
        %1415 = vmatmul.bf16.gmra.mxu0 %v1243
        %v1416 = vpop.f32.mrf.mxu0
        %v1417 = vadd.f32 %v1100, %v1416
        %v1418 = vpop.f32.mrf.mxu0
        %v1419 = vadd.f32 %v1100, %v1418
        %1420 = vmatmul.bf16.gmra.mxu0 %v1244
        %v1421 = vpop.f32.mrf.mxu0
        %v1422 = vadd.f32 %v1100, %v1421
        %v1423 = vpop.f32.mrf.mxu0
        %v1424 = vadd.f32 %v1100, %v1423
        %1425 = vmatmul.bf16.gmra.mxu0 %v1245
        %v1426 = vpop.f32.mrf.mxu0
        %v1427 = vadd.f32 %v1100, %v1426
        %v1428 = vpop.f32.mrf.mxu0
        %v1429 = vadd.f32 %v1100, %v1428
        %1430 = vmatmul.bf16.gmra.mxu0 %v1246
        %v1431 = vpop.f32.mrf.mxu0
        %v1432 = vadd.f32 %v1100, %v1431
        %v1433 = vpop.f32.mrf.mxu0
        %v1434 = vadd.f32 %v1100, %v1433
        %1435 = vmatmul.bf16.gmra.mxu0 %v1247
        %v1436 = vpop.f32.mrf.mxu0
        %v1437 = vadd.f32 %v1100, %v1436
        %v1438 = vpop.f32.mrf.mxu0
        %v1439 = vadd.f32 %v1100, %v1438
        %1440 = vmatmul.bf16.gmra.mxu0 %v1248
        %v1441 = vpop.f32.mrf.mxu0
        %v1442 = vadd.f32 %v1100, %v1441
        %v1443 = vpop.f32.mrf.mxu0
        %v1444 = vadd.f32 %v1100, %v1443
        %1445 = vmatmul.bf16.gmra.mxu0 %v1249
        %v1446 = vpop.f32.mrf.mxu0
        %v1447 = vadd.f32 %v1100, %v1446
        %v1448 = vpop.f32.mrf.mxu0
        %v1449 = vadd.f32 %v1100, %v1448
        %1450 = vmatmul.bf16.gmra.mxu0 %v1250
        %v1451 = vpop.f32.mrf.mxu0
        %v1452 = vadd.f32 %v1100, %v1451
        %v1453 = vpop.f32.mrf.mxu0
        %v1454 = vadd.f32 %v1100, %v1453
        %1455 = vmatmul.bf16.gmra.mxu0 %v1251
        %v1456 = vpop.f32.mrf.mxu0
        %v1457 = vadd.f32 %v1100, %v1456
        %v1458 = vpop.f32.mrf.mxu0
        %v1459 = vadd.f32 %v1100, %v1458
        %1460 = vmatmul.bf16.gmra.mxu0 %v1252
        %v1461 = vpop.f32.mrf.mxu0
        %v1462 = vadd.f32 %v1100, %v1461
        %v1463 = vpop.f32.mrf.mxu0
        %v1464 = vadd.f32 %v1100, %v1463
        %1465 = vmatmul.bf16.gmra.mxu0 %v1253
        %v1466 = vpop.f32.mrf.mxu0
        %v1467 = vadd.f32 %v1100, %v1466
        %v1468 = vpop.f32.mrf.mxu0
        %v1469 = vadd.f32 %v1100, %v1468
        %1470 = vmatmul.bf16.gmra.mxu0 %v1254
        %v1471 = vpop.f32.mrf.mxu0
        %v1472 = vadd.f32 %v1100, %v1471
        %v1473 = vpop.f32.mrf.mxu0
        %v1474 = vadd.f32 %v1100, %v1473
        %1475 = vmatmul.bf16.gmra.mxu0 %v1255
        %v1476 = vpop.f32.mrf.mxu0
        %v1477 = vadd.f32 %v1100, %v1476
        %v1478 = vpop.f32.mrf.mxu0
        %v1479 = vadd.f32 %v1100, %v1478
        %1480 = vmatmul.bf16.gmra.mxu0 %v1256
        %v1481 = vpop.f32.mrf.mxu0
        %v1482 = vadd.f32 %v1100, %v1481
        %v1483 = vpop.f32.mrf.mxu0
        %v1484 = vadd.f32 %v1100, %v1483
        %1485 = vmatmul.bf16.gmra.mxu0 %v1257
        %v1486 = vpop.f32.mrf.mxu0
        %v1487 = vadd.f32 %v1100, %v1486
        %v1488 = vpop.f32.mrf.mxu0
        %v1489 = vadd.f32 %v1100, %v1488
        %1490 = vmatmul.bf16.gmra.mxu0 %v1258
        %v1491 = vpop.f32.mrf.mxu0
        %v1492 = vadd.f32 %v1100, %v1491
        %v1493 = vpop.f32.mrf.mxu0
        %v1494 = vadd.f32 %v1100, %v1493
        %1495 = vmatmul.bf16.gmra.mxu0 %v1259
        %v1496 = vpop.f32.mrf.mxu0
        %v1497 = vadd.f32 %v1100, %v1496
        %v1498 = vpop.f32.mrf.mxu0
        %v1499 = vadd.f32 %v1100, %v1498
        %1500 = vmatmul.bf16.gmra.mxu0 %v1260
        %v1501 = vpop.f32.mrf.mxu0
        %v1502 = vadd.f32 %v1100, %v1501
        %v1503 = vpop.f32.mrf.mxu0
        %v1504 = vadd.f32 %v1100, %v1503
        %1505 = vmatmul.bf16.gmra.mxu0 %v1261
        %v1506 = vpop.f32.mrf.mxu0
        %v1507 = vadd.f32 %v1100, %v1506
        %v1508 = vpop.f32.mrf.mxu0
        %v1509 = vadd.f32 %v1100, %v1508
        %1510 = vdwg.mxu0
        %v1511 = vmax.f32 %v1352, 0.0
        %v1512 = vmax.f32 %v1354, 0.0
        %v1513 = vmax.f32 %v1357, 0.0
        %v1514 = vmax.f32 %v1359, 0.0
        %v1515 = vmax.f32 %v1362, 0.0
        %v1516 = vmax.f32 %v1364, 0.0
        %v1517 = vmax.f32 %v1367, 0.0
        %v1518 = vmax.f32 %v1369, 0.0
        %v1519 = vmax.f32 %v1372, 0.0
        %v1520 = vmax.f32 %v1374, 0.0
        %v1521 = vmax.f32 %v1377, 0.0
        %v1522 = vmax.f32 %v1379, 0.0
        %v1523 = vmax.f32 %v1382, 0.0
        %v1524 = vmax.f32 %v1384, 0.0
        %v1525 = vmax.f32 %v1387, 0.0
        %v1526 = vmax.f32 %v1389, 0.0
        %v1527 = vmax.f32 %v1392, 0.0
        %v1528 = vmax.f32 %v1394, 0.0
        %v1529 = vmax.f32 %v1397, 0.0
        %v1530 = vmax.f32 %v1399, 0.0
        %v1531 = vmax.f32 %v1402, 0.0
        %v1532 = vmax.f32 %v1404, 0.0
        %v1533 = vmax.f32 %v1407, 0.0
        %v1534 = vmax.f32 %v1409, 0.0
        %v1535 = vmax.f32 %v1412, 0.0
        %v1536 = vmax.f32 %v1414, 0.0
        %v1537 = vmax.f32 %v1417, 0.0
        %v1538 = vmax.f32 %v1419, 0.0
        %v1539 = vmax.f32 %v1422, 0.0
        %v1540 = vmax.f32 %v1424, 0.0
        %v1541 = vmax.f32 %v1427, 0.0
        %v1542 = vmax.f32 %v1429, 0.0
        %v1543 = vmax.f32 %v1432, 0.0
        %v1544 = vmax.f32 %v1434, 0.0
        %v1545 = vmax.f32 %v1437, 0.0
        %v1546 = vmax.f32 %v1439, 0.0
        %v1547 = vmax.f32 %v1442, 0.0
        %v1548 = vmax.f32 %v1444, 0.0
        %v1549 = vmax.f32 %v1447, 0.0
        %v1550 = vmax.f32 %v1449, 0.0
        %v1551 = vmax.f32 %v1452, 0.0
        %v1552 = vmax.f32 %v1454, 0.0
        %v1553 = vmax.f32 %v1457, 0.0
        %v1554 = vmax.f32 %v1459, 0.0
        %v1555 = vmax.f32 %v1462, 0.0
        %v1556 = vmax.f32 %v1464, 0.0
        %v1557 = vmax.f32 %v1467, 0.0
        %v1558 = vmax.f32 %v1469, 0.0
        %v1559 = vmax.f32 %v1472, 0.0
        %v1560 = vmax.f32 %v1474, 0.0
        %v1561 = vmax.f32 %v1477, 0.0
        %v1562 = vmax.f32 %v1479, 0.0
        %v1563 = vmax.f32 %v1482, 0.0
        %v1564 = vmax.f32 %v1484, 0.0
        %v1565 = vmax.f32 %v1487, 0.0
        %v1566 = vmax.f32 %v1489, 0.0
        %v1567 = vmax.f32 %v1492, 0.0
        %v1568 = vmax.f32 %v1494, 0.0
        %v1569 = vmax.f32 %v1497, 0.0
        %v1570 = vmax.f32 %v1499, 0.0
        %v1571 = vmax.f32 %v1502, 0.0
        %v1572 = vmax.f32 %v1504, 0.0
        %v1573 = vmax.f32 %v1507, 0.0
        %v1574 = vmax.f32 %v1509, 0.0
        %v1575 = vld [vmem:[#allocation7] sm:$0xf]
        %v1576 = vld [vmem:[#allocation7 + $0x4] sm:$0xf]
        %v1577 = vld [vmem:[#allocation7 + $0x8] sm:$0xf]
        %v1578 = vld [vmem:[#allocation7 + $0xc] sm:$0xf]
        %v1579 = vld [vmem:[#allocation7 + $0x10] sm:$0xf]
        %v1580 = vld [vmem:[#allocation7 + $0x14] sm:$0xf]
        %v1581 = vld [vmem:[#allocation7 + $0x18] sm:$0xf]
        %v1582 = vld [vmem:[#allocation7 + $0x1c] sm:$0xf]
        %v1583 = vld [vmem:[#allocation7 + $0x20] sm:$0xf]
        %v1584 = vld [vmem:[#allocation7 + $0x24] sm:$0xf]
        %v1585 = vld [vmem:[#allocation7 + $0x28] sm:$0xf]
        %v1586 = vld [vmem:[#allocation7 + $0x2c] sm:$0xf]
        %v1587 = vld [vmem:[#allocation7 + $0x30] sm:$0xf]
        %v1588 = vld [vmem:[#allocation7 + $0x34] sm:$0xf]
        %v1589 = vld [vmem:[#allocation7 + $0x38] sm:$0xf]
        %v1590 = vld [vmem:[#allocation7 + $0x3c] sm:$0xf]
        %v1591 = vld [vmem:[#allocation9] sm:$0x1]
        %v1592 = vpack.c.bf16 %v1512, %v1511
        %v1593 = vpack.c.bf16 %v1514, %v1513
        %v1594 = vpack.c.bf16 %v1516, %v1515
        %v1595 = vpack.c.bf16 %v1518, %v1517
        %v1596 = vpack.c.bf16 %v1520, %v1519
        %v1597 = vpack.c.bf16 %v1522, %v1521
        %v1598 = vpack.c.bf16 %v1524, %v1523
        %v1599 = vpack.c.bf16 %v1526, %v1525
        %v1600 = vpack.c.bf16 %v1528, %v1527
        %v1601 = vpack.c.bf16 %v1530, %v1529
        %v1602 = vpack.c.bf16 %v1532, %v1531
        %v1603 = vpack.c.bf16 %v1534, %v1533
        %v1604 = vpack.c.bf16 %v1536, %v1535
        %v1605 = vpack.c.bf16 %v1538, %v1537
        %v1606 = vpack.c.bf16 %v1540, %v1539
        %v1607 = vpack.c.bf16 %v1542, %v1541
        %v1608 = vpack.c.bf16 %v1544, %v1543
        %v1609 = vpack.c.bf16 %v1546, %v1545
        %v1610 = vpack.c.bf16 %v1548, %v1547
        %v1611 = vpack.c.bf16 %v1550, %v1549
        %v1612 = vpack.c.bf16 %v1552, %v1551
        %v1613 = vpack.c.bf16 %v1554, %v1553
        %v1614 = vpack.c.bf16 %v1556, %v1555
        %v1615 = vpack.c.bf16 %v1558, %v1557
        %v1616 = vpack.c.bf16 %v1560, %v1559
        %v1617 = vpack.c.bf16 %v1562, %v1561
        %v1618 = vpack.c.bf16 %v1564, %v1563
        %v1619 = vpack.c.bf16 %v1566, %v1565
        %v1620 = vpack.c.bf16 %v1568, %v1567
        %v1621 = vpack.c.bf16 %v1570, %v1569
        %v1622 = vpack.c.bf16 %v1572, %v1571
        %v1623 = vpack.c.bf16 %v1574, %v1573
        %v1625 = vperm.slane %v1591, 0
        %v1643 = vunpack.c.l.b16 %v1575
        %v1644 = vunpack.c.l.b16 %v1576
        %v1645 = vunpack.c.l.b16 %v1577
        %v1646 = vunpack.c.l.b16 %v1578
        %v1647 = vunpack.c.l.b16 %v1579
        %v1648 = vunpack.c.l.b16 %v1580
        %v1649 = vunpack.c.l.b16 %v1581
        %v1650 = vunpack.c.l.b16 %v1582
        %v1651 = vunpack.c.l.b16 %v1583
        %v1652 = vunpack.c.l.b16 %v1584
        %v1653 = vunpack.c.l.b16 %v1585
        %v1654 = vunpack.c.l.b16 %v1586
        %v1655 = vunpack.c.l.b16 %v1587
        %v1656 = vunpack.c.l.b16 %v1588
        %v1657 = vunpack.c.l.b16 %v1589
        %v1658 = vunpack.c.l.b16 %v1590
        %v1659 = vpack.c.b16 %v1644, %v1643
        %v1660 = vpack.c.b16 %v1646, %v1645
        %v1661 = vpack.c.b16 %v1648, %v1647
        %v1662 = vpack.c.b16 %v1650, %v1649
        %v1663 = vpack.c.b16 %v1652, %v1651
        %v1664 = vpack.c.b16 %v1654, %v1653
        %v1665 = vpack.c.b16 %v1656, %v1655
        %v1666 = vpack.c.b16 %v1658, %v1657
        %1675 = vmatpush.bf16.msra.mxu0 %v1666
        %1676 = vmatpush.bf16.msra.mxu0 %v1665
        %1677 = vmatpush.bf16.msra.mxu0 %v1664
        %1678 = vmatpush.bf16.msra.mxu0 %v1663
        %1679 = vmatpush.bf16.msra.mxu0 %v1662
        %1680 = vmatpush.bf16.msra.mxu0 %v1661
        %1681 = vmatpush.bf16.msra.mxu0 %v1660
        %1682 = vmatpush.bf16.msra.mxu0 %v1659
        %1683 = vmatmul.bf16.gmra.mxu0 %v1592
        %v1684 = vpop.f32.mrf.mxu0
        %v1685 = vadd.f32 %v1625, %v1684
        %v1686 = vpop.f32.mrf.mxu0
        %v1687 = vadd.f32 %v1625, %v1686
        %1688 = vmatmul.bf16.gmra.mxu0 %v1593
        %v1689 = vpop.f32.mrf.mxu0
        %v1690 = vadd.f32 %v1625, %v1689
        %v1691 = vpop.f32.mrf.mxu0
        %v1692 = vadd.f32 %v1625, %v1691
        %1693 = vmatmul.bf16.gmra.mxu0 %v1594
        %v1694 = vpop.f32.mrf.mxu0
        %v1695 = vadd.f32 %v1625, %v1694
        %v1696 = vpop.f32.mrf.mxu0
        %v1697 = vadd.f32 %v1625, %v1696
        %1698 = vmatmul.bf16.gmra.mxu0 %v1595
        %v1699 = vpop.f32.mrf.mxu0
        %v1700 = vadd.f32 %v1625, %v1699
        %v1701 = vpop.f32.mrf.mxu0
        %v1702 = vadd.f32 %v1625, %v1701
        %1703 = vmatmul.bf16.gmra.mxu0 %v1596
        %v1704 = vpop.f32.mrf.mxu0
        %v1705 = vadd.f32 %v1625, %v1704
        %v1706 = vpop.f32.mrf.mxu0
        %v1707 = vadd.f32 %v1625, %v1706
        %1708 = vmatmul.bf16.gmra.mxu0 %v1597
        %v1709 = vpop.f32.mrf.mxu0
        %v1710 = vadd.f32 %v1625, %v1709
        %v1711 = vpop.f32.mrf.mxu0
        %v1712 = vadd.f32 %v1625, %v1711
        %1713 = vmatmul.bf16.gmra.mxu0 %v1598
        %v1714 = vpop.f32.mrf.mxu0
        %v1715 = vadd.f32 %v1625, %v1714
        %v1716 = vpop.f32.mrf.mxu0
        %v1717 = vadd.f32 %v1625, %v1716
        %1718 = vmatmul.bf16.gmra.mxu0 %v1599
        %v1719 = vpop.f32.mrf.mxu0
        %v1720 = vadd.f32 %v1625, %v1719
        %v1721 = vpop.f32.mrf.mxu0
        %v1722 = vadd.f32 %v1625, %v1721
        %1723 = vmatmul.bf16.gmra.mxu0 %v1600
        %v1724 = vpop.f32.mrf.mxu0
        %v1725 = vadd.f32 %v1625, %v1724
        %v1726 = vpop.f32.mrf.mxu0
        %v1727 = vadd.f32 %v1625, %v1726
        %1728 = vmatmul.bf16.gmra.mxu0 %v1601
        %v1729 = vpop.f32.mrf.mxu0
        %v1730 = vadd.f32 %v1625, %v1729
        %v1731 = vpop.f32.mrf.mxu0
        %v1732 = vadd.f32 %v1625, %v1731
        %1733 = vmatmul.bf16.gmra.mxu0 %v1602
        %v1734 = vpop.f32.mrf.mxu0
        %v1735 = vadd.f32 %v1625, %v1734
        %v1736 = vpop.f32.mrf.mxu0
        %v1737 = vadd.f32 %v1625, %v1736
        %1738 = vmatmul.bf16.gmra.mxu0 %v1603
        %v1739 = vpop.f32.mrf.mxu0
        %v1740 = vadd.f32 %v1625, %v1739
        %v1741 = vpop.f32.mrf.mxu0
        %v1742 = vadd.f32 %v1625, %v1741
        %1743 = vmatmul.bf16.gmra.mxu0 %v1604
        %v1744 = vpop.f32.mrf.mxu0
        %v1745 = vadd.f32 %v1625, %v1744
        %v1746 = vpop.f32.mrf.mxu0
        %v1747 = vadd.f32 %v1625, %v1746
        %1748 = vmatmul.bf16.gmra.mxu0 %v1605
        %v1749 = vpop.f32.mrf.mxu0
        %v1750 = vadd.f32 %v1625, %v1749
        %v1751 = vpop.f32.mrf.mxu0
        %v1752 = vadd.f32 %v1625, %v1751
        %1753 = vmatmul.bf16.gmra.mxu0 %v1606
        %v1754 = vpop.f32.mrf.mxu0
        %v1755 = vadd.f32 %v1625, %v1754
        %v1756 = vpop.f32.mrf.mxu0
        %v1757 = vadd.f32 %v1625, %v1756
        %1758 = vmatmul.bf16.gmra.mxu0 %v1607
        %v1759 = vpop.f32.mrf.mxu0
        %v1760 = vadd.f32 %v1625, %v1759
        %v1761 = vpop.f32.mrf.mxu0
        %v1762 = vadd.f32 %v1625, %v1761
        %1763 = vmatmul.bf16.gmra.mxu0 %v1608
        %v1764 = vpop.f32.mrf.mxu0
        %v1765 = vadd.f32 %v1625, %v1764
        %v1766 = vpop.f32.mrf.mxu0
        %v1767 = vadd.f32 %v1625, %v1766
        %1768 = vmatmul.bf16.gmra.mxu0 %v1609
        %v1769 = vpop.f32.mrf.mxu0
        %v1770 = vadd.f32 %v1625, %v1769
        %v1771 = vpop.f32.mrf.mxu0
        %v1772 = vadd.f32 %v1625, %v1771
        %1773 = vmatmul.bf16.gmra.mxu0 %v1610
        %v1774 = vpop.f32.mrf.mxu0
        %v1775 = vadd.f32 %v1625, %v1774
        %v1776 = vpop.f32.mrf.mxu0
        %v1777 = vadd.f32 %v1625, %v1776
        %1778 = vmatmul.bf16.gmra.mxu0 %v1611
        %v1779 = vpop.f32.mrf.mxu0
        %v1780 = vadd.f32 %v1625, %v1779
        %v1781 = vpop.f32.mrf.mxu0
        %v1782 = vadd.f32 %v1625, %v1781
        %1783 = vmatmul.bf16.gmra.mxu0 %v1612
        %v1784 = vpop.f32.mrf.mxu0
        %v1785 = vadd.f32 %v1625, %v1784
        %v1786 = vpop.f32.mrf.mxu0
        %v1787 = vadd.f32 %v1625, %v1786
        %1788 = vmatmul.bf16.gmra.mxu0 %v1613
        %v1789 = vpop.f32.mrf.mxu0
        %v1790 = vadd.f32 %v1625, %v1789
        %v1791 = vpop.f32.mrf.mxu0
        %v1792 = vadd.f32 %v1625, %v1791
        %1793 = vmatmul.bf16.gmra.mxu0 %v1614
        %v1794 = vpop.f32.mrf.mxu0
        %v1795 = vadd.f32 %v1625, %v1794
        %v1796 = vpop.f32.mrf.mxu0
        %v1797 = vadd.f32 %v1625, %v1796
        %1798 = vmatmul.bf16.gmra.mxu0 %v1615
        %v1799 = vpop.f32.mrf.mxu0
        %v1800 = vadd.f32 %v1625, %v1799
        %v1801 = vpop.f32.mrf.mxu0
        %v1802 = vadd.f32 %v1625, %v1801
        %1803 = vmatmul.bf16.gmra.mxu0 %v1616
        %v1804 = vpop.f32.mrf.mxu0
        %v1805 = vadd.f32 %v1625, %v1804
        %v1806 = vpop.f32.mrf.mxu0
        %v1807 = vadd.f32 %v1625, %v1806
        %1808 = vmatmul.bf16.gmra.mxu0 %v1617
        %v1809 = vpop.f32.mrf.mxu0
        %v1810 = vadd.f32 %v1625, %v1809
        %v1811 = vpop.f32.mrf.mxu0
        %v1812 = vadd.f32 %v1625, %v1811
        %1813 = vmatmul.bf16.gmra.mxu0 %v1618
        %v1814 = vpop.f32.mrf.mxu0
        %v1815 = vadd.f32 %v1625, %v1814
        %v1816 = vpop.f32.mrf.mxu0
        %v1817 = vadd.f32 %v1625, %v1816
        %1818 = vmatmul.bf16.gmra.mxu0 %v1619
        %v1819 = vpop.f32.mrf.mxu0
        %v1820 = vadd.f32 %v1625, %v1819
        %v1821 = vpop.f32.mrf.mxu0
        %v1822 = vadd.f32 %v1625, %v1821
        %1823 = vmatmul.bf16.gmra.mxu0 %v1620
        %v1824 = vpop.f32.mrf.mxu0
        %v1825 = vadd.f32 %v1625, %v1824
        %v1826 = vpop.f32.mrf.mxu0
        %v1827 = vadd.f32 %v1625, %v1826
        %1828 = vmatmul.bf16.gmra.mxu0 %v1621
        %v1829 = vpop.f32.mrf.mxu0
        %v1830 = vadd.f32 %v1625, %v1829
        %v1831 = vpop.f32.mrf.mxu0
        %v1832 = vadd.f32 %v1625, %v1831
        %1833 = vmatmul.bf16.gmra.mxu0 %v1622
        %v1834 = vpop.f32.mrf.mxu0
        %v1835 = vadd.f32 %v1625, %v1834
        %v1836 = vpop.f32.mrf.mxu0
        %v1837 = vadd.f32 %v1625, %v1836
        %1838 = vmatmul.bf16.gmra.mxu0 %v1623
        %v1839 = vpop.f32.mrf.mxu0
        %v1840 = vadd.f32 %v1625, %v1839
        %v1841 = vpop.f32.mrf.mxu0
        %v1842 = vadd.f32 %v1625, %v1841
        %1843 = vdwg.mxu0
        %v1844 = vmax.f32 %v1685, 0.0
        %v1845 = vmax.f32 %v1687, 0.0
        %v1846 = vmax.f32 %v1690, 0.0
        %v1847 = vmax.f32 %v1692, 0.0
        %v1848 = vmax.f32 %v1695, 0.0
        %v1849 = vmax.f32 %v1697, 0.0
        %v1850 = vmax.f32 %v1700, 0.0
        %v1851 = vmax.f32 %v1702, 0.0
        %v1852 = vmax.f32 %v1705, 0.0
        %v1853 = vmax.f32 %v1707, 0.0
        %v1854 = vmax.f32 %v1710, 0.0
        %v1855 = vmax.f32 %v1712, 0.0
        %v1856 = vmax.f32 %v1715, 0.0
        %v1857 = vmax.f32 %v1717, 0.0
        %v1858 = vmax.f32 %v1720, 0.0
        %v1859 = vmax.f32 %v1722, 0.0
        %v1860 = vmax.f32 %v1725, 0.0
        %v1861 = vmax.f32 %v1727, 0.0
        %v1862 = vmax.f32 %v1730, 0.0
        %v1863 = vmax.f32 %v1732, 0.0
        %v1864 = vmax.f32 %v1735, 0.0
        %v1865 = vmax.f32 %v1737, 0.0
        %v1866 = vmax.f32 %v1740, 0.0
        %v1867 = vmax.f32 %v1742, 0.0
        %v1868 = vmax.f32 %v1745, 0.0
        %v1869 = vmax.f32 %v1747, 0.0
        %v1870 = vmax.f32 %v1750, 0.0
        %v1871 = vmax.f32 %v1752, 0.0
        %v1872 = vmax.f32 %v1755, 0.0
        %v1873 = vmax.f32 %v1757, 0.0
        %v1874 = vmax.f32 %v1760, 0.0
        %v1875 = vmax.f32 %v1762, 0.0
        %v1876 = vmax.f32 %v1765, 0.0
        %v1877 = vmax.f32 %v1767, 0.0
        %v1878 = vmax.f32 %v1770, 0.0
        %v1879 = vmax.f32 %v1772, 0.0
        %v1880 = vmax.f32 %v1775, 0.0
        %v1881 = vmax.f32 %v1777, 0.0
        %v1882 = vmax.f32 %v1780, 0.0
        %v1883 = vmax.f32 %v1782, 0.0
        %v1884 = vmax.f32 %v1785, 0.0
        %v1885 = vmax.f32 %v1787, 0.0
        %v1886 = vmax.f32 %v1790, 0.0
        %v1887 = vmax.f32 %v1792, 0.0
        %v1888 = vmax.f32 %v1795, 0.0
        %v1889 = vmax.f32 %v1797, 0.0
        %v1890 = vmax.f32 %v1800, 0.0
        %v1891 = vmax.f32 %v1802, 0.0
        %v1892 = vmax.f32 %v1805, 0.0
        %v1893 = vmax.f32 %v1807, 0.0
        %v1894 = vmax.f32 %v1810, 0.0
        %v1895 = vmax.f32 %v1812, 0.0
        %v1896 = vmax.f32 %v1815, 0.0
        %v1897 = vmax.f32 %v1817, 0.0
        %v1898 = vmax.f32 %v1820, 0.0
        %v1899 = vmax.f32 %v1822, 0.0
        %v1900 = vmax.f32 %v1825, 0.0
        %v1901 = vmax.f32 %v1827, 0.0
        %v1902 = vmax.f32 %v1830, 0.0
        %v1903 = vmax.f32 %v1832, 0.0
        %v1904 = vmax.f32 %v1835, 0.0
        %v1905 = vmax.f32 %v1837, 0.0
        %v1906 = vmax.f32 %v1840, 0.0
        %v1907 = vmax.f32 %v1842, 0.0
        %v1908 = vld [vmem:[#allocation10] sm:$0xf]
        %v1909 = vld [vmem:[#allocation10 + $0x4] sm:$0xf]
        %v1910 = vld [vmem:[#allocation10 + $0x8] sm:$0xf]
        %v1911 = vld [vmem:[#allocation10 + $0xc] sm:$0xf]
        %v1912 = vld [vmem:[#allocation10 + $0x10] sm:$0xf]
        %v1913 = vld [vmem:[#allocation10 + $0x14] sm:$0xf]
        %v1914 = vld [vmem:[#allocation10 + $0x18] sm:$0xf]
        %v1915 = vld [vmem:[#allocation10 + $0x1c] sm:$0xf]
        %v1916 = vld [vmem:[#allocation10 + $0x20] sm:$0xf]
        %v1917 = vld [vmem:[#allocation10 + $0x24] sm:$0xf]
        %v1918 = vld [vmem:[#allocation10 + $0x28] sm:$0xf]
        %v1919 = vld [vmem:[#allocation10 + $0x2c] sm:$0xf]
        %v1920 = vld [vmem:[#allocation10 + $0x30] sm:$0xf]
        %v1921 = vld [vmem:[#allocation10 + $0x34] sm:$0xf]
        %v1922 = vld [vmem:[#allocation10 + $0x38] sm:$0xf]
        %v1923 = vld [vmem:[#allocation10 + $0x3c] sm:$0xf]
        %v1924 = vld [vmem:[#allocation12] sm:$0x1]
        %v1925 = vpack.c.bf16 %v1845, %v1844
        %v1926 = vpack.c.bf16 %v1847, %v1846
        %v1927 = vpack.c.bf16 %v1849, %v1848
        %v1928 = vpack.c.bf16 %v1851, %v1850
        %v1929 = vpack.c.bf16 %v1853, %v1852
        %v1930 = vpack.c.bf16 %v1855, %v1854
        %v1931 = vpack.c.bf16 %v1857, %v1856
        %v1932 = vpack.c.bf16 %v1859, %v1858
        %v1933 = vpack.c.bf16 %v1861, %v1860
        %v1934 = vpack.c.bf16 %v1863, %v1862
        %v1935 = vpack.c.bf16 %v1865, %v1864
        %v1936 = vpack.c.bf16 %v1867, %v1866
        %v1937 = vpack.c.bf16 %v1869, %v1868
        %v1938 = vpack.c.bf16 %v1871, %v1870
        %v1939 = vpack.c.bf16 %v1873, %v1872
        %v1940 = vpack.c.bf16 %v1875, %v1874
        %v1941 = vpack.c.bf16 %v1877, %v1876
        %v1942 = vpack.c.bf16 %v1879, %v1878
        %v1943 = vpack.c.bf16 %v1881, %v1880
        %v1944 = vpack.c.bf16 %v1883, %v1882
        %v1945 = vpack.c.bf16 %v1885, %v1884
        %v1946 = vpack.c.bf16 %v1887, %v1886
        %v1947 = vpack.c.bf16 %v1889, %v1888
        %v1948 = vpack.c.bf16 %v1891, %v1890
        %v1949 = vpack.c.bf16 %v1893, %v1892
        %v1950 = vpack.c.bf16 %v1895, %v1894
        %v1951 = vpack.c.bf16 %v1897, %v1896
        %v1952 = vpack.c.bf16 %v1899, %v1898
        %v1953 = vpack.c.bf16 %v1901, %v1900
        %v1954 = vpack.c.bf16 %v1903, %v1902
        %v1955 = vpack.c.bf16 %v1905, %v1904
        %v1956 = vpack.c.bf16 %v1907, %v1906
        %v1958 = vperm.slane %v1924, 0
        %v1976 = vunpack.c.l.b16 %v1908
        %v1977 = vunpack.c.l.b16 %v1909
        %v1978 = vunpack.c.l.b16 %v1910
        %v1979 = vunpack.c.l.b16 %v1911
        %v1980 = vunpack.c.l.b16 %v1912
        %v1981 = vunpack.c.l.b16 %v1913
        %v1982 = vunpack.c.l.b16 %v1914
        %v1983 = vunpack.c.l.b16 %v1915
        %v1984 = vunpack.c.l.b16 %v1916
        %v1985 = vunpack.c.l.b16 %v1917
        %v1986 = vunpack.c.l.b16 %v1918
        %v1987 = vunpack.c.l.b16 %v1919
        %v1988 = vunpack.c.l.b16 %v1920
        %v1989 = vunpack.c.l.b16 %v1921
        %v1990 = vunpack.c.l.b16 %v1922
        %v1991 = vunpack.c.l.b16 %v1923
        %v1992 = vpack.c.b16 %v1977, %v1976
        %v1993 = vpack.c.b16 %v1979, %v1978
        %v1994 = vpack.c.b16 %v1981, %v1980
        %v1995 = vpack.c.b16 %v1983, %v1982
        %v1996 = vpack.c.b16 %v1985, %v1984
        %v1997 = vpack.c.b16 %v1987, %v1986
        %v1998 = vpack.c.b16 %v1989, %v1988
        %v1999 = vpack.c.b16 %v1991, %v1990
        %2008 = vmatpush.bf16.msra.mxu0 %v1999
        %2009 = vmatpush.bf16.msra.mxu0 %v1998
        %2010 = vmatpush.bf16.msra.mxu0 %v1997
        %2011 = vmatpush.bf16.msra.mxu0 %v1996
        %2012 = vmatpush.bf16.msra.mxu0 %v1995
        %2013 = vmatpush.bf16.msra.mxu0 %v1994
        %2014 = vmatpush.bf16.msra.mxu0 %v1993
        %2015 = vmatpush.bf16.msra.mxu0 %v1992
        %2016 = vmatmul.bf16.gmra.mxu0 %v1925
        %v2017 = vpop.f32.mrf.mxu0
        %v2018 = vadd.f32 %v1958, %v2017
        %v2019 = vpop.f32.mrf.mxu0
        %v2020 = vadd.f32 %v1958, %v2019
        %2021 = vmatmul.bf16.gmra.mxu0 %v1926
        %v2022 = vpop.f32.mrf.mxu0
        %v2023 = vadd.f32 %v1958, %v2022
        %v2024 = vpop.f32.mrf.mxu0
        %v2025 = vadd.f32 %v1958, %v2024
        %2026 = vmatmul.bf16.gmra.mxu0 %v1927
        %v2027 = vpop.f32.mrf.mxu0
        %v2028 = vadd.f32 %v1958, %v2027
        %v2029 = vpop.f32.mrf.mxu0
        %v2030 = vadd.f32 %v1958, %v2029
        %2031 = vmatmul.bf16.gmra.mxu0 %v1928
        %v2032 = vpop.f32.mrf.mxu0
        %v2033 = vadd.f32 %v1958, %v2032
        %v2034 = vpop.f32.mrf.mxu0
        %v2035 = vadd.f32 %v1958, %v2034
        %2036 = vmatmul.bf16.gmra.mxu0 %v1929
        %v2037 = vpop.f32.mrf.mxu0
        %v2038 = vadd.f32 %v1958, %v2037
        %v2039 = vpop.f32.mrf.mxu0
        %v2040 = vadd.f32 %v1958, %v2039
        %2041 = vmatmul.bf16.gmra.mxu0 %v1930
        %v2042 = vpop.f32.mrf.mxu0
        %v2043 = vadd.f32 %v1958, %v2042
        %v2044 = vpop.f32.mrf.mxu0
        %v2045 = vadd.f32 %v1958, %v2044
        %2046 = vmatmul.bf16.gmra.mxu0 %v1931
        %v2047 = vpop.f32.mrf.mxu0
        %v2048 = vadd.f32 %v1958, %v2047
        %v2049 = vpop.f32.mrf.mxu0
        %v2050 = vadd.f32 %v1958, %v2049
        %2051 = vmatmul.bf16.gmra.mxu0 %v1932
        %v2052 = vpop.f32.mrf.mxu0
        %v2053 = vadd.f32 %v1958, %v2052
        %v2054 = vpop.f32.mrf.mxu0
        %v2055 = vadd.f32 %v1958, %v2054
        %2056 = vmatmul.bf16.gmra.mxu0 %v1933
        %v2057 = vpop.f32.mrf.mxu0
        %v2058 = vadd.f32 %v1958, %v2057
        %v2059 = vpop.f32.mrf.mxu0
        %v2060 = vadd.f32 %v1958, %v2059
        %2061 = vmatmul.bf16.gmra.mxu0 %v1934
        %v2062 = vpop.f32.mrf.mxu0
        %v2063 = vadd.f32 %v1958, %v2062
        %v2064 = vpop.f32.mrf.mxu0
        %v2065 = vadd.f32 %v1958, %v2064
        %2066 = vmatmul.bf16.gmra.mxu0 %v1935
        %v2067 = vpop.f32.mrf.mxu0
        %v2068 = vadd.f32 %v1958, %v2067
        %v2069 = vpop.f32.mrf.mxu0
        %v2070 = vadd.f32 %v1958, %v2069
        %2071 = vmatmul.bf16.gmra.mxu0 %v1936
        %v2072 = vpop.f32.mrf.mxu0
        %v2073 = vadd.f32 %v1958, %v2072
        %v2074 = vpop.f32.mrf.mxu0
        %v2075 = vadd.f32 %v1958, %v2074
        %2076 = vmatmul.bf16.gmra.mxu0 %v1937
        %v2077 = vpop.f32.mrf.mxu0
        %v2078 = vadd.f32 %v1958, %v2077
        %v2079 = vpop.f32.mrf.mxu0
        %v2080 = vadd.f32 %v1958, %v2079
        %2081 = vmatmul.bf16.gmra.mxu0 %v1938
        %v2082 = vpop.f32.mrf.mxu0
        %v2083 = vadd.f32 %v1958, %v2082
        %v2084 = vpop.f32.mrf.mxu0
        %v2085 = vadd.f32 %v1958, %v2084
        %2086 = vmatmul.bf16.gmra.mxu0 %v1939
        %v2087 = vpop.f32.mrf.mxu0
        %v2088 = vadd.f32 %v1958, %v2087
        %v2089 = vpop.f32.mrf.mxu0
        %v2090 = vadd.f32 %v1958, %v2089
        %2091 = vmatmul.bf16.gmra.mxu0 %v1940
        %v2092 = vpop.f32.mrf.mxu0
        %v2093 = vadd.f32 %v1958, %v2092
        %v2094 = vpop.f32.mrf.mxu0
        %v2095 = vadd.f32 %v1958, %v2094
        %2096 = vmatmul.bf16.gmra.mxu0 %v1941
        %v2097 = vpop.f32.mrf.mxu0
        %v2098 = vadd.f32 %v1958, %v2097
        %v2099 = vpop.f32.mrf.mxu0
        %v2100 = vadd.f32 %v1958, %v2099
        %2101 = vmatmul.bf16.gmra.mxu0 %v1942
        %v2102 = vpop.f32.mrf.mxu0
        %v2103 = vadd.f32 %v1958, %v2102
        %v2104 = vpop.f32.mrf.mxu0
        %v2105 = vadd.f32 %v1958, %v2104
        %2106 = vmatmul.bf16.gmra.mxu0 %v1943
        %v2107 = vpop.f32.mrf.mxu0
        %v2108 = vadd.f32 %v1958, %v2107
        %v2109 = vpop.f32.mrf.mxu0
        %v2110 = vadd.f32 %v1958, %v2109
        %2111 = vmatmul.bf16.gmra.mxu0 %v1944
        %v2112 = vpop.f32.mrf.mxu0
        %v2113 = vadd.f32 %v1958, %v2112
        %v2114 = vpop.f32.mrf.mxu0
        %v2115 = vadd.f32 %v1958, %v2114
        %2116 = vmatmul.bf16.gmra.mxu0 %v1945
        %v2117 = vpop.f32.mrf.mxu0
        %v2118 = vadd.f32 %v1958, %v2117
        %v2119 = vpop.f32.mrf.mxu0
        %v2120 = vadd.f32 %v1958, %v2119
        %2121 = vmatmul.bf16.gmra.mxu0 %v1946
        %v2122 = vpop.f32.mrf.mxu0
        %v2123 = vadd.f32 %v1958, %v2122
        %v2124 = vpop.f32.mrf.mxu0
        %v2125 = vadd.f32 %v1958, %v2124
        %2126 = vmatmul.bf16.gmra.mxu0 %v1947
        %v2127 = vpop.f32.mrf.mxu0
        %v2128 = vadd.f32 %v1958, %v2127
        %v2129 = vpop.f32.mrf.mxu0
        %v2130 = vadd.f32 %v1958, %v2129
        %2131 = vmatmul.bf16.gmra.mxu0 %v1948
        %v2132 = vpop.f32.mrf.mxu0
        %v2133 = vadd.f32 %v1958, %v2132
        %v2134 = vpop.f32.mrf.mxu0
        %v2135 = vadd.f32 %v1958, %v2134
        %2136 = vmatmul.bf16.gmra.mxu0 %v1949
        %v2137 = vpop.f32.mrf.mxu0
        %v2138 = vadd.f32 %v1958, %v2137
        %v2139 = vpop.f32.mrf.mxu0
        %v2140 = vadd.f32 %v1958, %v2139
        %2141 = vmatmul.bf16.gmra.mxu0 %v1950
        %v2142 = vpop.f32.mrf.mxu0
        %v2143 = vadd.f32 %v1958, %v2142
        %v2144 = vpop.f32.mrf.mxu0
        %v2145 = vadd.f32 %v1958, %v2144
        %2146 = vmatmul.bf16.gmra.mxu0 %v1951
        %v2147 = vpop.f32.mrf.mxu0
        %v2148 = vadd.f32 %v1958, %v2147
        %v2149 = vpop.f32.mrf.mxu0
        %v2150 = vadd.f32 %v1958, %v2149
        %2151 = vmatmul.bf16.gmra.mxu0 %v1952
        %v2152 = vpop.f32.mrf.mxu0
        %v2153 = vadd.f32 %v1958, %v2152
        %v2154 = vpop.f32.mrf.mxu0
        %v2155 = vadd.f32 %v1958, %v2154
        %2156 = vmatmul.bf16.gmra.mxu0 %v1953
        %v2157 = vpop.f32.mrf.mxu0
        %v2158 = vadd.f32 %v1958, %v2157
        %v2159 = vpop.f32.mrf.mxu0
        %v2160 = vadd.f32 %v1958, %v2159
        %2161 = vmatmul.bf16.gmra.mxu0 %v1954
        %v2162 = vpop.f32.mrf.mxu0
        %v2163 = vadd.f32 %v1958, %v2162
        %v2164 = vpop.f32.mrf.mxu0
        %v2165 = vadd.f32 %v1958, %v2164
        %2166 = vmatmul.bf16.gmra.mxu0 %v1955
        %v2167 = vpop.f32.mrf.mxu0
        %v2168 = vadd.f32 %v1958, %v2167
        %v2169 = vpop.f32.mrf.mxu0
        %v2170 = vadd.f32 %v1958, %v2169
        %2171 = vmatmul.bf16.gmra.mxu0 %v1956
        %v2172 = vpop.f32.mrf.mxu0
        %v2173 = vadd.f32 %v1958, %v2172
        %v2174 = vpop.f32.mrf.mxu0
        %v2175 = vadd.f32 %v1958, %v2174
        %2176 = vdwg.mxu0
        %v2177 = vmax.f32 %v2018, 0.0
        %v2178 = vmax.f32 %v2020, 0.0
        %v2179 = vmax.f32 %v2023, 0.0
        %v2180 = vmax.f32 %v2025, 0.0
        %v2181 = vmax.f32 %v2028, 0.0
        %v2182 = vmax.f32 %v2030, 0.0
        %v2183 = vmax.f32 %v2033, 0.0
        %v2184 = vmax.f32 %v2035, 0.0
        %v2185 = vmax.f32 %v2038, 0.0
        %v2186 = vmax.f32 %v2040, 0.0
        %v2187 = vmax.f32 %v2043, 0.0
        %v2188 = vmax.f32 %v2045, 0.0
        %v2189 = vmax.f32 %v2048, 0.0
        %v2190 = vmax.f32 %v2050, 0.0
        %v2191 = vmax.f32 %v2053, 0.0
        %v2192 = vmax.f32 %v2055, 0.0
        %v2193 = vmax.f32 %v2058, 0.0
        %v2194 = vmax.f32 %v2060, 0.0
        %v2195 = vmax.f32 %v2063, 0.0
        %v2196 = vmax.f32 %v2065, 0.0
        %v2197 = vmax.f32 %v2068, 0.0
        %v2198 = vmax.f32 %v2070, 0.0
        %v2199 = vmax.f32 %v2073, 0.0
        %v2200 = vmax.f32 %v2075, 0.0
        %v2201 = vmax.f32 %v2078, 0.0
        %v2202 = vmax.f32 %v2080, 0.0
        %v2203 = vmax.f32 %v2083, 0.0
        %v2204 = vmax.f32 %v2085, 0.0
        %v2205 = vmax.f32 %v2088, 0.0
        %v2206 = vmax.f32 %v2090, 0.0
        %v2207 = vmax.f32 %v2093, 0.0
        %v2208 = vmax.f32 %v2095, 0.0
        %v2209 = vmax.f32 %v2098, 0.0
        %v2210 = vmax.f32 %v2100, 0.0
        %v2211 = vmax.f32 %v2103, 0.0
        %v2212 = vmax.f32 %v2105, 0.0
        %v2213 = vmax.f32 %v2108, 0.0
        %v2214 = vmax.f32 %v2110, 0.0
        %v2215 = vmax.f32 %v2113, 0.0
        %v2216 = vmax.f32 %v2115, 0.0
        %v2217 = vmax.f32 %v2118, 0.0
        %v2218 = vmax.f32 %v2120, 0.0
        %v2219 = vmax.f32 %v2123, 0.0
        %v2220 = vmax.f32 %v2125, 0.0
        %v2221 = vmax.f32 %v2128, 0.0
        %v2222 = vmax.f32 %v2130, 0.0
        %v2223 = vmax.f32 %v2133, 0.0
        %v2224 = vmax.f32 %v2135, 0.0
        %v2225 = vmax.f32 %v2138, 0.0
        %v2226 = vmax.f32 %v2140, 0.0
        %v2227 = vmax.f32 %v2143, 0.0
        %v2228 = vmax.f32 %v2145, 0.0
        %v2229 = vmax.f32 %v2148, 0.0
        %v2230 = vmax.f32 %v2150, 0.0
        %v2231 = vmax.f32 %v2153, 0.0
        %v2232 = vmax.f32 %v2155, 0.0
        %v2233 = vmax.f32 %v2158, 0.0
        %v2234 = vmax.f32 %v2160, 0.0
        %v2235 = vmax.f32 %v2163, 0.0
        %v2236 = vmax.f32 %v2165, 0.0
        %v2237 = vmax.f32 %v2168, 0.0
        %v2238 = vmax.f32 %v2170, 0.0
        %v2239 = vmax.f32 %v2173, 0.0
        %v2240 = vmax.f32 %v2175, 0.0
        %v2241 = vld [vmem:[#allocation13] sm:$0xf]
        %v2242 = vld [vmem:[#allocation13 + $0x4] sm:$0xf]
        %v2243 = vld [vmem:[#allocation13 + $0x8] sm:$0xf]
        %v2244 = vld [vmem:[#allocation13 + $0xc] sm:$0xf]
        %v2245 = vld [vmem:[#allocation13 + $0x10] sm:$0xf]
        %v2246 = vld [vmem:[#allocation13 + $0x14] sm:$0xf]
        %v2247 = vld [vmem:[#allocation13 + $0x18] sm:$0xf]
        %v2248 = vld [vmem:[#allocation13 + $0x1c] sm:$0xf]
        %v2249 = vld [vmem:[#allocation13 + $0x20] sm:$0xf]
        %v2250 = vld [vmem:[#allocation13 + $0x24] sm:$0xf]
        %v2251 = vld [vmem:[#allocation13 + $0x28] sm:$0xf]
        %v2252 = vld [vmem:[#allocation13 + $0x2c] sm:$0xf]
        %v2253 = vld [vmem:[#allocation13 + $0x30] sm:$0xf]
        %v2254 = vld [vmem:[#allocation13 + $0x34] sm:$0xf]
        %v2255 = vld [vmem:[#allocation13 + $0x38] sm:$0xf]
        %v2256 = vld [vmem:[#allocation13 + $0x3c] sm:$0xf]
        %v2257 = vld [vmem:[#allocation15] sm:$0x1]
        %v2258 = vpack.c.bf16 %v2178, %v2177
        %v2259 = vpack.c.bf16 %v2180, %v2179
        %v2260 = vpack.c.bf16 %v2182, %v2181
        %v2261 = vpack.c.bf16 %v2184, %v2183
        %v2262 = vpack.c.bf16 %v2186, %v2185
        %v2263 = vpack.c.bf16 %v2188, %v2187
        %v2264 = vpack.c.bf16 %v2190, %v2189
        %v2265 = vpack.c.bf16 %v2192, %v2191
        %v2266 = vpack.c.bf16 %v2194, %v2193
        %v2267 = vpack.c.bf16 %v2196, %v2195
        %v2268 = vpack.c.bf16 %v2198, %v2197
        %v2269 = vpack.c.bf16 %v2200, %v2199
        %v2270 = vpack.c.bf16 %v2202, %v2201
        %v2271 = vpack.c.bf16 %v2204, %v2203
        %v2272 = vpack.c.bf16 %v2206, %v2205
        %v2273 = vpack.c.bf16 %v2208, %v2207
        %v2274 = vpack.c.bf16 %v2210, %v2209
        %v2275 = vpack.c.bf16 %v2212, %v2211
        %v2276 = vpack.c.bf16 %v2214, %v2213
        %v2277 = vpack.c.bf16 %v2216, %v2215
        %v2278 = vpack.c.bf16 %v2218, %v2217
        %v2279 = vpack.c.bf16 %v2220, %v2219
        %v2280 = vpack.c.bf16 %v2222, %v2221
        %v2281 = vpack.c.bf16 %v2224, %v2223
        %v2282 = vpack.c.bf16 %v2226, %v2225
        %v2283 = vpack.c.bf16 %v2228, %v2227
        %v2284 = vpack.c.bf16 %v2230, %v2229
        %v2285 = vpack.c.bf16 %v2232, %v2231
        %v2286 = vpack.c.bf16 %v2234, %v2233
        %v2287 = vpack.c.bf16 %v2236, %v2235
        %v2288 = vpack.c.bf16 %v2238, %v2237
        %v2289 = vpack.c.bf16 %v2240, %v2239
        %v2291 = vperm.slane %v2257, 0
        %v2309 = vunpack.c.l.b16 %v2241
        %v2310 = vunpack.c.l.b16 %v2242
        %v2311 = vunpack.c.l.b16 %v2243
        %v2312 = vunpack.c.l.b16 %v2244
        %v2313 = vunpack.c.l.b16 %v2245
        %v2314 = vunpack.c.l.b16 %v2246
        %v2315 = vunpack.c.l.b16 %v2247
        %v2316 = vunpack.c.l.b16 %v2248
        %v2317 = vunpack.c.l.b16 %v2249
        %v2318 = vunpack.c.l.b16 %v2250
        %v2319 = vunpack.c.l.b16 %v2251
        %v2320 = vunpack.c.l.b16 %v2252
        %v2321 = vunpack.c.l.b16 %v2253
        %v2322 = vunpack.c.l.b16 %v2254
        %v2323 = vunpack.c.l.b16 %v2255
        %v2324 = vunpack.c.l.b16 %v2256
        %v2325 = vpack.c.b16 %v2310, %v2309
        %v2326 = vpack.c.b16 %v2312, %v2311
        %v2327 = vpack.c.b16 %v2314, %v2313
        %v2328 = vpack.c.b16 %v2316, %v2315
        %v2329 = vpack.c.b16 %v2318, %v2317
        %v2330 = vpack.c.b16 %v2320, %v2319
        %v2331 = vpack.c.b16 %v2322, %v2321
        %v2332 = vpack.c.b16 %v2324, %v2323
        %2341 = vmatpush.bf16.msra.mxu0 %v2332
        %2342 = vmatpush.bf16.msra.mxu0 %v2331
        %2343 = vmatpush.bf16.msra.mxu0 %v2330
        %2344 = vmatpush.bf16.msra.mxu0 %v2329
        %2345 = vmatpush.bf16.msra.mxu0 %v2328
        %2346 = vmatpush.bf16.msra.mxu0 %v2327
        %2347 = vmatpush.bf16.msra.mxu0 %v2326
        %2348 = vmatpush.bf16.msra.mxu0 %v2325
        %2349 = vmatmul.bf16.gmra.mxu0 %v2258
        %v2350 = vpop.f32.mrf.mxu0
        %v2351 = vadd.f32 %v2291, %v2350
        %v2352 = vpop.f32.mrf.mxu0
        %v2353 = vadd.f32 %v2291, %v2352
        %2354 = vmatmul.bf16.gmra.mxu0 %v2259
        %v2355 = vpop.f32.mrf.mxu0
        %v2356 = vadd.f32 %v2291, %v2355
        %v2357 = vpop.f32.mrf.mxu0
        %v2358 = vadd.f32 %v2291, %v2357
        %2359 = vmatmul.bf16.gmra.mxu0 %v2260
        %v2360 = vpop.f32.mrf.mxu0
        %v2361 = vadd.f32 %v2291, %v2360
        %v2362 = vpop.f32.mrf.mxu0
        %v2363 = vadd.f32 %v2291, %v2362
        %2364 = vmatmul.bf16.gmra.mxu0 %v2261
        %v2365 = vpop.f32.mrf.mxu0
        %v2366 = vadd.f32 %v2291, %v2365
        %v2367 = vpop.f32.mrf.mxu0
        %v2368 = vadd.f32 %v2291, %v2367
        %2369 = vmatmul.bf16.gmra.mxu0 %v2262
        %v2370 = vpop.f32.mrf.mxu0
        %v2371 = vadd.f32 %v2291, %v2370
        %v2372 = vpop.f32.mrf.mxu0
        %v2373 = vadd.f32 %v2291, %v2372
        %2374 = vmatmul.bf16.gmra.mxu0 %v2263
        %v2375 = vpop.f32.mrf.mxu0
        %v2376 = vadd.f32 %v2291, %v2375
        %v2377 = vpop.f32.mrf.mxu0
        %v2378 = vadd.f32 %v2291, %v2377
        %2379 = vmatmul.bf16.gmra.mxu0 %v2264
        %v2380 = vpop.f32.mrf.mxu0
        %v2381 = vadd.f32 %v2291, %v2380
        %v2382 = vpop.f32.mrf.mxu0
        %v2383 = vadd.f32 %v2291, %v2382
        %2384 = vmatmul.bf16.gmra.mxu0 %v2265
        %v2385 = vpop.f32.mrf.mxu0
        %v2386 = vadd.f32 %v2291, %v2385
        %v2387 = vpop.f32.mrf.mxu0
        %v2388 = vadd.f32 %v2291, %v2387
        %2389 = vmatmul.bf16.gmra.mxu0 %v2266
        %v2390 = vpop.f32.mrf.mxu0
        %v2391 = vadd.f32 %v2291, %v2390
        %v2392 = vpop.f32.mrf.mxu0
        %v2393 = vadd.f32 %v2291, %v2392
        %2394 = vmatmul.bf16.gmra.mxu0 %v2267
        %v2395 = vpop.f32.mrf.mxu0
        %v2396 = vadd.f32 %v2291, %v2395
        %v2397 = vpop.f32.mrf.mxu0
        %v2398 = vadd.f32 %v2291, %v2397
        %2399 = vmatmul.bf16.gmra.mxu0 %v2268
        %v2400 = vpop.f32.mrf.mxu0
        %v2401 = vadd.f32 %v2291, %v2400
        %v2402 = vpop.f32.mrf.mxu0
        %v2403 = vadd.f32 %v2291, %v2402
        %2404 = vmatmul.bf16.gmra.mxu0 %v2269
        %v2405 = vpop.f32.mrf.mxu0
        %v2406 = vadd.f32 %v2291, %v2405
        %v2407 = vpop.f32.mrf.mxu0
        %v2408 = vadd.f32 %v2291, %v2407
        %2409 = vmatmul.bf16.gmra.mxu0 %v2270
        %v2410 = vpop.f32.mrf.mxu0
        %v2411 = vadd.f32 %v2291, %v2410
        %v2412 = vpop.f32.mrf.mxu0
        %v2413 = vadd.f32 %v2291, %v2412
        %2414 = vmatmul.bf16.gmra.mxu0 %v2271
        %v2415 = vpop.f32.mrf.mxu0
        %v2416 = vadd.f32 %v2291, %v2415
        %v2417 = vpop.f32.mrf.mxu0
        %v2418 = vadd.f32 %v2291, %v2417
        %2419 = vmatmul.bf16.gmra.mxu0 %v2272
        %v2420 = vpop.f32.mrf.mxu0
        %v2421 = vadd.f32 %v2291, %v2420
        %v2422 = vpop.f32.mrf.mxu0
        %v2423 = vadd.f32 %v2291, %v2422
        %2424 = vmatmul.bf16.gmra.mxu0 %v2273
        %v2425 = vpop.f32.mrf.mxu0
        %v2426 = vadd.f32 %v2291, %v2425
        %v2427 = vpop.f32.mrf.mxu0
        %v2428 = vadd.f32 %v2291, %v2427
        %2429 = vmatmul.bf16.gmra.mxu0 %v2274
        %v2430 = vpop.f32.mrf.mxu0
        %v2431 = vadd.f32 %v2291, %v2430
        %v2432 = vpop.f32.mrf.mxu0
        %v2433 = vadd.f32 %v2291, %v2432
        %2434 = vmatmul.bf16.gmra.mxu0 %v2275
        %v2435 = vpop.f32.mrf.mxu0
        %v2436 = vadd.f32 %v2291, %v2435
        %v2437 = vpop.f32.mrf.mxu0
        %v2438 = vadd.f32 %v2291, %v2437
        %2439 = vmatmul.bf16.gmra.mxu0 %v2276
        %v2440 = vpop.f32.mrf.mxu0
        %v2441 = vadd.f32 %v2291, %v2440
        %v2442 = vpop.f32.mrf.mxu0
        %v2443 = vadd.f32 %v2291, %v2442
        %2444 = vmatmul.bf16.gmra.mxu0 %v2277
        %v2445 = vpop.f32.mrf.mxu0
        %v2446 = vadd.f32 %v2291, %v2445
        %v2447 = vpop.f32.mrf.mxu0
        %v2448 = vadd.f32 %v2291, %v2447
        %2449 = vmatmul.bf16.gmra.mxu0 %v2278
        %v2450 = vpop.f32.mrf.mxu0
        %v2451 = vadd.f32 %v2291, %v2450
        %v2452 = vpop.f32.mrf.mxu0
        %v2453 = vadd.f32 %v2291, %v2452
        %2454 = vmatmul.bf16.gmra.mxu0 %v2279
        %v2455 = vpop.f32.mrf.mxu0
        %v2456 = vadd.f32 %v2291, %v2455
        %v2457 = vpop.f32.mrf.mxu0
        %v2458 = vadd.f32 %v2291, %v2457
        %2459 = vmatmul.bf16.gmra.mxu0 %v2280
        %v2460 = vpop.f32.mrf.mxu0
        %v2461 = vadd.f32 %v2291, %v2460
        %v2462 = vpop.f32.mrf.mxu0
        %v2463 = vadd.f32 %v2291, %v2462
        %2464 = vmatmul.bf16.gmra.mxu0 %v2281
        %v2465 = vpop.f32.mrf.mxu0
        %v2466 = vadd.f32 %v2291, %v2465
        %v2467 = vpop.f32.mrf.mxu0
        %v2468 = vadd.f32 %v2291, %v2467
        %2469 = vmatmul.bf16.gmra.mxu0 %v2282
        %v2470 = vpop.f32.mrf.mxu0
        %v2471 = vadd.f32 %v2291, %v2470
        %v2472 = vpop.f32.mrf.mxu0
        %v2473 = vadd.f32 %v2291, %v2472
        %2474 = vmatmul.bf16.gmra.mxu0 %v2283
        %v2475 = vpop.f32.mrf.mxu0
        %v2476 = vadd.f32 %v2291, %v2475
        %v2477 = vpop.f32.mrf.mxu0
        %v2478 = vadd.f32 %v2291, %v2477
        %2479 = vmatmul.bf16.gmra.mxu0 %v2284
        %v2480 = vpop.f32.mrf.mxu0
        %v2481 = vadd.f32 %v2291, %v2480
        %v2482 = vpop.f32.mrf.mxu0
        %v2483 = vadd.f32 %v2291, %v2482
        %2484 = vmatmul.bf16.gmra.mxu0 %v2285
        %v2485 = vpop.f32.mrf.mxu0
        %v2486 = vadd.f32 %v2291, %v2485
        %v2487 = vpop.f32.mrf.mxu0
        %v2488 = vadd.f32 %v2291, %v2487
        %2489 = vmatmul.bf16.gmra.mxu0 %v2286
        %v2490 = vpop.f32.mrf.mxu0
        %v2491 = vadd.f32 %v2291, %v2490
        %v2492 = vpop.f32.mrf.mxu0
        %v2493 = vadd.f32 %v2291, %v2492
        %2494 = vmatmul.bf16.gmra.mxu0 %v2287
        %v2495 = vpop.f32.mrf.mxu0
        %v2496 = vadd.f32 %v2291, %v2495
        %v2497 = vpop.f32.mrf.mxu0
        %v2498 = vadd.f32 %v2291, %v2497
        %2499 = vmatmul.bf16.gmra.mxu0 %v2288
        %v2500 = vpop.f32.mrf.mxu0
        %v2501 = vadd.f32 %v2291, %v2500
        %v2502 = vpop.f32.mrf.mxu0
        %v2503 = vadd.f32 %v2291, %v2502
        %2504 = vmatmul.bf16.gmra.mxu0 %v2289
        %v2505 = vpop.f32.mrf.mxu0
        %v2506 = vadd.f32 %v2291, %v2505
        %v2507 = vpop.f32.mrf.mxu0
        %v2508 = vadd.f32 %v2291, %v2507
        %2509 = vdwg.mxu0
        %v2510 = vmax.f32 %v2351, 0.0
        %v2511 = vmax.f32 %v2353, 0.0
        %v2512 = vmax.f32 %v2356, 0.0
        %v2513 = vmax.f32 %v2358, 0.0
        %v2514 = vmax.f32 %v2361, 0.0
        %v2515 = vmax.f32 %v2363, 0.0
        %v2516 = vmax.f32 %v2366, 0.0
        %v2517 = vmax.f32 %v2368, 0.0
        %v2518 = vmax.f32 %v2371, 0.0
        %v2519 = vmax.f32 %v2373, 0.0
        %v2520 = vmax.f32 %v2376, 0.0
        %v2521 = vmax.f32 %v2378, 0.0
        %v2522 = vmax.f32 %v2381, 0.0
        %v2523 = vmax.f32 %v2383, 0.0
        %v2524 = vmax.f32 %v2386, 0.0
        %v2525 = vmax.f32 %v2388, 0.0
        %v2526 = vmax.f32 %v2391, 0.0
        %v2527 = vmax.f32 %v2393, 0.0
        %v2528 = vmax.f32 %v2396, 0.0
        %v2529 = vmax.f32 %v2398, 0.0
        %v2530 = vmax.f32 %v2401, 0.0
        %v2531 = vmax.f32 %v2403, 0.0
        %v2532 = vmax.f32 %v2406, 0.0
        %v2533 = vmax.f32 %v2408, 0.0
        %v2534 = vmax.f32 %v2411, 0.0
        %v2535 = vmax.f32 %v2413, 0.0
        %v2536 = vmax.f32 %v2416, 0.0
        %v2537 = vmax.f32 %v2418, 0.0
        %v2538 = vmax.f32 %v2421, 0.0
        %v2539 = vmax.f32 %v2423, 0.0
        %v2540 = vmax.f32 %v2426, 0.0
        %v2541 = vmax.f32 %v2428, 0.0
        %v2542 = vmax.f32 %v2431, 0.0
        %v2543 = vmax.f32 %v2433, 0.0
        %v2544 = vmax.f32 %v2436, 0.0
        %v2545 = vmax.f32 %v2438, 0.0
        %v2546 = vmax.f32 %v2441, 0.0
        %v2547 = vmax.f32 %v2443, 0.0
        %v2548 = vmax.f32 %v2446, 0.0
        %v2549 = vmax.f32 %v2448, 0.0
        %v2550 = vmax.f32 %v2451, 0.0
        %v2551 = vmax.f32 %v2453, 0.0
        %v2552 = vmax.f32 %v2456, 0.0
        %v2553 = vmax.f32 %v2458, 0.0
        %v2554 = vmax.f32 %v2461, 0.0
        %v2555 = vmax.f32 %v2463, 0.0
        %v2556 = vmax.f32 %v2466, 0.0
        %v2557 = vmax.f32 %v2468, 0.0
        %v2558 = vmax.f32 %v2471, 0.0
        %v2559 = vmax.f32 %v2473, 0.0
        %v2560 = vmax.f32 %v2476, 0.0
        %v2561 = vmax.f32 %v2478, 0.0
        %v2562 = vmax.f32 %v2481, 0.0
        %v2563 = vmax.f32 %v2483, 0.0
        %v2564 = vmax.f32 %v2486, 0.0
        %v2565 = vmax.f32 %v2488, 0.0
        %v2566 = vmax.f32 %v2491, 0.0
        %v2567 = vmax.f32 %v2493, 0.0
        %v2568 = vmax.f32 %v2496, 0.0
        %v2569 = vmax.f32 %v2498, 0.0
        %v2570 = vmax.f32 %v2501, 0.0
        %v2571 = vmax.f32 %v2503, 0.0
        %v2572 = vmax.f32 %v2506, 0.0
        %v2573 = vmax.f32 %v2508, 0.0
        %v2574 = vld [vmem:[#allocation16] sm:$0xf]
        %v2575 = vld [vmem:[#allocation16 + $0x4] sm:$0xf]
        %v2576 = vld [vmem:[#allocation16 + $0x8] sm:$0xf]
        %v2577 = vld [vmem:[#allocation16 + $0xc] sm:$0xf]
        %v2578 = vld [vmem:[#allocation16 + $0x10] sm:$0xf]
        %v2579 = vld [vmem:[#allocation16 + $0x14] sm:$0xf]
        %v2580 = vld [vmem:[#allocation16 + $0x18] sm:$0xf]
        %v2581 = vld [vmem:[#allocation16 + $0x1c] sm:$0xf]
        %v2582 = vld [vmem:[#allocation16 + $0x20] sm:$0xf]
        %v2583 = vld [vmem:[#allocation16 + $0x24] sm:$0xf]
        %v2584 = vld [vmem:[#allocation16 + $0x28] sm:$0xf]
        %v2585 = vld [vmem:[#allocation16 + $0x2c] sm:$0xf]
        %v2586 = vld [vmem:[#allocation16 + $0x30] sm:$0xf]
        %v2587 = vld [vmem:[#allocation16 + $0x34] sm:$0xf]
        %v2588 = vld [vmem:[#allocation16 + $0x38] sm:$0xf]
        %v2589 = vld [vmem:[#allocation16 + $0x3c] sm:$0xf]
        %v2590 = vld [vmem:[#allocation18] sm:$0x1]
        %v2591 = vpack.c.bf16 %v2511, %v2510
        %v2592 = vpack.c.bf16 %v2513, %v2512
        %v2593 = vpack.c.bf16 %v2515, %v2514
        %v2594 = vpack.c.bf16 %v2517, %v2516
        %v2595 = vpack.c.bf16 %v2519, %v2518
        %v2596 = vpack.c.bf16 %v2521, %v2520
        %v2597 = vpack.c.bf16 %v2523, %v2522
        %v2598 = vpack.c.bf16 %v2525, %v2524
        %v2599 = vpack.c.bf16 %v2527, %v2526
        %v2600 = vpack.c.bf16 %v2529, %v2528
        %v2601 = vpack.c.bf16 %v2531, %v2530
        %v2602 = vpack.c.bf16 %v2533, %v2532
        %v2603 = vpack.c.bf16 %v2535, %v2534
        %v2604 = vpack.c.bf16 %v2537, %v2536
        %v2605 = vpack.c.bf16 %v2539, %v2538
        %v2606 = vpack.c.bf16 %v2541, %v2540
        %v2607 = vpack.c.bf16 %v2543, %v2542
        %v2608 = vpack.c.bf16 %v2545, %v2544
        %v2609 = vpack.c.bf16 %v2547, %v2546
        %v2610 = vpack.c.bf16 %v2549, %v2548
        %v2611 = vpack.c.bf16 %v2551, %v2550
        %v2612 = vpack.c.bf16 %v2553, %v2552
        %v2613 = vpack.c.bf16 %v2555, %v2554
        %v2614 = vpack.c.bf16 %v2557, %v2556
        %v2615 = vpack.c.bf16 %v2559, %v2558
        %v2616 = vpack.c.bf16 %v2561, %v2560
        %v2617 = vpack.c.bf16 %v2563, %v2562
        %v2618 = vpack.c.bf16 %v2565, %v2564
        %v2619 = vpack.c.bf16 %v2567, %v2566
        %v2620 = vpack.c.bf16 %v2569, %v2568
        %v2621 = vpack.c.bf16 %v2571, %v2570
        %v2622 = vpack.c.bf16 %v2573, %v2572
        %v2624 = vperm.slane %v2590, 0
        %v2642 = vunpack.c.l.b16 %v2574
        %v2643 = vunpack.c.l.b16 %v2575
        %v2644 = vunpack.c.l.b16 %v2576
        %v2645 = vunpack.c.l.b16 %v2577
        %v2646 = vunpack.c.l.b16 %v2578
        %v2647 = vunpack.c.l.b16 %v2579
        %v2648 = vunpack.c.l.b16 %v2580
        %v2649 = vunpack.c.l.b16 %v2581
        %v2650 = vunpack.c.l.b16 %v2582
        %v2651 = vunpack.c.l.b16 %v2583
        %v2652 = vunpack.c.l.b16 %v2584
        %v2653 = vunpack.c.l.b16 %v2585
        %v2654 = vunpack.c.l.b16 %v2586
        %v2655 = vunpack.c.l.b16 %v2587
        %v2656 = vunpack.c.l.b16 %v2588
        %v2657 = vunpack.c.l.b16 %v2589
        %v2658 = vpack.c.b16 %v2643, %v2642
        %v2659 = vpack.c.b16 %v2645, %v2644
        %v2660 = vpack.c.b16 %v2647, %v2646
        %v2661 = vpack.c.b16 %v2649, %v2648
        %v2662 = vpack.c.b16 %v2651, %v2650
        %v2663 = vpack.c.b16 %v2653, %v2652
        %v2664 = vpack.c.b16 %v2655, %v2654
        %v2665 = vpack.c.b16 %v2657, %v2656
        %2674 = vmatpush.bf16.msra.mxu0 %v2665
        %2675 = vmatpush.bf16.msra.mxu0 %v2664
        %2676 = vmatpush.bf16.msra.mxu0 %v2663
        %2677 = vmatpush.bf16.msra.mxu0 %v2662
        %2678 = vmatpush.bf16.msra.mxu0 %v2661
        %2679 = vmatpush.bf16.msra.mxu0 %v2660
        %2680 = vmatpush.bf16.msra.mxu0 %v2659
        %2681 = vmatpush.bf16.msra.mxu0 %v2658
        %2682 = vmatmul.bf16.gmra.mxu0 %v2591
        %v2683 = vpop.f32.mrf.mxu0
        %v2684 = vadd.f32 %v2624, %v2683
        %v2685 = vpop.f32.mrf.mxu0
        %v2686 = vadd.f32 %v2624, %v2685
        %2687 = vmatmul.bf16.gmra.mxu0 %v2592
        %v2688 = vpop.f32.mrf.mxu0
        %v2689 = vadd.f32 %v2624, %v2688
        %v2690 = vpop.f32.mrf.mxu0
        %v2691 = vadd.f32 %v2624, %v2690
        %2692 = vmatmul.bf16.gmra.mxu0 %v2593
        %v2693 = vpop.f32.mrf.mxu0
        %v2694 = vadd.f32 %v2624, %v2693
        %v2695 = vpop.f32.mrf.mxu0
        %v2696 = vadd.f32 %v2624, %v2695
        %2697 = vmatmul.bf16.gmra.mxu0 %v2594
        %v2698 = vpop.f32.mrf.mxu0
        %v2699 = vadd.f32 %v2624, %v2698
        %v2700 = vpop.f32.mrf.mxu0
        %v2701 = vadd.f32 %v2624, %v2700
        %2702 = vmatmul.bf16.gmra.mxu0 %v2595
        %v2703 = vpop.f32.mrf.mxu0
        %v2704 = vadd.f32 %v2624, %v2703
        %v2705 = vpop.f32.mrf.mxu0
        %v2706 = vadd.f32 %v2624, %v2705
        %2707 = vmatmul.bf16.gmra.mxu0 %v2596
        %v2708 = vpop.f32.mrf.mxu0
        %v2709 = vadd.f32 %v2624, %v2708
        %v2710 = vpop.f32.mrf.mxu0
        %v2711 = vadd.f32 %v2624, %v2710
        %2712 = vmatmul.bf16.gmra.mxu0 %v2597
        %v2713 = vpop.f32.mrf.mxu0
        %v2714 = vadd.f32 %v2624, %v2713
        %v2715 = vpop.f32.mrf.mxu0
        %v2716 = vadd.f32 %v2624, %v2715
        %2717 = vmatmul.bf16.gmra.mxu0 %v2598
        %v2718 = vpop.f32.mrf.mxu0
        %v2719 = vadd.f32 %v2624, %v2718
        %v2720 = vpop.f32.mrf.mxu0
        %v2721 = vadd.f32 %v2624, %v2720
        %2722 = vmatmul.bf16.gmra.mxu0 %v2599
        %v2723 = vpop.f32.mrf.mxu0
        %v2724 = vadd.f32 %v2624, %v2723
        %v2725 = vpop.f32.mrf.mxu0
        %v2726 = vadd.f32 %v2624, %v2725
        %2727 = vmatmul.bf16.gmra.mxu0 %v2600
        %v2728 = vpop.f32.mrf.mxu0
        %v2729 = vadd.f32 %v2624, %v2728
        %v2730 = vpop.f32.mrf.mxu0
        %v2731 = vadd.f32 %v2624, %v2730
        %2732 = vmatmul.bf16.gmra.mxu0 %v2601
        %v2733 = vpop.f32.mrf.mxu0
        %v2734 = vadd.f32 %v2624, %v2733
        %v2735 = vpop.f32.mrf.mxu0
        %v2736 = vadd.f32 %v2624, %v2735
        %2737 = vmatmul.bf16.gmra.mxu0 %v2602
        %v2738 = vpop.f32.mrf.mxu0
        %v2739 = vadd.f32 %v2624, %v2738
        %v2740 = vpop.f32.mrf.mxu0
        %v2741 = vadd.f32 %v2624, %v2740
        %2742 = vmatmul.bf16.gmra.mxu0 %v2603
        %v2743 = vpop.f32.mrf.mxu0
        %v2744 = vadd.f32 %v2624, %v2743
        %v2745 = vpop.f32.mrf.mxu0
        %v2746 = vadd.f32 %v2624, %v2745
        %2747 = vmatmul.bf16.gmra.mxu0 %v2604
        %v2748 = vpop.f32.mrf.mxu0
        %v2749 = vadd.f32 %v2624, %v2748
        %v2750 = vpop.f32.mrf.mxu0
        %v2751 = vadd.f32 %v2624, %v2750
        %2752 = vmatmul.bf16.gmra.mxu0 %v2605
        %v2753 = vpop.f32.mrf.mxu0
        %v2754 = vadd.f32 %v2624, %v2753
        %v2755 = vpop.f32.mrf.mxu0
        %v2756 = vadd.f32 %v2624, %v2755
        %2757 = vmatmul.bf16.gmra.mxu0 %v2606
        %v2758 = vpop.f32.mrf.mxu0
        %v2759 = vadd.f32 %v2624, %v2758
        %v2760 = vpop.f32.mrf.mxu0
        %v2761 = vadd.f32 %v2624, %v2760
        %2762 = vmatmul.bf16.gmra.mxu0 %v2607
        %v2763 = vpop.f32.mrf.mxu0
        %v2764 = vadd.f32 %v2624, %v2763
        %v2765 = vpop.f32.mrf.mxu0
        %v2766 = vadd.f32 %v2624, %v2765
        %2767 = vmatmul.bf16.gmra.mxu0 %v2608
        %v2768 = vpop.f32.mrf.mxu0
        %v2769 = vadd.f32 %v2624, %v2768
        %v2770 = vpop.f32.mrf.mxu0
        %v2771 = vadd.f32 %v2624, %v2770
        %2772 = vmatmul.bf16.gmra.mxu0 %v2609
        %v2773 = vpop.f32.mrf.mxu0
        %v2774 = vadd.f32 %v2624, %v2773
        %v2775 = vpop.f32.mrf.mxu0
        %v2776 = vadd.f32 %v2624, %v2775
        %2777 = vmatmul.bf16.gmra.mxu0 %v2610
        %v2778 = vpop.f32.mrf.mxu0
        %v2779 = vadd.f32 %v2624, %v2778
        %v2780 = vpop.f32.mrf.mxu0
        %v2781 = vadd.f32 %v2624, %v2780
        %2782 = vmatmul.bf16.gmra.mxu0 %v2611
        %v2783 = vpop.f32.mrf.mxu0
        %v2784 = vadd.f32 %v2624, %v2783
        %v2785 = vpop.f32.mrf.mxu0
        %v2786 = vadd.f32 %v2624, %v2785
        %2787 = vmatmul.bf16.gmra.mxu0 %v2612
        %v2788 = vpop.f32.mrf.mxu0
        %v2789 = vadd.f32 %v2624, %v2788
        %v2790 = vpop.f32.mrf.mxu0
        %v2791 = vadd.f32 %v2624, %v2790
        %2792 = vmatmul.bf16.gmra.mxu0 %v2613
        %v2793 = vpop.f32.mrf.mxu0
        %v2794 = vadd.f32 %v2624, %v2793
        %v2795 = vpop.f32.mrf.mxu0
        %v2796 = vadd.f32 %v2624, %v2795
        %2797 = vmatmul.bf16.gmra.mxu0 %v2614
        %v2798 = vpop.f32.mrf.mxu0
        %v2799 = vadd.f32 %v2624, %v2798
        %v2800 = vpop.f32.mrf.mxu0
        %v2801 = vadd.f32 %v2624, %v2800
        %2802 = vmatmul.bf16.gmra.mxu0 %v2615
        %v2803 = vpop.f32.mrf.mxu0
        %v2804 = vadd.f32 %v2624, %v2803
        %v2805 = vpop.f32.mrf.mxu0
        %v2806 = vadd.f32 %v2624, %v2805
        %2807 = vmatmul.bf16.gmra.mxu0 %v2616
        %v2808 = vpop.f32.mrf.mxu0
        %v2809 = vadd.f32 %v2624, %v2808
        %v2810 = vpop.f32.mrf.mxu0
        %v2811 = vadd.f32 %v2624, %v2810
        %2812 = vmatmul.bf16.gmra.mxu0 %v2617
        %v2813 = vpop.f32.mrf.mxu0
        %v2814 = vadd.f32 %v2624, %v2813
        %v2815 = vpop.f32.mrf.mxu0
        %v2816 = vadd.f32 %v2624, %v2815
        %2817 = vmatmul.bf16.gmra.mxu0 %v2618
        %v2818 = vpop.f32.mrf.mxu0
        %v2819 = vadd.f32 %v2624, %v2818
        %v2820 = vpop.f32.mrf.mxu0
        %v2821 = vadd.f32 %v2624, %v2820
        %2822 = vmatmul.bf16.gmra.mxu0 %v2619
        %v2823 = vpop.f32.mrf.mxu0
        %v2824 = vadd.f32 %v2624, %v2823
        %v2825 = vpop.f32.mrf.mxu0
        %v2826 = vadd.f32 %v2624, %v2825
        %2827 = vmatmul.bf16.gmra.mxu0 %v2620
        %v2828 = vpop.f32.mrf.mxu0
        %v2829 = vadd.f32 %v2624, %v2828
        %v2830 = vpop.f32.mrf.mxu0
        %v2831 = vadd.f32 %v2624, %v2830
        %2832 = vmatmul.bf16.gmra.mxu0 %v2621
        %v2833 = vpop.f32.mrf.mxu0
        %v2834 = vadd.f32 %v2624, %v2833
        %v2835 = vpop.f32.mrf.mxu0
        %v2836 = vadd.f32 %v2624, %v2835
        %2837 = vmatmul.bf16.gmra.mxu0 %v2622
        %v2838 = vpop.f32.mrf.mxu0
        %v2839 = vadd.f32 %v2624, %v2838
        %v2840 = vpop.f32.mrf.mxu0
        %v2841 = vadd.f32 %v2624, %v2840
        %2842 = vdwg.mxu0
        %v2843 = vmax.f32 %v2684, 0.0
        %v2844 = vmax.f32 %v2686, 0.0
        %v2845 = vmax.f32 %v2689, 0.0
        %v2846 = vmax.f32 %v2691, 0.0
        %v2847 = vmax.f32 %v2694, 0.0
        %v2848 = vmax.f32 %v2696, 0.0
        %v2849 = vmax.f32 %v2699, 0.0
        %v2850 = vmax.f32 %v2701, 0.0
        %v2851 = vmax.f32 %v2704, 0.0
        %v2852 = vmax.f32 %v2706, 0.0
        %v2853 = vmax.f32 %v2709, 0.0
        %v2854 = vmax.f32 %v2711, 0.0
        %v2855 = vmax.f32 %v2714, 0.0
        %v2856 = vmax.f32 %v2716, 0.0
        %v2857 = vmax.f32 %v2719, 0.0
        %v2858 = vmax.f32 %v2721, 0.0
        %v2859 = vmax.f32 %v2724, 0.0
        %v2860 = vmax.f32 %v2726, 0.0
        %v2861 = vmax.f32 %v2729, 0.0
        %v2862 = vmax.f32 %v2731, 0.0
        %v2863 = vmax.f32 %v2734, 0.0
        %v2864 = vmax.f32 %v2736, 0.0
        %v2865 = vmax.f32 %v2739, 0.0
        %v2866 = vmax.f32 %v2741, 0.0
        %v2867 = vmax.f32 %v2744, 0.0
        %v2868 = vmax.f32 %v2746, 0.0
        %v2869 = vmax.f32 %v2749, 0.0
        %v2870 = vmax.f32 %v2751, 0.0
        %v2871 = vmax.f32 %v2754, 0.0
        %v2872 = vmax.f32 %v2756, 0.0
        %v2873 = vmax.f32 %v2759, 0.0
        %v2874 = vmax.f32 %v2761, 0.0
        %v2875 = vmax.f32 %v2764, 0.0
        %v2876 = vmax.f32 %v2766, 0.0
        %v2877 = vmax.f32 %v2769, 0.0
        %v2878 = vmax.f32 %v2771, 0.0
        %v2879 = vmax.f32 %v2774, 0.0
        %v2880 = vmax.f32 %v2776, 0.0
        %v2881 = vmax.f32 %v2779, 0.0
        %v2882 = vmax.f32 %v2781, 0.0
        %v2883 = vmax.f32 %v2784, 0.0
        %v2884 = vmax.f32 %v2786, 0.0
        %v2885 = vmax.f32 %v2789, 0.0
        %v2886 = vmax.f32 %v2791, 0.0
        %v2887 = vmax.f32 %v2794, 0.0
        %v2888 = vmax.f32 %v2796, 0.0
        %v2889 = vmax.f32 %v2799, 0.0
        %v2890 = vmax.f32 %v2801, 0.0
        %v2891 = vmax.f32 %v2804, 0.0
        %v2892 = vmax.f32 %v2806, 0.0
        %v2893 = vmax.f32 %v2809, 0.0
        %v2894 = vmax.f32 %v2811, 0.0
        %v2895 = vmax.f32 %v2814, 0.0
        %v2896 = vmax.f32 %v2816, 0.0
        %v2897 = vmax.f32 %v2819, 0.0
        %v2898 = vmax.f32 %v2821, 0.0
        %v2899 = vmax.f32 %v2824, 0.0
        %v2900 = vmax.f32 %v2826, 0.0
        %v2901 = vmax.f32 %v2829, 0.0
        %v2902 = vmax.f32 %v2831, 0.0
        %v2903 = vmax.f32 %v2834, 0.0
        %v2904 = vmax.f32 %v2836, 0.0
        %v2905 = vmax.f32 %v2839, 0.0
        %v2906 = vmax.f32 %v2841, 0.0
        %v2907 = vld [vmem:[#allocation19] sm:$0xf]
        %v2908 = vld [vmem:[#allocation19 + $0x4] sm:$0xf]
        %v2909 = vld [vmem:[#allocation19 + $0x8] sm:$0xf]
        %v2910 = vld [vmem:[#allocation19 + $0xc] sm:$0xf]
        %v2911 = vld [vmem:[#allocation19 + $0x10] sm:$0xf]
        %v2912 = vld [vmem:[#allocation19 + $0x14] sm:$0xf]
        %v2913 = vld [vmem:[#allocation19 + $0x18] sm:$0xf]
        %v2914 = vld [vmem:[#allocation19 + $0x1c] sm:$0xf]
        %v2915 = vld [vmem:[#allocation19 + $0x20] sm:$0xf]
        %v2916 = vld [vmem:[#allocation19 + $0x24] sm:$0xf]
        %v2917 = vld [vmem:[#allocation19 + $0x28] sm:$0xf]
        %v2918 = vld [vmem:[#allocation19 + $0x2c] sm:$0xf]
        %v2919 = vld [vmem:[#allocation19 + $0x30] sm:$0xf]
        %v2920 = vld [vmem:[#allocation19 + $0x34] sm:$0xf]
        %v2921 = vld [vmem:[#allocation19 + $0x38] sm:$0xf]
        %v2922 = vld [vmem:[#allocation19 + $0x3c] sm:$0xf]
        %v2923 = vld [vmem:[#allocation21] sm:$0xf]
        %v2924 = vld [vmem:[#allocation21 + $0x4] sm:$0xf]
        %v2925 = vld [vmem:[#allocation21 + $0x8] sm:$0xf]
        %v2926 = vld [vmem:[#allocation21 + $0xc] sm:$0xf]
        %v2927 = vld [vmem:[#allocation21 + $0x10] sm:$0xf]
        %v2928 = vld [vmem:[#allocation21 + $0x14] sm:$0xf]
        %v2929 = vld [vmem:[#allocation21 + $0x18] sm:$0xf]
        %v2930 = vld [vmem:[#allocation21 + $0x1c] sm:$0xf]
        %v2931 = vld [vmem:[#allocation21 + $0x20] sm:$0xf]
        %v2932 = vld [vmem:[#allocation21 + $0x24] sm:$0xf]
        %v2933 = vld [vmem:[#allocation21 + $0x28] sm:$0xf]
        %v2934 = vld [vmem:[#allocation21 + $0x2c] sm:$0xf]
        %v2935 = vld [vmem:[#allocation21 + $0x30] sm:$0xf]
        %v2936 = vld [vmem:[#allocation21 + $0x34] sm:$0xf]
        %v2937 = vld [vmem:[#allocation21 + $0x38] sm:$0xf]
        %v2938 = vld [vmem:[#allocation21 + $0x3c] sm:$0xf]
        %v2939 = vld [vmem:[#allocation22] sm:$0x1]
        %v2940 = vpack.c.bf16 %v2844, %v2843
        %v2941 = vpack.c.bf16 %v2846, %v2845
        %v2942 = vpack.c.bf16 %v2848, %v2847
        %v2943 = vpack.c.bf16 %v2850, %v2849
        %v2944 = vpack.c.bf16 %v2852, %v2851
        %v2945 = vpack.c.bf16 %v2854, %v2853
        %v2946 = vpack.c.bf16 %v2856, %v2855
        %v2947 = vpack.c.bf16 %v2858, %v2857
        %v2948 = vpack.c.bf16 %v2860, %v2859
        %v2949 = vpack.c.bf16 %v2862, %v2861
        %v2950 = vpack.c.bf16 %v2864, %v2863
        %v2951 = vpack.c.bf16 %v2866, %v2865
        %v2952 = vpack.c.bf16 %v2868, %v2867
        %v2953 = vpack.c.bf16 %v2870, %v2869
        %v2954 = vpack.c.bf16 %v2872, %v2871
        %v2955 = vpack.c.bf16 %v2874, %v2873
        %v2956 = vpack.c.bf16 %v2876, %v2875
        %v2957 = vpack.c.bf16 %v2878, %v2877
        %v2958 = vpack.c.bf16 %v2880, %v2879
        %v2959 = vpack.c.bf16 %v2882, %v2881
        %v2960 = vpack.c.bf16 %v2884, %v2883
        %v2961 = vpack.c.bf16 %v2886, %v2885
        %v2962 = vpack.c.bf16 %v2888, %v2887
        %v2963 = vpack.c.bf16 %v2890, %v2889
        %v2964 = vpack.c.bf16 %v2892, %v2891
        %v2965 = vpack.c.bf16 %v2894, %v2893
        %v2966 = vpack.c.bf16 %v2896, %v2895
        %v2967 = vpack.c.bf16 %v2898, %v2897
        %v2968 = vpack.c.bf16 %v2900, %v2899
        %v2969 = vpack.c.bf16 %v2902, %v2901
        %v2970 = vpack.c.bf16 %v2904, %v2903
        %v2971 = vpack.c.bf16 %v2906, %v2905
        %v2988 = vunpack.c.l.b16 %v2923
        %v2989 = vunpack.c.l.b16 %v2924
        %v2990 = vunpack.c.l.b16 %v2925
        %v2991 = vunpack.c.l.b16 %v2926
        %v2992 = vunpack.c.l.b16 %v2927
        %v2993 = vunpack.c.l.b16 %v2928
        %v2994 = vunpack.c.l.b16 %v2929
        %v2995 = vunpack.c.l.b16 %v2930
        %v2996 = vunpack.c.l.b16 %v2931
        %v2997 = vunpack.c.l.b16 %v2932
        %v2998 = vunpack.c.l.b16 %v2933
        %v2999 = vunpack.c.l.b16 %v2934
        %v3000 = vunpack.c.l.b16 %v2935
        %v3001 = vunpack.c.l.b16 %v2936
        %v3002 = vunpack.c.l.b16 %v2937
        %v3003 = vunpack.c.l.b16 %v2938
        %v3004 = vpack.c.b16 %v2989, %v2988
        %v3005 = vpack.c.b16 %v2991, %v2990
        %v3006 = vpack.c.b16 %v2993, %v2992
        %v3007 = vpack.c.b16 %v2995, %v2994
        %v3008 = vpack.c.b16 %v2997, %v2996
        %v3009 = vpack.c.b16 %v2999, %v2998
        %v3010 = vpack.c.b16 %v3001, %v3000
        %v3011 = vpack.c.b16 %v3003, %v3002
        %3020 = vmatpush.bf16.msra.mxu0 %v3011
        %3021 = vmatpush.bf16.msra.mxu0 %v3010
        %3022 = vmatpush.bf16.msra.mxu0 %v3009
        %3023 = vmatpush.bf16.msra.mxu0 %v3008
        %3024 = vmatpush.bf16.msra.mxu0 %v3007
        %3025 = vmatpush.bf16.msra.mxu0 %v3006
        %3026 = vmatpush.bf16.msra.mxu0 %v3005
        %3027 = vmatpush.bf16.msra.mxu0 %v3004
        %3028 = vmatmul.bf16.gmra.mxu0 %v1230
        %v3029 = vpop.f32.mrf.mxu0
        %v3030 = vadd.f32 0.0, %v3029
        %v3031 = vpop.f32.mrf.mxu0
        %v3032 = vadd.f32 0.0, %v3031
        %3033 = vmatmul.bf16.gmra.mxu0 %v1231
        %v3034 = vpop.f32.mrf.mxu0
        %v3035 = vadd.f32 0.0, %v3034
        %v3036 = vpop.f32.mrf.mxu0
        %v3037 = vadd.f32 0.0, %v3036
        %3038 = vmatmul.bf16.gmra.mxu0 %v1232
        %v3039 = vpop.f32.mrf.mxu0
        %v3040 = vadd.f32 0.0, %v3039
        %v3041 = vpop.f32.mrf.mxu0
        %v3042 = vadd.f32 0.0, %v3041
        %3043 = vmatmul.bf16.gmra.mxu0 %v1233
        %v3044 = vpop.f32.mrf.mxu0
        %v3045 = vadd.f32 0.0, %v3044
        %v3046 = vpop.f32.mrf.mxu0
        %v3047 = vadd.f32 0.0, %v3046
        %3048 = vmatmul.bf16.gmra.mxu0 %v1234
        %v3049 = vpop.f32.mrf.mxu0
        %v3050 = vadd.f32 0.0, %v3049
        %v3051 = vpop.f32.mrf.mxu0
        %v3052 = vadd.f32 0.0, %v3051
        %3053 = vmatmul.bf16.gmra.mxu0 %v1235
        %v3054 = vpop.f32.mrf.mxu0
        %v3055 = vadd.f32 0.0, %v3054
        %v3056 = vpop.f32.mrf.mxu0
        %v3057 = vadd.f32 0.0, %v3056
        %3058 = vmatmul.bf16.gmra.mxu0 %v1236
        %v3059 = vpop.f32.mrf.mxu0
        %v3060 = vadd.f32 0.0, %v3059
        %v3061 = vpop.f32.mrf.mxu0
        %v3062 = vadd.f32 0.0, %v3061
        %3063 = vmatmul.bf16.gmra.mxu0 %v1237
        %v3064 = vpop.f32.mrf.mxu0
        %v3065 = vadd.f32 0.0, %v3064
        %v3066 = vpop.f32.mrf.mxu0
        %v3067 = vadd.f32 0.0, %v3066
        %3068 = vmatmul.bf16.gmra.mxu0 %v1238
        %v3069 = vpop.f32.mrf.mxu0
        %v3070 = vadd.f32 0.0, %v3069
        %v3071 = vpop.f32.mrf.mxu0
        %v3072 = vadd.f32 0.0, %v3071
        %3073 = vmatmul.bf16.gmra.mxu0 %v1239
        %v3074 = vpop.f32.mrf.mxu0
        %v3075 = vadd.f32 0.0, %v3074
        %v3076 = vpop.f32.mrf.mxu0
        %v3077 = vadd.f32 0.0, %v3076
        %3078 = vmatmul.bf16.gmra.mxu0 %v1240
        %v3079 = vpop.f32.mrf.mxu0
        %v3080 = vadd.f32 0.0, %v3079
        %v3081 = vpop.f32.mrf.mxu0
        %v3082 = vadd.f32 0.0, %v3081
        %3083 = vmatmul.bf16.gmra.mxu0 %v1241
        %v3084 = vpop.f32.mrf.mxu0
        %v3085 = vadd.f32 0.0, %v3084
        %v3086 = vpop.f32.mrf.mxu0
        %v3087 = vadd.f32 0.0, %v3086
        %3088 = vmatmul.bf16.gmra.mxu0 %v1242
        %v3089 = vpop.f32.mrf.mxu0
        %v3090 = vadd.f32 0.0, %v3089
        %v3091 = vpop.f32.mrf.mxu0
        %v3092 = vadd.f32 0.0, %v3091
        %3093 = vmatmul.bf16.gmra.mxu0 %v1243
        %v3094 = vpop.f32.mrf.mxu0
        %v3095 = vadd.f32 0.0, %v3094
        %v3096 = vpop.f32.mrf.mxu0
        %v3097 = vadd.f32 0.0, %v3096
        %3098 = vmatmul.bf16.gmra.mxu0 %v1244
        %v3099 = vpop.f32.mrf.mxu0
        %v3100 = vadd.f32 0.0, %v3099
        %v3101 = vpop.f32.mrf.mxu0
        %v3102 = vadd.f32 0.0, %v3101
        %3103 = vmatmul.bf16.gmra.mxu0 %v1245
        %v3104 = vpop.f32.mrf.mxu0
        %v3105 = vadd.f32 0.0, %v3104
        %v3106 = vpop.f32.mrf.mxu0
        %v3107 = vadd.f32 0.0, %v3106
        %3108 = vmatmul.bf16.gmra.mxu0 %v1246
        %v3109 = vpop.f32.mrf.mxu0
        %v3110 = vadd.f32 0.0, %v3109
        %v3111 = vpop.f32.mrf.mxu0
        %v3112 = vadd.f32 0.0, %v3111
        %3113 = vmatmul.bf16.gmra.mxu0 %v1247
        %v3114 = vpop.f32.mrf.mxu0
        %v3115 = vadd.f32 0.0, %v3114
        %v3116 = vpop.f32.mrf.mxu0
        %v3117 = vadd.f32 0.0, %v3116
        %3118 = vmatmul.bf16.gmra.mxu0 %v1248
        %v3119 = vpop.f32.mrf.mxu0
        %v3120 = vadd.f32 0.0, %v3119
        %v3121 = vpop.f32.mrf.mxu0
        %v3122 = vadd.f32 0.0, %v3121
        %3123 = vmatmul.bf16.gmra.mxu0 %v1249
        %v3124 = vpop.f32.mrf.mxu0
        %v3125 = vadd.f32 0.0, %v3124
        %v3126 = vpop.f32.mrf.mxu0
        %v3127 = vadd.f32 0.0, %v3126
        %3128 = vmatmul.bf16.gmra.mxu0 %v1250
        %v3129 = vpop.f32.mrf.mxu0
        %v3130 = vadd.f32 0.0, %v3129
        %v3131 = vpop.f32.mrf.mxu0
        %v3132 = vadd.f32 0.0, %v3131
        %3133 = vmatmul.bf16.gmra.mxu0 %v1251
        %v3134 = vpop.f32.mrf.mxu0
        %v3135 = vadd.f32 0.0, %v3134
        %v3136 = vpop.f32.mrf.mxu0
        %v3137 = vadd.f32 0.0, %v3136
        %3138 = vmatmul.bf16.gmra.mxu0 %v1252
        %v3139 = vpop.f32.mrf.mxu0
        %v3140 = vadd.f32 0.0, %v3139
        %v3141 = vpop.f32.mrf.mxu0
        %v3142 = vadd.f32 0.0, %v3141
        %3143 = vmatmul.bf16.gmra.mxu0 %v1253
        %v3144 = vpop.f32.mrf.mxu0
        %v3145 = vadd.f32 0.0, %v3144
        %v3146 = vpop.f32.mrf.mxu0
        %v3147 = vadd.f32 0.0, %v3146
        %3148 = vmatmul.bf16.gmra.mxu0 %v1254
        %v3149 = vpop.f32.mrf.mxu0
        %v3150 = vadd.f32 0.0, %v3149
        %v3151 = vpop.f32.mrf.mxu0
        %v3152 = vadd.f32 0.0, %v3151
        %3153 = vmatmul.bf16.gmra.mxu0 %v1255
        %v3154 = vpop.f32.mrf.mxu0
        %v3155 = vadd.f32 0.0, %v3154
        %v3156 = vpop.f32.mrf.mxu0
        %v3157 = vadd.f32 0.0, %v3156
        %3158 = vmatmul.bf16.gmra.mxu0 %v1256
        %v3159 = vpop.f32.mrf.mxu0
        %v3160 = vadd.f32 0.0, %v3159
        %v3161 = vpop.f32.mrf.mxu0
        %v3162 = vadd.f32 0.0, %v3161
        %3163 = vmatmul.bf16.gmra.mxu0 %v1257
        %v3164 = vpop.f32.mrf.mxu0
        %v3165 = vadd.f32 0.0, %v3164
        %v3166 = vpop.f32.mrf.mxu0
        %v3167 = vadd.f32 0.0, %v3166
        %3168 = vmatmul.bf16.gmra.mxu0 %v1258
        %v3169 = vpop.f32.mrf.mxu0
        %v3170 = vadd.f32 0.0, %v3169
        %v3171 = vpop.f32.mrf.mxu0
        %v3172 = vadd.f32 0.0, %v3171
        %3173 = vmatmul.bf16.gmra.mxu0 %v1259
        %v3174 = vpop.f32.mrf.mxu0
        %v3175 = vadd.f32 0.0, %v3174
        %v3176 = vpop.f32.mrf.mxu0
        %v3177 = vadd.f32 0.0, %v3176
        %3178 = vmatmul.bf16.gmra.mxu0 %v1260
        %v3179 = vpop.f32.mrf.mxu0
        %v3180 = vadd.f32 0.0, %v3179
        %v3181 = vpop.f32.mrf.mxu0
        %v3182 = vadd.f32 0.0, %v3181
        %3183 = vmatmul.bf16.gmra.mxu0 %v1261
        %v3184 = vpop.f32.mrf.mxu0
        %v3185 = vadd.f32 0.0, %v3184
        %v3186 = vpop.f32.mrf.mxu0
        %v3187 = vadd.f32 0.0, %v3186
        %3188 = vdwg.mxu0
        %v3205 = vunpack.c.l.b16 %v2907
        %v3206 = vunpack.c.l.b16 %v2908
        %v3207 = vunpack.c.l.b16 %v2909
        %v3208 = vunpack.c.l.b16 %v2910
        %v3209 = vunpack.c.l.b16 %v2911
        %v3210 = vunpack.c.l.b16 %v2912
        %v3211 = vunpack.c.l.b16 %v2913
        %v3212 = vunpack.c.l.b16 %v2914
        %v3213 = vunpack.c.l.b16 %v2915
        %v3214 = vunpack.c.l.b16 %v2916
        %v3215 = vunpack.c.l.b16 %v2917
        %v3216 = vunpack.c.l.b16 %v2918
        %v3217 = vunpack.c.l.b16 %v2919
        %v3218 = vunpack.c.l.b16 %v2920
        %v3219 = vunpack.c.l.b16 %v2921
        %v3220 = vunpack.c.l.b16 %v2922
        %v3221 = vpack.c.b16 %v3206, %v3205
        %v3222 = vpack.c.b16 %v3208, %v3207
        %v3223 = vpack.c.b16 %v3210, %v3209
        %v3224 = vpack.c.b16 %v3212, %v3211
        %v3225 = vpack.c.b16 %v3214, %v3213
        %v3226 = vpack.c.b16 %v3216, %v3215
        %v3227 = vpack.c.b16 %v3218, %v3217
        %v3228 = vpack.c.b16 %v3220, %v3219
        %3237 = vmatpush.bf16.msra.mxu0 %v3228
        %3238 = vmatpush.bf16.msra.mxu0 %v3227
        %3239 = vmatpush.bf16.msra.mxu0 %v3226
        %3240 = vmatpush.bf16.msra.mxu0 %v3225
        %3241 = vmatpush.bf16.msra.mxu0 %v3224
        %3242 = vmatpush.bf16.msra.mxu0 %v3223
        %3243 = vmatpush.bf16.msra.mxu0 %v3222
        %3244 = vmatpush.bf16.msra.mxu0 %v3221
        %3245 = vmatmul.bf16.gmra.mxu0 %v2940
        %v3246 = vpop.f32.mrf.mxu0
        %v3247 = vadd.f32 %v3030, %v3246
        %v3248 = vpop.f32.mrf.mxu0
        %v3249 = vadd.f32 %v3032, %v3248
        %3250 = vmatmul.bf16.gmra.mxu0 %v2941
        %v3251 = vpop.f32.mrf.mxu0
        %v3252 = vadd.f32 %v3035, %v3251
        %v3253 = vpop.f32.mrf.mxu0
        %v3254 = vadd.f32 %v3037, %v3253
        %3255 = vmatmul.bf16.gmra.mxu0 %v2942
        %v3256 = vpop.f32.mrf.mxu0
        %v3257 = vadd.f32 %v3040, %v3256
        %v3258 = vpop.f32.mrf.mxu0
        %v3259 = vadd.f32 %v3042, %v3258
        %3260 = vmatmul.bf16.gmra.mxu0 %v2943
        %v3261 = vpop.f32.mrf.mxu0
        %v3262 = vadd.f32 %v3045, %v3261
        %v3263 = vpop.f32.mrf.mxu0
        %v3264 = vadd.f32 %v3047, %v3263
        %3265 = vmatmul.bf16.gmra.mxu0 %v2944
        %v3266 = vpop.f32.mrf.mxu0
        %v3267 = vadd.f32 %v3050, %v3266
        %v3268 = vpop.f32.mrf.mxu0
        %v3269 = vadd.f32 %v3052, %v3268
        %3270 = vmatmul.bf16.gmra.mxu0 %v2945
        %v3271 = vpop.f32.mrf.mxu0
        %v3272 = vadd.f32 %v3055, %v3271
        %v3273 = vpop.f32.mrf.mxu0
        %v3274 = vadd.f32 %v3057, %v3273
        %3275 = vmatmul.bf16.gmra.mxu0 %v2946
        %v3276 = vpop.f32.mrf.mxu0
        %v3277 = vadd.f32 %v3060, %v3276
        %v3278 = vpop.f32.mrf.mxu0
        %v3279 = vadd.f32 %v3062, %v3278
        %3280 = vmatmul.bf16.gmra.mxu0 %v2947
        %v3281 = vpop.f32.mrf.mxu0
        %v3282 = vadd.f32 %v3065, %v3281
        %v3283 = vpop.f32.mrf.mxu0
        %v3284 = vadd.f32 %v3067, %v3283
        %3285 = vmatmul.bf16.gmra.mxu0 %v2948
        %v3286 = vpop.f32.mrf.mxu0
        %v3287 = vadd.f32 %v3070, %v3286
        %v3288 = vpop.f32.mrf.mxu0
        %v3289 = vadd.f32 %v3072, %v3288
        %3290 = vmatmul.bf16.gmra.mxu0 %v2949
        %v3291 = vpop.f32.mrf.mxu0
        %v3292 = vadd.f32 %v3075, %v3291
        %v3293 = vpop.f32.mrf.mxu0
        %v3294 = vadd.f32 %v3077, %v3293
        %3295 = vmatmul.bf16.gmra.mxu0 %v2950
        %v3296 = vpop.f32.mrf.mxu0
        %v3297 = vadd.f32 %v3080, %v3296
        %v3298 = vpop.f32.mrf.mxu0
        %v3299 = vadd.f32 %v3082, %v3298
        %3300 = vmatmul.bf16.gmra.mxu0 %v2951
        %v3301 = vpop.f32.mrf.mxu0
        %v3302 = vadd.f32 %v3085, %v3301
        %v3303 = vpop.f32.mrf.mxu0
        %v3304 = vadd.f32 %v3087, %v3303
        %3305 = vmatmul.bf16.gmra.mxu0 %v2952
        %v3306 = vpop.f32.mrf.mxu0
        %v3307 = vadd.f32 %v3090, %v3306
        %v3308 = vpop.f32.mrf.mxu0
        %v3309 = vadd.f32 %v3092, %v3308
        %3310 = vmatmul.bf16.gmra.mxu0 %v2953
        %v3311 = vpop.f32.mrf.mxu0
        %v3312 = vadd.f32 %v3095, %v3311
        %v3313 = vpop.f32.mrf.mxu0
        %v3314 = vadd.f32 %v3097, %v3313
        %3315 = vmatmul.bf16.gmra.mxu0 %v2954
        %v3316 = vpop.f32.mrf.mxu0
        %v3317 = vadd.f32 %v3100, %v3316
        %v3318 = vpop.f32.mrf.mxu0
        %v3319 = vadd.f32 %v3102, %v3318
        %3320 = vmatmul.bf16.gmra.mxu0 %v2955
        %v3321 = vpop.f32.mrf.mxu0
        %v3322 = vadd.f32 %v3105, %v3321
        %v3323 = vpop.f32.mrf.mxu0
        %v3324 = vadd.f32 %v3107, %v3323
        %3325 = vmatmul.bf16.gmra.mxu0 %v2956
        %v3326 = vpop.f32.mrf.mxu0
        %v3327 = vadd.f32 %v3110, %v3326
        %v3328 = vpop.f32.mrf.mxu0
        %v3329 = vadd.f32 %v3112, %v3328
        %3330 = vmatmul.bf16.gmra.mxu0 %v2957
        %v3331 = vpop.f32.mrf.mxu0
        %v3332 = vadd.f32 %v3115, %v3331
        %v3333 = vpop.f32.mrf.mxu0
        %v3334 = vadd.f32 %v3117, %v3333
        %3335 = vmatmul.bf16.gmra.mxu0 %v2958
        %v3336 = vpop.f32.mrf.mxu0
        %v3337 = vadd.f32 %v3120, %v3336
        %v3338 = vpop.f32.mrf.mxu0
        %v3339 = vadd.f32 %v3122, %v3338
        %3340 = vmatmul.bf16.gmra.mxu0 %v2959
        %v3341 = vpop.f32.mrf.mxu0
        %v3342 = vadd.f32 %v3125, %v3341
        %v3343 = vpop.f32.mrf.mxu0
        %v3344 = vadd.f32 %v3127, %v3343
        %3345 = vmatmul.bf16.gmra.mxu0 %v2960
        %v3346 = vpop.f32.mrf.mxu0
        %v3347 = vadd.f32 %v3130, %v3346
        %v3348 = vpop.f32.mrf.mxu0
        %v3349 = vadd.f32 %v3132, %v3348
        %3350 = vmatmul.bf16.gmra.mxu0 %v2961
        %v3351 = vpop.f32.mrf.mxu0
        %v3352 = vadd.f32 %v3135, %v3351
        %v3353 = vpop.f32.mrf.mxu0
        %v3354 = vadd.f32 %v3137, %v3353
        %3355 = vmatmul.bf16.gmra.mxu0 %v2962
        %v3356 = vpop.f32.mrf.mxu0
        %v3357 = vadd.f32 %v3140, %v3356
        %v3358 = vpop.f32.mrf.mxu0
        %v3359 = vadd.f32 %v3142, %v3358
        %3360 = vmatmul.bf16.gmra.mxu0 %v2963
        %v3361 = vpop.f32.mrf.mxu0
        %v3362 = vadd.f32 %v3145, %v3361
        %v3363 = vpop.f32.mrf.mxu0
        %v3364 = vadd.f32 %v3147, %v3363
        %3365 = vmatmul.bf16.gmra.mxu0 %v2964
        %v3366 = vpop.f32.mrf.mxu0
        %v3367 = vadd.f32 %v3150, %v3366
        %v3368 = vpop.f32.mrf.mxu0
        %v3369 = vadd.f32 %v3152, %v3368
        %3370 = vmatmul.bf16.gmra.mxu0 %v2965
        %v3371 = vpop.f32.mrf.mxu0
        %v3372 = vadd.f32 %v3155, %v3371
        %v3373 = vpop.f32.mrf.mxu0
        %v3374 = vadd.f32 %v3157, %v3373
        %3375 = vmatmul.bf16.gmra.mxu0 %v2966
        %v3376 = vpop.f32.mrf.mxu0
        %v3377 = vadd.f32 %v3160, %v3376
        %v3378 = vpop.f32.mrf.mxu0
        %v3379 = vadd.f32 %v3162, %v3378
        %3380 = vmatmul.bf16.gmra.mxu0 %v2967
        %v3381 = vpop.f32.mrf.mxu0
        %v3382 = vadd.f32 %v3165, %v3381
        %v3383 = vpop.f32.mrf.mxu0
        %v3384 = vadd.f32 %v3167, %v3383
        %3385 = vmatmul.bf16.gmra.mxu0 %v2968
        %v3386 = vpop.f32.mrf.mxu0
        %v3387 = vadd.f32 %v3170, %v3386
        %v3388 = vpop.f32.mrf.mxu0
        %v3389 = vadd.f32 %v3172, %v3388
        %3390 = vmatmul.bf16.gmra.mxu0 %v2969
        %v3391 = vpop.f32.mrf.mxu0
        %v3392 = vadd.f32 %v3175, %v3391
        %v3393 = vpop.f32.mrf.mxu0
        %v3394 = vadd.f32 %v3177, %v3393
        %3395 = vmatmul.bf16.gmra.mxu0 %v2970
        %v3396 = vpop.f32.mrf.mxu0
        %v3397 = vadd.f32 %v3180, %v3396
        %v3398 = vpop.f32.mrf.mxu0
        %v3399 = vadd.f32 %v3182, %v3398
        %3400 = vmatmul.bf16.gmra.mxu0 %v2971
        %v3401 = vpop.f32.mrf.mxu0
        %v3402 = vadd.f32 %v3185, %v3401
        %v3403 = vpop.f32.mrf.mxu0
        %v3404 = vadd.f32 %v3187, %v3403
        %3405 = vdwg.mxu0
        %v3407 = vperm.slane %v2939, 0
        %v3409 = vadd.f32 %v3247, %v3407
        %v3410 = vadd.f32 %v3249, %v3407
        %v3411 = vadd.f32 %v3252, %v3407
        %v3412 = vadd.f32 %v3254, %v3407
        %v3413 = vadd.f32 %v3257, %v3407
        %v3414 = vadd.f32 %v3259, %v3407
        %v3415 = vadd.f32 %v3262, %v3407
        %v3416 = vadd.f32 %v3264, %v3407
        %v3417 = vadd.f32 %v3267, %v3407
        %v3418 = vadd.f32 %v3269, %v3407
        %v3419 = vadd.f32 %v3272, %v3407
        %v3420 = vadd.f32 %v3274, %v3407
        %v3421 = vadd.f32 %v3277, %v3407
        %v3422 = vadd.f32 %v3279, %v3407
        %v3423 = vadd.f32 %v3282, %v3407
        %v3424 = vadd.f32 %v3284, %v3407
        %v3425 = vadd.f32 %v3287, %v3407
        %v3426 = vadd.f32 %v3289, %v3407
        %v3427 = vadd.f32 %v3292, %v3407
        %v3428 = vadd.f32 %v3294, %v3407
        %v3429 = vadd.f32 %v3297, %v3407
        %v3430 = vadd.f32 %v3299, %v3407
        %v3431 = vadd.f32 %v3302, %v3407
        %v3432 = vadd.f32 %v3304, %v3407
        %v3433 = vadd.f32 %v3307, %v3407
        %v3434 = vadd.f32 %v3309, %v3407
        %v3435 = vadd.f32 %v3312, %v3407
        %v3436 = vadd.f32 %v3314, %v3407
        %v3437 = vadd.f32 %v3317, %v3407
        %v3438 = vadd.f32 %v3319, %v3407
        %v3439 = vadd.f32 %v3322, %v3407
        %v3440 = vadd.f32 %v3324, %v3407
        %v3441 = vadd.f32 %v3327, %v3407
        %v3442 = vadd.f32 %v3329, %v3407
        %v3443 = vadd.f32 %v3332, %v3407
        %v3444 = vadd.f32 %v3334, %v3407
        %v3445 = vadd.f32 %v3337, %v3407
        %v3446 = vadd.f32 %v3339, %v3407
        %v3447 = vadd.f32 %v3342, %v3407
        %v3448 = vadd.f32 %v3344, %v3407
        %v3449 = vadd.f32 %v3347, %v3407
        %v3450 = vadd.f32 %v3349, %v3407
        %v3451 = vadd.f32 %v3352, %v3407
        %v3452 = vadd.f32 %v3354, %v3407
        %v3453 = vadd.f32 %v3357, %v3407
        %v3454 = vadd.f32 %v3359, %v3407
        %v3455 = vadd.f32 %v3362, %v3407
        %v3456 = vadd.f32 %v3364, %v3407
        %v3457 = vadd.f32 %v3367, %v3407
        %v3458 = vadd.f32 %v3369, %v3407
        %v3459 = vadd.f32 %v3372, %v3407
        %v3460 = vadd.f32 %v3374, %v3407
        %v3461 = vadd.f32 %v3377, %v3407
        %v3462 = vadd.f32 %v3379, %v3407
        %v3463 = vadd.f32 %v3382, %v3407
        %v3464 = vadd.f32 %v3384, %v3407
        %v3465 = vadd.f32 %v3387, %v3407
        %v3466 = vadd.f32 %v3389, %v3407
        %v3467 = vadd.f32 %v3392, %v3407
        %v3468 = vadd.f32 %v3394, %v3407
        %v3469 = vadd.f32 %v3397, %v3407
        %v3470 = vadd.f32 %v3399, %v3407
        %v3471 = vadd.f32 %v3402, %v3407
        %v3472 = vadd.f32 %v3404, %v3407
        %v3473 = vmax.f32 %v3409, 0.0
        %v3474 = vmax.f32 %v3410, 0.0
        %v3475 = vmax.f32 %v3411, 0.0
        %v3476 = vmax.f32 %v3412, 0.0
        %v3477 = vmax.f32 %v3413, 0.0
        %v3478 = vmax.f32 %v3414, 0.0
        %v3479 = vmax.f32 %v3415, 0.0
        %v3480 = vmax.f32 %v3416, 0.0
        %v3481 = vmax.f32 %v3417, 0.0
        %v3482 = vmax.f32 %v3418, 0.0
        %v3483 = vmax.f32 %v3419, 0.0
        %v3484 = vmax.f32 %v3420, 0.0
        %v3485 = vmax.f32 %v3421, 0.0
        %v3486 = vmax.f32 %v3422, 0.0
        %v3487 = vmax.f32 %v3423, 0.0
        %v3488 = vmax.f32 %v3424, 0.0
        %v3489 = vmax.f32 %v3425, 0.0
        %v3490 = vmax.f32 %v3426, 0.0
        %v3491 = vmax.f32 %v3427, 0.0
        %v3492 = vmax.f32 %v3428, 0.0
        %v3493 = vmax.f32 %v3429, 0.0
        %v3494 = vmax.f32 %v3430, 0.0
        %v3495 = vmax.f32 %v3431, 0.0
        %v3496 = vmax.f32 %v3432, 0.0
        %v3497 = vmax.f32 %v3433, 0.0
        %v3498 = vmax.f32 %v3434, 0.0
        %v3499 = vmax.f32 %v3435, 0.0
        %v3500 = vmax.f32 %v3436, 0.0
        %v3501 = vmax.f32 %v3437, 0.0
        %v3502 = vmax.f32 %v3438, 0.0
        %v3503 = vmax.f32 %v3439, 0.0
        %v3504 = vmax.f32 %v3440, 0.0
        %v3505 = vmax.f32 %v3441, 0.0
        %v3506 = vmax.f32 %v3442, 0.0
        %v3507 = vmax.f32 %v3443, 0.0
        %v3508 = vmax.f32 %v3444, 0.0
        %v3509 = vmax.f32 %v3445, 0.0
        %v3510 = vmax.f32 %v3446, 0.0
        %v3511 = vmax.f32 %v3447, 0.0
        %v3512 = vmax.f32 %v3448, 0.0
        %v3513 = vmax.f32 %v3449, 0.0
        %v3514 = vmax.f32 %v3450, 0.0
        %v3515 = vmax.f32 %v3451, 0.0
        %v3516 = vmax.f32 %v3452, 0.0
        %v3517 = vmax.f32 %v3453, 0.0
        %v3518 = vmax.f32 %v3454, 0.0
        %v3519 = vmax.f32 %v3455, 0.0
        %v3520 = vmax.f32 %v3456, 0.0
        %v3521 = vmax.f32 %v3457, 0.0
        %v3522 = vmax.f32 %v3458, 0.0
        %v3523 = vmax.f32 %v3459, 0.0
        %v3524 = vmax.f32 %v3460, 0.0
        %v3525 = vmax.f32 %v3461, 0.0
        %v3526 = vmax.f32 %v3462, 0.0
        %v3527 = vmax.f32 %v3463, 0.0
        %v3528 = vmax.f32 %v3464, 0.0
        %v3529 = vmax.f32 %v3465, 0.0
        %v3530 = vmax.f32 %v3466, 0.0
        %v3531 = vmax.f32 %v3467, 0.0
        %v3532 = vmax.f32 %v3468, 0.0
        %v3533 = vmax.f32 %v3469, 0.0
        %v3534 = vmax.f32 %v3470, 0.0
        %v3535 = vmax.f32 %v3471, 0.0
        %v3536 = vmax.f32 %v3472, 0.0
        %v3537 = vld [vmem:[#allocation24] sm:$0xf]
        %v3538 = vld [vmem:[#allocation24 + $0x4] sm:$0xf]
        %v3539 = vld [vmem:[#allocation24 + $0x8] sm:$0xf]
        %v3540 = vld [vmem:[#allocation24 + $0xc] sm:$0xf]
        %v3541 = vld [vmem:[#allocation24 + $0x10] sm:$0xf]
        %v3542 = vld [vmem:[#allocation24 + $0x14] sm:$0xf]
        %v3543 = vld [vmem:[#allocation24 + $0x18] sm:$0xf]
        %v3544 = vld [vmem:[#allocation24 + $0x1c] sm:$0xf]
        %v3545 = vld [vmem:[#allocation24 + $0x20] sm:$0xf]
        %v3546 = vld [vmem:[#allocation24 + $0x24] sm:$0xf]
        %v3547 = vld [vmem:[#allocation24 + $0x28] sm:$0xf]
        %v3548 = vld [vmem:[#allocation24 + $0x2c] sm:$0xf]
        %v3549 = vld [vmem:[#allocation24 + $0x30] sm:$0xf]
        %v3550 = vld [vmem:[#allocation24 + $0x34] sm:$0xf]
        %v3551 = vld [vmem:[#allocation24 + $0x38] sm:$0xf]
        %v3552 = vld [vmem:[#allocation24 + $0x3c] sm:$0xf]
        %v3553 = vld [vmem:[#allocation25] sm:$0x1]
        %v3554 = vpack.c.bf16 %v3474, %v3473
        %v3555 = vpack.c.bf16 %v3476, %v3475
        %v3556 = vpack.c.bf16 %v3478, %v3477
        %v3557 = vpack.c.bf16 %v3480, %v3479
        %v3558 = vpack.c.bf16 %v3482, %v3481
        %v3559 = vpack.c.bf16 %v3484, %v3483
        %v3560 = vpack.c.bf16 %v3486, %v3485
        %v3561 = vpack.c.bf16 %v3488, %v3487
        %v3562 = vpack.c.bf16 %v3490, %v3489
        %v3563 = vpack.c.bf16 %v3492, %v3491
        %v3564 = vpack.c.bf16 %v3494, %v3493
        %v3565 = vpack.c.bf16 %v3496, %v3495
        %v3566 = vpack.c.bf16 %v3498, %v3497
        %v3567 = vpack.c.bf16 %v3500, %v3499
        %v3568 = vpack.c.bf16 %v3502, %v3501
        %v3569 = vpack.c.bf16 %v3504, %v3503
        %v3570 = vpack.c.bf16 %v3506, %v3505
        %v3571 = vpack.c.bf16 %v3508, %v3507
        %v3572 = vpack.c.bf16 %v3510, %v3509
        %v3573 = vpack.c.bf16 %v3512, %v3511
        %v3574 = vpack.c.bf16 %v3514, %v3513
        %v3575 = vpack.c.bf16 %v3516, %v3515
        %v3576 = vpack.c.bf16 %v3518, %v3517
        %v3577 = vpack.c.bf16 %v3520, %v3519
        %v3578 = vpack.c.bf16 %v3522, %v3521
        %v3579 = vpack.c.bf16 %v3524, %v3523
        %v3580 = vpack.c.bf16 %v3526, %v3525
        %v3581 = vpack.c.bf16 %v3528, %v3527
        %v3582 = vpack.c.bf16 %v3530, %v3529
        %v3583 = vpack.c.bf16 %v3532, %v3531
        %v3584 = vpack.c.bf16 %v3534, %v3533
        %v3585 = vpack.c.bf16 %v3536, %v3535
        %v3587 = vperm.slane %v3553, 0
        %v3605 = vunpack.c.l.b16 %v3537
        %v3606 = vunpack.c.l.b16 %v3538
        %v3607 = vunpack.c.l.b16 %v3539
        %v3608 = vunpack.c.l.b16 %v3540
        %v3609 = vunpack.c.l.b16 %v3541
        %v3610 = vunpack.c.l.b16 %v3542
        %v3611 = vunpack.c.l.b16 %v3543
        %v3612 = vunpack.c.l.b16 %v3544
        %v3613 = vunpack.c.l.b16 %v3545
        %v3614 = vunpack.c.l.b16 %v3546
        %v3615 = vunpack.c.l.b16 %v3547
        %v3616 = vunpack.c.l.b16 %v3548
        %v3617 = vunpack.c.l.b16 %v3549
        %v3618 = vunpack.c.l.b16 %v3550
        %v3619 = vunpack.c.l.b16 %v3551
        %v3620 = vunpack.c.l.b16 %v3552
        %v3621 = vpack.c.b16 %v3606, %v3605
        %v3622 = vpack.c.b16 %v3608, %v3607
        %v3623 = vpack.c.b16 %v3610, %v3609
        %v3624 = vpack.c.b16 %v3612, %v3611
        %v3625 = vpack.c.b16 %v3614, %v3613
        %v3626 = vpack.c.b16 %v3616, %v3615
        %v3627 = vpack.c.b16 %v3618, %v3617
        %v3628 = vpack.c.b16 %v3620, %v3619
        %3637 = vmatpush.bf16.msra.mxu0 %v3628
        %3638 = vmatpush.bf16.msra.mxu0 %v3627
        %3639 = vmatpush.bf16.msra.mxu0 %v3626
        %3640 = vmatpush.bf16.msra.mxu0 %v3625
        %3641 = vmatpush.bf16.msra.mxu0 %v3624
        %3642 = vmatpush.bf16.msra.mxu0 %v3623
        %3643 = vmatpush.bf16.msra.mxu0 %v3622
        %3644 = vmatpush.bf16.msra.mxu0 %v3621
        %3645 = vmatmul.bf16.gmra.mxu0 %v3554
        %v3646 = vpop.f32.mrf.mxu0
        %v3647 = vadd.f32 %v3587, %v3646
        %v3648 = vpop.f32.mrf.mxu0
        %v3649 = vadd.f32 %v3587, %v3648
        %3650 = vmatmul.bf16.gmra.mxu0 %v3555
        %v3651 = vpop.f32.mrf.mxu0
        %v3652 = vadd.f32 %v3587, %v3651
        %v3653 = vpop.f32.mrf.mxu0
        %v3654 = vadd.f32 %v3587, %v3653
        %3655 = vmatmul.bf16.gmra.mxu0 %v3556
        %v3656 = vpop.f32.mrf.mxu0
        %v3657 = vadd.f32 %v3587, %v3656
        %v3658 = vpop.f32.mrf.mxu0
        %v3659 = vadd.f32 %v3587, %v3658
        %3660 = vmatmul.bf16.gmra.mxu0 %v3557
        %v3661 = vpop.f32.mrf.mxu0
        %v3662 = vadd.f32 %v3587, %v3661
        %v3663 = vpop.f32.mrf.mxu0
        %v3664 = vadd.f32 %v3587, %v3663
        %3665 = vmatmul.bf16.gmra.mxu0 %v3558
        %v3666 = vpop.f32.mrf.mxu0
        %v3667 = vadd.f32 %v3587, %v3666
        %v3668 = vpop.f32.mrf.mxu0
        %v3669 = vadd.f32 %v3587, %v3668
        %3670 = vmatmul.bf16.gmra.mxu0 %v3559
        %v3671 = vpop.f32.mrf.mxu0
        %v3672 = vadd.f32 %v3587, %v3671
        %v3673 = vpop.f32.mrf.mxu0
        %v3674 = vadd.f32 %v3587, %v3673
        %3675 = vmatmul.bf16.gmra.mxu0 %v3560
        %v3676 = vpop.f32.mrf.mxu0
        %v3677 = vadd.f32 %v3587, %v3676
        %v3678 = vpop.f32.mrf.mxu0
        %v3679 = vadd.f32 %v3587, %v3678
        %3680 = vmatmul.bf16.gmra.mxu0 %v3561
        %v3681 = vpop.f32.mrf.mxu0
        %v3682 = vadd.f32 %v3587, %v3681
        %v3683 = vpop.f32.mrf.mxu0
        %v3684 = vadd.f32 %v3587, %v3683
        %3685 = vmatmul.bf16.gmra.mxu0 %v3562
        %v3686 = vpop.f32.mrf.mxu0
        %v3687 = vadd.f32 %v3587, %v3686
        %v3688 = vpop.f32.mrf.mxu0
        %v3689 = vadd.f32 %v3587, %v3688
        %3690 = vmatmul.bf16.gmra.mxu0 %v3563
        %v3691 = vpop.f32.mrf.mxu0
        %v3692 = vadd.f32 %v3587, %v3691
        %v3693 = vpop.f32.mrf.mxu0
        %v3694 = vadd.f32 %v3587, %v3693
        %3695 = vmatmul.bf16.gmra.mxu0 %v3564
        %v3696 = vpop.f32.mrf.mxu0
        %v3697 = vadd.f32 %v3587, %v3696
        %v3698 = vpop.f32.mrf.mxu0
        %v3699 = vadd.f32 %v3587, %v3698
        %3700 = vmatmul.bf16.gmra.mxu0 %v3565
        %v3701 = vpop.f32.mrf.mxu0
        %v3702 = vadd.f32 %v3587, %v3701
        %v3703 = vpop.f32.mrf.mxu0
        %v3704 = vadd.f32 %v3587, %v3703
        %3705 = vmatmul.bf16.gmra.mxu0 %v3566
        %v3706 = vpop.f32.mrf.mxu0
        %v3707 = vadd.f32 %v3587, %v3706
        %v3708 = vpop.f32.mrf.mxu0
        %v3709 = vadd.f32 %v3587, %v3708
        %3710 = vmatmul.bf16.gmra.mxu0 %v3567
        %v3711 = vpop.f32.mrf.mxu0
        %v3712 = vadd.f32 %v3587, %v3711
        %v3713 = vpop.f32.mrf.mxu0
        %v3714 = vadd.f32 %v3587, %v3713
        %3715 = vmatmul.bf16.gmra.mxu0 %v3568
        %v3716 = vpop.f32.mrf.mxu0
        %v3717 = vadd.f32 %v3587, %v3716
        %v3718 = vpop.f32.mrf.mxu0
        %v3719 = vadd.f32 %v3587, %v3718
        %3720 = vmatmul.bf16.gmra.mxu0 %v3569
        %v3721 = vpop.f32.mrf.mxu0
        %v3722 = vadd.f32 %v3587, %v3721
        %v3723 = vpop.f32.mrf.mxu0
        %v3724 = vadd.f32 %v3587, %v3723
        %3725 = vmatmul.bf16.gmra.mxu0 %v3570
        %v3726 = vpop.f32.mrf.mxu0
        %v3727 = vadd.f32 %v3587, %v3726
        %v3728 = vpop.f32.mrf.mxu0
        %v3729 = vadd.f32 %v3587, %v3728
        %3730 = vmatmul.bf16.gmra.mxu0 %v3571
        %v3731 = vpop.f32.mrf.mxu0
        %v3732 = vadd.f32 %v3587, %v3731
        %v3733 = vpop.f32.mrf.mxu0
        %v3734 = vadd.f32 %v3587, %v3733
        %3735 = vmatmul.bf16.gmra.mxu0 %v3572
        %v3736 = vpop.f32.mrf.mxu0
        %v3737 = vadd.f32 %v3587, %v3736
        %v3738 = vpop.f32.mrf.mxu0
        %v3739 = vadd.f32 %v3587, %v3738
        %3740 = vmatmul.bf16.gmra.mxu0 %v3573
        %v3741 = vpop.f32.mrf.mxu0
        %v3742 = vadd.f32 %v3587, %v3741
        %v3743 = vpop.f32.mrf.mxu0
        %v3744 = vadd.f32 %v3587, %v3743
        %3745 = vmatmul.bf16.gmra.mxu0 %v3574
        %v3746 = vpop.f32.mrf.mxu0
        %v3747 = vadd.f32 %v3587, %v3746
        %v3748 = vpop.f32.mrf.mxu0
        %v3749 = vadd.f32 %v3587, %v3748
        %3750 = vmatmul.bf16.gmra.mxu0 %v3575
        %v3751 = vpop.f32.mrf.mxu0
        %v3752 = vadd.f32 %v3587, %v3751
        %v3753 = vpop.f32.mrf.mxu0
        %v3754 = vadd.f32 %v3587, %v3753
        %3755 = vmatmul.bf16.gmra.mxu0 %v3576
        %v3756 = vpop.f32.mrf.mxu0
        %v3757 = vadd.f32 %v3587, %v3756
        %v3758 = vpop.f32.mrf.mxu0
        %v3759 = vadd.f32 %v3587, %v3758
        %3760 = vmatmul.bf16.gmra.mxu0 %v3577
        %v3761 = vpop.f32.mrf.mxu0
        %v3762 = vadd.f32 %v3587, %v3761
        %v3763 = vpop.f32.mrf.mxu0
        %v3764 = vadd.f32 %v3587, %v3763
        %3765 = vmatmul.bf16.gmra.mxu0 %v3578
        %v3766 = vpop.f32.mrf.mxu0
        %v3767 = vadd.f32 %v3587, %v3766
        %v3768 = vpop.f32.mrf.mxu0
        %v3769 = vadd.f32 %v3587, %v3768
        %3770 = vmatmul.bf16.gmra.mxu0 %v3579
        %v3771 = vpop.f32.mrf.mxu0
        %v3772 = vadd.f32 %v3587, %v3771
        %v3773 = vpop.f32.mrf.mxu0
        %v3774 = vadd.f32 %v3587, %v3773
        %3775 = vmatmul.bf16.gmra.mxu0 %v3580
        %v3776 = vpop.f32.mrf.mxu0
        %v3777 = vadd.f32 %v3587, %v3776
        %v3778 = vpop.f32.mrf.mxu0
        %v3779 = vadd.f32 %v3587, %v3778
        %3780 = vmatmul.bf16.gmra.mxu0 %v3581
        %v3781 = vpop.f32.mrf.mxu0
        %v3782 = vadd.f32 %v3587, %v3781
        %v3783 = vpop.f32.mrf.mxu0
        %v3784 = vadd.f32 %v3587, %v3783
        %3785 = vmatmul.bf16.gmra.mxu0 %v3582
        %v3786 = vpop.f32.mrf.mxu0
        %v3787 = vadd.f32 %v3587, %v3786
        %v3788 = vpop.f32.mrf.mxu0
        %v3789 = vadd.f32 %v3587, %v3788
        %3790 = vmatmul.bf16.gmra.mxu0 %v3583
        %v3791 = vpop.f32.mrf.mxu0
        %v3792 = vadd.f32 %v3587, %v3791
        %v3793 = vpop.f32.mrf.mxu0
        %v3794 = vadd.f32 %v3587, %v3793
        %3795 = vmatmul.bf16.gmra.mxu0 %v3584
        %v3796 = vpop.f32.mrf.mxu0
        %v3797 = vadd.f32 %v3587, %v3796
        %v3798 = vpop.f32.mrf.mxu0
        %v3799 = vadd.f32 %v3587, %v3798
        %3800 = vmatmul.bf16.gmra.mxu0 %v3585
        %v3801 = vpop.f32.mrf.mxu0
        %v3802 = vadd.f32 %v3587, %v3801
        %v3803 = vpop.f32.mrf.mxu0
        %v3804 = vadd.f32 %v3587, %v3803
        %3805 = vdwg.mxu0
        %v3806 = vmax.f32 %v3647, 0.0
        %v3807 = vmax.f32 %v3649, 0.0
        %v3808 = vmax.f32 %v3652, 0.0
        %v3809 = vmax.f32 %v3654, 0.0
        %v3810 = vmax.f32 %v3657, 0.0
        %v3811 = vmax.f32 %v3659, 0.0
        %v3812 = vmax.f32 %v3662, 0.0
        %v3813 = vmax.f32 %v3664, 0.0
        %v3814 = vmax.f32 %v3667, 0.0
        %v3815 = vmax.f32 %v3669, 0.0
        %v3816 = vmax.f32 %v3672, 0.0
        %v3817 = vmax.f32 %v3674, 0.0
        %v3818 = vmax.f32 %v3677, 0.0
        %v3819 = vmax.f32 %v3679, 0.0
        %v3820 = vmax.f32 %v3682, 0.0
        %v3821 = vmax.f32 %v3684, 0.0
        %v3822 = vmax.f32 %v3687, 0.0
        %v3823 = vmax.f32 %v3689, 0.0
        %v3824 = vmax.f32 %v3692, 0.0
        %v3825 = vmax.f32 %v3694, 0.0
        %v3826 = vmax.f32 %v3697, 0.0
        %v3827 = vmax.f32 %v3699, 0.0
        %v3828 = vmax.f32 %v3702, 0.0
        %v3829 = vmax.f32 %v3704, 0.0
        %v3830 = vmax.f32 %v3707, 0.0
        %v3831 = vmax.f32 %v3709, 0.0
        %v3832 = vmax.f32 %v3712, 0.0
        %v3833 = vmax.f32 %v3714, 0.0
        %v3834 = vmax.f32 %v3717, 0.0
        %v3835 = vmax.f32 %v3719, 0.0
        %v3836 = vmax.f32 %v3722, 0.0
        %v3837 = vmax.f32 %v3724, 0.0
        %v3838 = vmax.f32 %v3727, 0.0
        %v3839 = vmax.f32 %v3729, 0.0
        %v3840 = vmax.f32 %v3732, 0.0
        %v3841 = vmax.f32 %v3734, 0.0
        %v3842 = vmax.f32 %v3737, 0.0
        %v3843 = vmax.f32 %v3739, 0.0
        %v3844 = vmax.f32 %v3742, 0.0
        %v3845 = vmax.f32 %v3744, 0.0
        %v3846 = vmax.f32 %v3747, 0.0
        %v3847 = vmax.f32 %v3749, 0.0
        %v3848 = vmax.f32 %v3752, 0.0
        %v3849 = vmax.f32 %v3754, 0.0
        %v3850 = vmax.f32 %v3757, 0.0
        %v3851 = vmax.f32 %v3759, 0.0
        %v3852 = vmax.f32 %v3762, 0.0
        %v3853 = vmax.f32 %v3764, 0.0
        %v3854 = vmax.f32 %v3767, 0.0
        %v3855 = vmax.f32 %v3769, 0.0
        %v3856 = vmax.f32 %v3772, 0.0
        %v3857 = vmax.f32 %v3774, 0.0
        %v3858 = vmax.f32 %v3777, 0.0
        %v3859 = vmax.f32 %v3779, 0.0
        %v3860 = vmax.f32 %v3782, 0.0
        %v3861 = vmax.f32 %v3784, 0.0
        %v3862 = vmax.f32 %v3787, 0.0
        %v3863 = vmax.f32 %v3789, 0.0
        %v3864 = vmax.f32 %v3792, 0.0
        %v3865 = vmax.f32 %v3794, 0.0
        %v3866 = vmax.f32 %v3797, 0.0
        %v3867 = vmax.f32 %v3799, 0.0
        %v3868 = vmax.f32 %v3802, 0.0
        %v3869 = vmax.f32 %v3804, 0.0
        %v3870 = vld [vmem:[#allocation27] sm:$0xf]
        %v3871 = vld [vmem:[#allocation27 + $0x4] sm:$0xf]
        %v3872 = vld [vmem:[#allocation27 + $0x8] sm:$0xf]
        %v3873 = vld [vmem:[#allocation27 + $0xc] sm:$0xf]
        %v3874 = vld [vmem:[#allocation27 + $0x10] sm:$0xf]
        %v3875 = vld [vmem:[#allocation27 + $0x14] sm:$0xf]
        %v3876 = vld [vmem:[#allocation27 + $0x18] sm:$0xf]
        %v3877 = vld [vmem:[#allocation27 + $0x1c] sm:$0xf]
        %v3878 = vld [vmem:[#allocation27 + $0x20] sm:$0xf]
        %v3879 = vld [vmem:[#allocation27 + $0x24] sm:$0xf]
        %v3880 = vld [vmem:[#allocation27 + $0x28] sm:$0xf]
        %v3881 = vld [vmem:[#allocation27 + $0x2c] sm:$0xf]
        %v3882 = vld [vmem:[#allocation27 + $0x30] sm:$0xf]
        %v3883 = vld [vmem:[#allocation27 + $0x34] sm:$0xf]
        %v3884 = vld [vmem:[#allocation27 + $0x38] sm:$0xf]
        %v3885 = vld [vmem:[#allocation27 + $0x3c] sm:$0xf]
        %v3886 = vld [vmem:[#allocation28] sm:$0x1]
        %v3887 = vpack.c.bf16 %v3807, %v3806
        %v3888 = vpack.c.bf16 %v3809, %v3808
        %v3889 = vpack.c.bf16 %v3811, %v3810
        %v3890 = vpack.c.bf16 %v3813, %v3812
        %v3891 = vpack.c.bf16 %v3815, %v3814
        %v3892 = vpack.c.bf16 %v3817, %v3816
        %v3893 = vpack.c.bf16 %v3819, %v3818
        %v3894 = vpack.c.bf16 %v3821, %v3820
        %v3895 = vpack.c.bf16 %v3823, %v3822
        %v3896 = vpack.c.bf16 %v3825, %v3824
        %v3897 = vpack.c.bf16 %v3827, %v3826
        %v3898 = vpack.c.bf16 %v3829, %v3828
        %v3899 = vpack.c.bf16 %v3831, %v3830
        %v3900 = vpack.c.bf16 %v3833, %v3832
        %v3901 = vpack.c.bf16 %v3835, %v3834
        %v3902 = vpack.c.bf16 %v3837, %v3836
        %v3903 = vpack.c.bf16 %v3839, %v3838
        %v3904 = vpack.c.bf16 %v3841, %v3840
        %v3905 = vpack.c.bf16 %v3843, %v3842
        %v3906 = vpack.c.bf16 %v3845, %v3844
        %v3907 = vpack.c.bf16 %v3847, %v3846
        %v3908 = vpack.c.bf16 %v3849, %v3848
        %v3909 = vpack.c.bf16 %v3851, %v3850
        %v3910 = vpack.c.bf16 %v3853, %v3852
        %v3911 = vpack.c.bf16 %v3855, %v3854
        %v3912 = vpack.c.bf16 %v3857, %v3856
        %v3913 = vpack.c.bf16 %v3859, %v3858
        %v3914 = vpack.c.bf16 %v3861, %v3860
        %v3915 = vpack.c.bf16 %v3863, %v3862
        %v3916 = vpack.c.bf16 %v3865, %v3864
        %v3917 = vpack.c.bf16 %v3867, %v3866
        %v3918 = vpack.c.bf16 %v3869, %v3868
        %v3920 = vperm.slane %v3886, 0
        %v3938 = vunpack.c.l.b16 %v3870
        %v3939 = vunpack.c.l.b16 %v3871
        %v3940 = vunpack.c.l.b16 %v3872
        %v3941 = vunpack.c.l.b16 %v3873
        %v3942 = vunpack.c.l.b16 %v3874
        %v3943 = vunpack.c.l.b16 %v3875
        %v3944 = vunpack.c.l.b16 %v3876
        %v3945 = vunpack.c.l.b16 %v3877
        %v3946 = vunpack.c.l.b16 %v3878
        %v3947 = vunpack.c.l.b16 %v3879
        %v3948 = vunpack.c.l.b16 %v3880
        %v3949 = vunpack.c.l.b16 %v3881
        %v3950 = vunpack.c.l.b16 %v3882
        %v3951 = vunpack.c.l.b16 %v3883
        %v3952 = vunpack.c.l.b16 %v3884
        %v3953 = vunpack.c.l.b16 %v3885
        %v3954 = vpack.c.b16 %v3939, %v3938
        %v3955 = vpack.c.b16 %v3941, %v3940
        %v3956 = vpack.c.b16 %v3943, %v3942
        %v3957 = vpack.c.b16 %v3945, %v3944
        %v3958 = vpack.c.b16 %v3947, %v3946
        %v3959 = vpack.c.b16 %v3949, %v3948
        %v3960 = vpack.c.b16 %v3951, %v3950
        %v3961 = vpack.c.b16 %v3953, %v3952
        %3970 = vmatpush.bf16.msra.mxu0 %v3961
        %3971 = vmatpush.bf16.msra.mxu0 %v3960
        %3972 = vmatpush.bf16.msra.mxu0 %v3959
        %3973 = vmatpush.bf16.msra.mxu0 %v3958
        %3974 = vmatpush.bf16.msra.mxu0 %v3957
        %3975 = vmatpush.bf16.msra.mxu0 %v3956
        %3976 = vmatpush.bf16.msra.mxu0 %v3955
        %3977 = vmatpush.bf16.msra.mxu0 %v3954
        %3978 = vmatmul.bf16.gmra.mxu0 %v3887
        %v3979 = vpop.f32.mrf.mxu0
        %v3980 = vadd.f32 %v3920, %v3979
        %v3981 = vpop.f32.mrf.mxu0
        %v3982 = vadd.f32 %v3920, %v3981
        %3983 = vmatmul.bf16.gmra.mxu0 %v3888
        %v3984 = vpop.f32.mrf.mxu0
        %v3985 = vadd.f32 %v3920, %v3984
        %v3986 = vpop.f32.mrf.mxu0
        %v3987 = vadd.f32 %v3920, %v3986
        %3988 = vmatmul.bf16.gmra.mxu0 %v3889
        %v3989 = vpop.f32.mrf.mxu0
        %v3990 = vadd.f32 %v3920, %v3989
        %v3991 = vpop.f32.mrf.mxu0
        %v3992 = vadd.f32 %v3920, %v3991
        %3993 = vmatmul.bf16.gmra.mxu0 %v3890
        %v3994 = vpop.f32.mrf.mxu0
        %v3995 = vadd.f32 %v3920, %v3994
        %v3996 = vpop.f32.mrf.mxu0
        %v3997 = vadd.f32 %v3920, %v3996
        %3998 = vmatmul.bf16.gmra.mxu0 %v3891
        %v3999 = vpop.f32.mrf.mxu0
        %v4000 = vadd.f32 %v3920, %v3999
        %v4001 = vpop.f32.mrf.mxu0
        %v4002 = vadd.f32 %v3920, %v4001
        %4003 = vmatmul.bf16.gmra.mxu0 %v3892
        %v4004 = vpop.f32.mrf.mxu0
        %v4005 = vadd.f32 %v3920, %v4004
        %v4006 = vpop.f32.mrf.mxu0
        %v4007 = vadd.f32 %v3920, %v4006
        %4008 = vmatmul.bf16.gmra.mxu0 %v3893
        %v4009 = vpop.f32.mrf.mxu0
        %v4010 = vadd.f32 %v3920, %v4009
        %v4011 = vpop.f32.mrf.mxu0
        %v4012 = vadd.f32 %v3920, %v4011
        %4013 = vmatmul.bf16.gmra.mxu0 %v3894
        %v4014 = vpop.f32.mrf.mxu0
        %v4015 = vadd.f32 %v3920, %v4014
        %v4016 = vpop.f32.mrf.mxu0
        %v4017 = vadd.f32 %v3920, %v4016
        %4018 = vmatmul.bf16.gmra.mxu0 %v3895
        %v4019 = vpop.f32.mrf.mxu0
        %v4020 = vadd.f32 %v3920, %v4019
        %v4021 = vpop.f32.mrf.mxu0
        %v4022 = vadd.f32 %v3920, %v4021
        %4023 = vmatmul.bf16.gmra.mxu0 %v3896
        %v4024 = vpop.f32.mrf.mxu0
        %v4025 = vadd.f32 %v3920, %v4024
        %v4026 = vpop.f32.mrf.mxu0
        %v4027 = vadd.f32 %v3920, %v4026
        %4028 = vmatmul.bf16.gmra.mxu0 %v3897
        %v4029 = vpop.f32.mrf.mxu0
        %v4030 = vadd.f32 %v3920, %v4029
        %v4031 = vpop.f32.mrf.mxu0
        %v4032 = vadd.f32 %v3920, %v4031
        %4033 = vmatmul.bf16.gmra.mxu0 %v3898
        %v4034 = vpop.f32.mrf.mxu0
        %v4035 = vadd.f32 %v3920, %v4034
        %v4036 = vpop.f32.mrf.mxu0
        %v4037 = vadd.f32 %v3920, %v4036
        %4038 = vmatmul.bf16.gmra.mxu0 %v3899
        %v4039 = vpop.f32.mrf.mxu0
        %v4040 = vadd.f32 %v3920, %v4039
        %v4041 = vpop.f32.mrf.mxu0
        %v4042 = vadd.f32 %v3920, %v4041
        %4043 = vmatmul.bf16.gmra.mxu0 %v3900
        %v4044 = vpop.f32.mrf.mxu0
        %v4045 = vadd.f32 %v3920, %v4044
        %v4046 = vpop.f32.mrf.mxu0
        %v4047 = vadd.f32 %v3920, %v4046
        %4048 = vmatmul.bf16.gmra.mxu0 %v3901
        %v4049 = vpop.f32.mrf.mxu0
        %v4050 = vadd.f32 %v3920, %v4049
        %v4051 = vpop.f32.mrf.mxu0
        %v4052 = vadd.f32 %v3920, %v4051
        %4053 = vmatmul.bf16.gmra.mxu0 %v3902
        %v4054 = vpop.f32.mrf.mxu0
        %v4055 = vadd.f32 %v3920, %v4054
        %v4056 = vpop.f32.mrf.mxu0
        %v4057 = vadd.f32 %v3920, %v4056
        %4058 = vmatmul.bf16.gmra.mxu0 %v3903
        %v4059 = vpop.f32.mrf.mxu0
        %v4060 = vadd.f32 %v3920, %v4059
        %v4061 = vpop.f32.mrf.mxu0
        %v4062 = vadd.f32 %v3920, %v4061
        %4063 = vmatmul.bf16.gmra.mxu0 %v3904
        %v4064 = vpop.f32.mrf.mxu0
        %v4065 = vadd.f32 %v3920, %v4064
        %v4066 = vpop.f32.mrf.mxu0
        %v4067 = vadd.f32 %v3920, %v4066
        %4068 = vmatmul.bf16.gmra.mxu0 %v3905
        %v4069 = vpop.f32.mrf.mxu0
        %v4070 = vadd.f32 %v3920, %v4069
        %v4071 = vpop.f32.mrf.mxu0
        %v4072 = vadd.f32 %v3920, %v4071
        %4073 = vmatmul.bf16.gmra.mxu0 %v3906
        %v4074 = vpop.f32.mrf.mxu0
        %v4075 = vadd.f32 %v3920, %v4074
        %v4076 = vpop.f32.mrf.mxu0
        %v4077 = vadd.f32 %v3920, %v4076
        %4078 = vmatmul.bf16.gmra.mxu0 %v3907
        %v4079 = vpop.f32.mrf.mxu0
        %v4080 = vadd.f32 %v3920, %v4079
        %v4081 = vpop.f32.mrf.mxu0
        %v4082 = vadd.f32 %v3920, %v4081
        %4083 = vmatmul.bf16.gmra.mxu0 %v3908
        %v4084 = vpop.f32.mrf.mxu0
        %v4085 = vadd.f32 %v3920, %v4084
        %v4086 = vpop.f32.mrf.mxu0
        %v4087 = vadd.f32 %v3920, %v4086
        %4088 = vmatmul.bf16.gmra.mxu0 %v3909
        %v4089 = vpop.f32.mrf.mxu0
        %v4090 = vadd.f32 %v3920, %v4089
        %v4091 = vpop.f32.mrf.mxu0
        %v4092 = vadd.f32 %v3920, %v4091
        %4093 = vmatmul.bf16.gmra.mxu0 %v3910
        %v4094 = vpop.f32.mrf.mxu0
        %v4095 = vadd.f32 %v3920, %v4094
        %v4096 = vpop.f32.mrf.mxu0
        %v4097 = vadd.f32 %v3920, %v4096
        %4098 = vmatmul.bf16.gmra.mxu0 %v3911
        %v4099 = vpop.f32.mrf.mxu0
        %v4100 = vadd.f32 %v3920, %v4099
        %v4101 = vpop.f32.mrf.mxu0
        %v4102 = vadd.f32 %v3920, %v4101
        %4103 = vmatmul.bf16.gmra.mxu0 %v3912
        %v4104 = vpop.f32.mrf.mxu0
        %v4105 = vadd.f32 %v3920, %v4104
        %v4106 = vpop.f32.mrf.mxu0
        %v4107 = vadd.f32 %v3920, %v4106
        %4108 = vmatmul.bf16.gmra.mxu0 %v3913
        %v4109 = vpop.f32.mrf.mxu0
        %v4110 = vadd.f32 %v3920, %v4109
        %v4111 = vpop.f32.mrf.mxu0
        %v4112 = vadd.f32 %v3920, %v4111
        %4113 = vmatmul.bf16.gmra.mxu0 %v3914
        %v4114 = vpop.f32.mrf.mxu0
        %v4115 = vadd.f32 %v3920, %v4114
        %v4116 = vpop.f32.mrf.mxu0
        %v4117 = vadd.f32 %v3920, %v4116
        %4118 = vmatmul.bf16.gmra.mxu0 %v3915
        %v4119 = vpop.f32.mrf.mxu0
        %v4120 = vadd.f32 %v3920, %v4119
        %v4121 = vpop.f32.mrf.mxu0
        %v4122 = vadd.f32 %v3920, %v4121
        %4123 = vmatmul.bf16.gmra.mxu0 %v3916
        %v4124 = vpop.f32.mrf.mxu0
        %v4125 = vadd.f32 %v3920, %v4124
        %v4126 = vpop.f32.mrf.mxu0
        %v4127 = vadd.f32 %v3920, %v4126
        %4128 = vmatmul.bf16.gmra.mxu0 %v3917
        %v4129 = vpop.f32.mrf.mxu0
        %v4130 = vadd.f32 %v3920, %v4129
        %v4131 = vpop.f32.mrf.mxu0
        %v4132 = vadd.f32 %v3920, %v4131
        %4133 = vmatmul.bf16.gmra.mxu0 %v3918
        %v4134 = vpop.f32.mrf.mxu0
        %v4135 = vadd.f32 %v3920, %v4134
        %v4136 = vpop.f32.mrf.mxu0
        %v4137 = vadd.f32 %v3920, %v4136
        %4138 = vdwg.mxu0
        %v4139 = vmax.f32 %v3980, 0.0
        %v4140 = vmax.f32 %v3982, 0.0
        %v4141 = vmax.f32 %v3985, 0.0
        %v4142 = vmax.f32 %v3987, 0.0
        %v4143 = vmax.f32 %v3990, 0.0
        %v4144 = vmax.f32 %v3992, 0.0
        %v4145 = vmax.f32 %v3995, 0.0
        %v4146 = vmax.f32 %v3997, 0.0
        %v4147 = vmax.f32 %v4000, 0.0
        %v4148 = vmax.f32 %v4002, 0.0
        %v4149 = vmax.f32 %v4005, 0.0
        %v4150 = vmax.f32 %v4007, 0.0
        %v4151 = vmax.f32 %v4010, 0.0
        %v4152 = vmax.f32 %v4012, 0.0
        %v4153 = vmax.f32 %v4015, 0.0
        %v4154 = vmax.f32 %v4017, 0.0
        %v4155 = vmax.f32 %v4020, 0.0
        %v4156 = vmax.f32 %v4022, 0.0
        %v4157 = vmax.f32 %v4025, 0.0
        %v4158 = vmax.f32 %v4027, 0.0
        %v4159 = vmax.f32 %v4030, 0.0
        %v4160 = vmax.f32 %v4032, 0.0
        %v4161 = vmax.f32 %v4035, 0.0
        %v4162 = vmax.f32 %v4037, 0.0
        %v4163 = vmax.f32 %v4040, 0.0
        %v4164 = vmax.f32 %v4042, 0.0
        %v4165 = vmax.f32 %v4045, 0.0
        %v4166 = vmax.f32 %v4047, 0.0
        %v4167 = vmax.f32 %v4050, 0.0
        %v4168 = vmax.f32 %v4052, 0.0
        %v4169 = vmax.f32 %v4055, 0.0
        %v4170 = vmax.f32 %v4057, 0.0
        %v4171 = vmax.f32 %v4060, 0.0
        %v4172 = vmax.f32 %v4062, 0.0
        %v4173 = vmax.f32 %v4065, 0.0
        %v4174 = vmax.f32 %v4067, 0.0
        %v4175 = vmax.f32 %v4070, 0.0
        %v4176 = vmax.f32 %v4072, 0.0
        %v4177 = vmax.f32 %v4075, 0.0
        %v4178 = vmax.f32 %v4077, 0.0
        %v4179 = vmax.f32 %v4080, 0.0
        %v4180 = vmax.f32 %v4082, 0.0
        %v4181 = vmax.f32 %v4085, 0.0
        %v4182 = vmax.f32 %v4087, 0.0
        %v4183 = vmax.f32 %v4090, 0.0
        %v4184 = vmax.f32 %v4092, 0.0
        %v4185 = vmax.f32 %v4095, 0.0
        %v4186 = vmax.f32 %v4097, 0.0
        %v4187 = vmax.f32 %v4100, 0.0
        %v4188 = vmax.f32 %v4102, 0.0
        %v4189 = vmax.f32 %v4105, 0.0
        %v4190 = vmax.f32 %v4107, 0.0
        %v4191 = vmax.f32 %v4110, 0.0
        %v4192 = vmax.f32 %v4112, 0.0
        %v4193 = vmax.f32 %v4115, 0.0
        %v4194 = vmax.f32 %v4117, 0.0
        %v4195 = vmax.f32 %v4120, 0.0
        %v4196 = vmax.f32 %v4122, 0.0
        %v4197 = vmax.f32 %v4125, 0.0
        %v4198 = vmax.f32 %v4127, 0.0
        %v4199 = vmax.f32 %v4130, 0.0
        %v4200 = vmax.f32 %v4132, 0.0
        %v4201 = vmax.f32 %v4135, 0.0
        %v4202 = vmax.f32 %v4137, 0.0
        %v4203 = vld [vmem:[#allocation30] sm:$0xf]
        %v4204 = vld [vmem:[#allocation30 + $0x4] sm:$0xf]
        %v4205 = vld [vmem:[#allocation30 + $0x8] sm:$0xf]
        %v4206 = vld [vmem:[#allocation30 + $0xc] sm:$0xf]
        %v4207 = vld [vmem:[#allocation30 + $0x10] sm:$0xf]
        %v4208 = vld [vmem:[#allocation30 + $0x14] sm:$0xf]
        %v4209 = vld [vmem:[#allocation30 + $0x18] sm:$0xf]
        %v4210 = vld [vmem:[#allocation30 + $0x1c] sm:$0xf]
        %v4211 = vld [vmem:[#allocation30 + $0x20] sm:$0xf]
        %v4212 = vld [vmem:[#allocation30 + $0x24] sm:$0xf]
        %v4213 = vld [vmem:[#allocation30 + $0x28] sm:$0xf]
        %v4214 = vld [vmem:[#allocation30 + $0x2c] sm:$0xf]
        %v4215 = vld [vmem:[#allocation30 + $0x30] sm:$0xf]
        %v4216 = vld [vmem:[#allocation30 + $0x34] sm:$0xf]
        %v4217 = vld [vmem:[#allocation30 + $0x38] sm:$0xf]
        %v4218 = vld [vmem:[#allocation30 + $0x3c] sm:$0xf]
        %v4219 = vld [vmem:[#allocation31] sm:$0x1]
        %v4220 = vpack.c.bf16 %v4140, %v4139
        %v4221 = vpack.c.bf16 %v4142, %v4141
        %v4222 = vpack.c.bf16 %v4144, %v4143
        %v4223 = vpack.c.bf16 %v4146, %v4145
        %v4224 = vpack.c.bf16 %v4148, %v4147
        %v4225 = vpack.c.bf16 %v4150, %v4149
        %v4226 = vpack.c.bf16 %v4152, %v4151
        %v4227 = vpack.c.bf16 %v4154, %v4153
        %v4228 = vpack.c.bf16 %v4156, %v4155
        %v4229 = vpack.c.bf16 %v4158, %v4157
        %v4230 = vpack.c.bf16 %v4160, %v4159
        %v4231 = vpack.c.bf16 %v4162, %v4161
        %v4232 = vpack.c.bf16 %v4164, %v4163
        %v4233 = vpack.c.bf16 %v4166, %v4165
        %v4234 = vpack.c.bf16 %v4168, %v4167
        %v4235 = vpack.c.bf16 %v4170, %v4169
        %v4236 = vpack.c.bf16 %v4172, %v4171
        %v4237 = vpack.c.bf16 %v4174, %v4173
        %v4238 = vpack.c.bf16 %v4176, %v4175
        %v4239 = vpack.c.bf16 %v4178, %v4177
        %v4240 = vpack.c.bf16 %v4180, %v4179
        %v4241 = vpack.c.bf16 %v4182, %v4181
        %v4242 = vpack.c.bf16 %v4184, %v4183
        %v4243 = vpack.c.bf16 %v4186, %v4185
        %v4244 = vpack.c.bf16 %v4188, %v4187
        %v4245 = vpack.c.bf16 %v4190, %v4189
        %v4246 = vpack.c.bf16 %v4192, %v4191
        %v4247 = vpack.c.bf16 %v4194, %v4193
        %v4248 = vpack.c.bf16 %v4196, %v4195
        %v4249 = vpack.c.bf16 %v4198, %v4197
        %v4250 = vpack.c.bf16 %v4200, %v4199
        %v4251 = vpack.c.bf16 %v4202, %v4201
        %v4253 = vperm.slane %v4219, 0
        %v4271 = vunpack.c.l.b16 %v4203
        %v4272 = vunpack.c.l.b16 %v4204
        %v4273 = vunpack.c.l.b16 %v4205
        %v4274 = vunpack.c.l.b16 %v4206
        %v4275 = vunpack.c.l.b16 %v4207
        %v4276 = vunpack.c.l.b16 %v4208
        %v4277 = vunpack.c.l.b16 %v4209
        %v4278 = vunpack.c.l.b16 %v4210
        %v4279 = vunpack.c.l.b16 %v4211
        %v4280 = vunpack.c.l.b16 %v4212
        %v4281 = vunpack.c.l.b16 %v4213
        %v4282 = vunpack.c.l.b16 %v4214
        %v4283 = vunpack.c.l.b16 %v4215
        %v4284 = vunpack.c.l.b16 %v4216
        %v4285 = vunpack.c.l.b16 %v4217
        %v4286 = vunpack.c.l.b16 %v4218
        %v4287 = vpack.c.b16 %v4272, %v4271
        %v4288 = vpack.c.b16 %v4274, %v4273
        %v4289 = vpack.c.b16 %v4276, %v4275
        %v4290 = vpack.c.b16 %v4278, %v4277
        %v4291 = vpack.c.b16 %v4280, %v4279
        %v4292 = vpack.c.b16 %v4282, %v4281
        %v4293 = vpack.c.b16 %v4284, %v4283
        %v4294 = vpack.c.b16 %v4286, %v4285
        %4303 = vmatpush.bf16.msra.mxu0 %v4294
        %4304 = vmatpush.bf16.msra.mxu0 %v4293
        %4305 = vmatpush.bf16.msra.mxu0 %v4292
        %4306 = vmatpush.bf16.msra.mxu0 %v4291
        %4307 = vmatpush.bf16.msra.mxu0 %v4290
        %4308 = vmatpush.bf16.msra.mxu0 %v4289
        %4309 = vmatpush.bf16.msra.mxu0 %v4288
        %4310 = vmatpush.bf16.msra.mxu0 %v4287
        %4311 = vmatmul.bf16.gmra.mxu0 %v4220
        %v4312 = vpop.f32.mrf.mxu0
        %v4313 = vadd.f32 %v4253, %v4312
        %v4314 = vpop.f32.mrf.mxu0
        %v4315 = vadd.f32 %v4253, %v4314
        %4316 = vmatmul.bf16.gmra.mxu0 %v4221
        %v4317 = vpop.f32.mrf.mxu0
        %v4318 = vadd.f32 %v4253, %v4317
        %v4319 = vpop.f32.mrf.mxu0
        %v4320 = vadd.f32 %v4253, %v4319
        %4321 = vmatmul.bf16.gmra.mxu0 %v4222
        %v4322 = vpop.f32.mrf.mxu0
        %v4323 = vadd.f32 %v4253, %v4322
        %v4324 = vpop.f32.mrf.mxu0
        %v4325 = vadd.f32 %v4253, %v4324
        %4326 = vmatmul.bf16.gmra.mxu0 %v4223
        %v4327 = vpop.f32.mrf.mxu0
        %v4328 = vadd.f32 %v4253, %v4327
        %v4329 = vpop.f32.mrf.mxu0
        %v4330 = vadd.f32 %v4253, %v4329
        %4331 = vmatmul.bf16.gmra.mxu0 %v4224
        %v4332 = vpop.f32.mrf.mxu0
        %v4333 = vadd.f32 %v4253, %v4332
        %v4334 = vpop.f32.mrf.mxu0
        %v4335 = vadd.f32 %v4253, %v4334
        %4336 = vmatmul.bf16.gmra.mxu0 %v4225
        %v4337 = vpop.f32.mrf.mxu0
        %v4338 = vadd.f32 %v4253, %v4337
        %v4339 = vpop.f32.mrf.mxu0
        %v4340 = vadd.f32 %v4253, %v4339
        %4341 = vmatmul.bf16.gmra.mxu0 %v4226
        %v4342 = vpop.f32.mrf.mxu0
        %v4343 = vadd.f32 %v4253, %v4342
        %v4344 = vpop.f32.mrf.mxu0
        %v4345 = vadd.f32 %v4253, %v4344
        %4346 = vmatmul.bf16.gmra.mxu0 %v4227
        %v4347 = vpop.f32.mrf.mxu0
        %v4348 = vadd.f32 %v4253, %v4347
        %v4349 = vpop.f32.mrf.mxu0
        %v4350 = vadd.f32 %v4253, %v4349
        %4351 = vmatmul.bf16.gmra.mxu0 %v4228
        %v4352 = vpop.f32.mrf.mxu0
        %v4353 = vadd.f32 %v4253, %v4352
        %v4354 = vpop.f32.mrf.mxu0
        %v4355 = vadd.f32 %v4253, %v4354
        %4356 = vmatmul.bf16.gmra.mxu0 %v4229
        %v4357 = vpop.f32.mrf.mxu0
        %v4358 = vadd.f32 %v4253, %v4357
        %v4359 = vpop.f32.mrf.mxu0
        %v4360 = vadd.f32 %v4253, %v4359
        %4361 = vmatmul.bf16.gmra.mxu0 %v4230
        %v4362 = vpop.f32.mrf.mxu0
        %v4363 = vadd.f32 %v4253, %v4362
        %v4364 = vpop.f32.mrf.mxu0
        %v4365 = vadd.f32 %v4253, %v4364
        %4366 = vmatmul.bf16.gmra.mxu0 %v4231
        %v4367 = vpop.f32.mrf.mxu0
        %v4368 = vadd.f32 %v4253, %v4367
        %v4369 = vpop.f32.mrf.mxu0
        %v4370 = vadd.f32 %v4253, %v4369
        %4371 = vmatmul.bf16.gmra.mxu0 %v4232
        %v4372 = vpop.f32.mrf.mxu0
        %v4373 = vadd.f32 %v4253, %v4372
        %v4374 = vpop.f32.mrf.mxu0
        %v4375 = vadd.f32 %v4253, %v4374
        %4376 = vmatmul.bf16.gmra.mxu0 %v4233
        %v4377 = vpop.f32.mrf.mxu0
        %v4378 = vadd.f32 %v4253, %v4377
        %v4379 = vpop.f32.mrf.mxu0
        %v4380 = vadd.f32 %v4253, %v4379
        %4381 = vmatmul.bf16.gmra.mxu0 %v4234
        %v4382 = vpop.f32.mrf.mxu0
        %v4383 = vadd.f32 %v4253, %v4382
        %v4384 = vpop.f32.mrf.mxu0
        %v4385 = vadd.f32 %v4253, %v4384
        %4386 = vmatmul.bf16.gmra.mxu0 %v4235
        %v4387 = vpop.f32.mrf.mxu0
        %v4388 = vadd.f32 %v4253, %v4387
        %v4389 = vpop.f32.mrf.mxu0
        %v4390 = vadd.f32 %v4253, %v4389
        %4391 = vmatmul.bf16.gmra.mxu0 %v4236
        %v4392 = vpop.f32.mrf.mxu0
        %v4393 = vadd.f32 %v4253, %v4392
        %v4394 = vpop.f32.mrf.mxu0
        %v4395 = vadd.f32 %v4253, %v4394
        %4396 = vmatmul.bf16.gmra.mxu0 %v4237
        %v4397 = vpop.f32.mrf.mxu0
        %v4398 = vadd.f32 %v4253, %v4397
        %v4399 = vpop.f32.mrf.mxu0
        %v4400 = vadd.f32 %v4253, %v4399
        %4401 = vmatmul.bf16.gmra.mxu0 %v4238
        %v4402 = vpop.f32.mrf.mxu0
        %v4403 = vadd.f32 %v4253, %v4402
        %v4404 = vpop.f32.mrf.mxu0
        %v4405 = vadd.f32 %v4253, %v4404
        %4406 = vmatmul.bf16.gmra.mxu0 %v4239
        %v4407 = vpop.f32.mrf.mxu0
        %v4408 = vadd.f32 %v4253, %v4407
        %v4409 = vpop.f32.mrf.mxu0
        %v4410 = vadd.f32 %v4253, %v4409
        %4411 = vmatmul.bf16.gmra.mxu0 %v4240
        %v4412 = vpop.f32.mrf.mxu0
        %v4413 = vadd.f32 %v4253, %v4412
        %v4414 = vpop.f32.mrf.mxu0
        %v4415 = vadd.f32 %v4253, %v4414
        %4416 = vmatmul.bf16.gmra.mxu0 %v4241
        %v4417 = vpop.f32.mrf.mxu0
        %v4418 = vadd.f32 %v4253, %v4417
        %v4419 = vpop.f32.mrf.mxu0
        %v4420 = vadd.f32 %v4253, %v4419
        %4421 = vmatmul.bf16.gmra.mxu0 %v4242
        %v4422 = vpop.f32.mrf.mxu0
        %v4423 = vadd.f32 %v4253, %v4422
        %v4424 = vpop.f32.mrf.mxu0
        %v4425 = vadd.f32 %v4253, %v4424
        %4426 = vmatmul.bf16.gmra.mxu0 %v4243
        %v4427 = vpop.f32.mrf.mxu0
        %v4428 = vadd.f32 %v4253, %v4427
        %v4429 = vpop.f32.mrf.mxu0
        %v4430 = vadd.f32 %v4253, %v4429
        %4431 = vmatmul.bf16.gmra.mxu0 %v4244
        %v4432 = vpop.f32.mrf.mxu0
        %v4433 = vadd.f32 %v4253, %v4432
        %v4434 = vpop.f32.mrf.mxu0
        %v4435 = vadd.f32 %v4253, %v4434
        %4436 = vmatmul.bf16.gmra.mxu0 %v4245
        %v4437 = vpop.f32.mrf.mxu0
        %v4438 = vadd.f32 %v4253, %v4437
        %v4439 = vpop.f32.mrf.mxu0
        %v4440 = vadd.f32 %v4253, %v4439
        %4441 = vmatmul.bf16.gmra.mxu0 %v4246
        %v4442 = vpop.f32.mrf.mxu0
        %v4443 = vadd.f32 %v4253, %v4442
        %v4444 = vpop.f32.mrf.mxu0
        %v4445 = vadd.f32 %v4253, %v4444
        %4446 = vmatmul.bf16.gmra.mxu0 %v4247
        %v4447 = vpop.f32.mrf.mxu0
        %v4448 = vadd.f32 %v4253, %v4447
        %v4449 = vpop.f32.mrf.mxu0
        %v4450 = vadd.f32 %v4253, %v4449
        %4451 = vmatmul.bf16.gmra.mxu0 %v4248
        %v4452 = vpop.f32.mrf.mxu0
        %v4453 = vadd.f32 %v4253, %v4452
        %v4454 = vpop.f32.mrf.mxu0
        %v4455 = vadd.f32 %v4253, %v4454
        %4456 = vmatmul.bf16.gmra.mxu0 %v4249
        %v4457 = vpop.f32.mrf.mxu0
        %v4458 = vadd.f32 %v4253, %v4457
        %v4459 = vpop.f32.mrf.mxu0
        %v4460 = vadd.f32 %v4253, %v4459
        %4461 = vmatmul.bf16.gmra.mxu0 %v4250
        %v4462 = vpop.f32.mrf.mxu0
        %v4463 = vadd.f32 %v4253, %v4462
        %v4464 = vpop.f32.mrf.mxu0
        %v4465 = vadd.f32 %v4253, %v4464
        %4466 = vmatmul.bf16.gmra.mxu0 %v4251
        %v4467 = vpop.f32.mrf.mxu0
        %v4468 = vadd.f32 %v4253, %v4467
        %v4469 = vpop.f32.mrf.mxu0
        %v4470 = vadd.f32 %v4253, %v4469
        %4471 = vdwg.mxu0
        %v4472 = vmax.f32 %v4313, 0.0
        %v4473 = vmax.f32 %v4315, 0.0
        %v4474 = vmax.f32 %v4318, 0.0
        %v4475 = vmax.f32 %v4320, 0.0
        %v4476 = vmax.f32 %v4323, 0.0
        %v4477 = vmax.f32 %v4325, 0.0
        %v4478 = vmax.f32 %v4328, 0.0
        %v4479 = vmax.f32 %v4330, 0.0
        %v4480 = vmax.f32 %v4333, 0.0
        %v4481 = vmax.f32 %v4335, 0.0
        %v4482 = vmax.f32 %v4338, 0.0
        %v4483 = vmax.f32 %v4340, 0.0
        %v4484 = vmax.f32 %v4343, 0.0
        %v4485 = vmax.f32 %v4345, 0.0
        %v4486 = vmax.f32 %v4348, 0.0
        %v4487 = vmax.f32 %v4350, 0.0
        %v4488 = vmax.f32 %v4353, 0.0
        %v4489 = vmax.f32 %v4355, 0.0
        %v4490 = vmax.f32 %v4358, 0.0
        %v4491 = vmax.f32 %v4360, 0.0
        %v4492 = vmax.f32 %v4363, 0.0
        %v4493 = vmax.f32 %v4365, 0.0
        %v4494 = vmax.f32 %v4368, 0.0
        %v4495 = vmax.f32 %v4370, 0.0
        %v4496 = vmax.f32 %v4373, 0.0
        %v4497 = vmax.f32 %v4375, 0.0
        %v4498 = vmax.f32 %v4378, 0.0
        %v4499 = vmax.f32 %v4380, 0.0
        %v4500 = vmax.f32 %v4383, 0.0
        %v4501 = vmax.f32 %v4385, 0.0
        %v4502 = vmax.f32 %v4388, 0.0
        %v4503 = vmax.f32 %v4390, 0.0
        %v4504 = vmax.f32 %v4393, 0.0
        %v4505 = vmax.f32 %v4395, 0.0
        %v4506 = vmax.f32 %v4398, 0.0
        %v4507 = vmax.f32 %v4400, 0.0
        %v4508 = vmax.f32 %v4403, 0.0
        %v4509 = vmax.f32 %v4405, 0.0
        %v4510 = vmax.f32 %v4408, 0.0
        %v4511 = vmax.f32 %v4410, 0.0
        %v4512 = vmax.f32 %v4413, 0.0
        %v4513 = vmax.f32 %v4415, 0.0
        %v4514 = vmax.f32 %v4418, 0.0
        %v4515 = vmax.f32 %v4420, 0.0
        %v4516 = vmax.f32 %v4423, 0.0
        %v4517 = vmax.f32 %v4425, 0.0
        %v4518 = vmax.f32 %v4428, 0.0
        %v4519 = vmax.f32 %v4430, 0.0
        %v4520 = vmax.f32 %v4433, 0.0
        %v4521 = vmax.f32 %v4435, 0.0
        %v4522 = vmax.f32 %v4438, 0.0
        %v4523 = vmax.f32 %v4440, 0.0
        %v4524 = vmax.f32 %v4443, 0.0
        %v4525 = vmax.f32 %v4445, 0.0
        %v4526 = vmax.f32 %v4448, 0.0
        %v4527 = vmax.f32 %v4450, 0.0
        %v4528 = vmax.f32 %v4453, 0.0
        %v4529 = vmax.f32 %v4455, 0.0
        %v4530 = vmax.f32 %v4458, 0.0
        %v4531 = vmax.f32 %v4460, 0.0
        %v4532 = vmax.f32 %v4463, 0.0
        %v4533 = vmax.f32 %v4465, 0.0
        %v4534 = vmax.f32 %v4468, 0.0
        %v4535 = vmax.f32 %v4470, 0.0
        %v4536 = vld [vmem:[%s20] sm:$0xf]
        %v4537 = vld [vmem:[%s20 + $0x4] sm:$0xf]
        %v4538 = vld [vmem:[%s20 + $0x8] sm:$0xf]
        %v4539 = vld [vmem:[%s20 + $0xc] sm:$0xf]
        %v4540 = vld [vmem:[%s20 + $0x10] sm:$0xf]
        %v4541 = vld [vmem:[%s20 + $0x14] sm:$0xf]
        %v4542 = vld [vmem:[%s20 + $0x18] sm:$0xf]
        %v4543 = vld [vmem:[%s20 + $0x1c] sm:$0xf]
        %v4544 = vld [vmem:[%s20 + $0x20] sm:$0xf]
        %v4545 = vld [vmem:[%s20 + $0x24] sm:$0xf]
        %v4546 = vld [vmem:[%s20 + $0x28] sm:$0xf]
        %v4547 = vld [vmem:[%s20 + $0x2c] sm:$0xf]
        %v4548 = vld [vmem:[%s20 + $0x30] sm:$0xf]
        %v4549 = vld [vmem:[%s20 + $0x34] sm:$0xf]
        %v4550 = vld [vmem:[%s20 + $0x38] sm:$0xf]
        %v4551 = vld [vmem:[%s20 + $0x3c] sm:$0xf]
        %v4552 = vld [vmem:[#allocation33] sm:$0x1]
        %v4553 = vpack.c.bf16 %v4473, %v4472
        %v4554 = vpack.c.bf16 %v4475, %v4474
        %v4555 = vpack.c.bf16 %v4477, %v4476
        %v4556 = vpack.c.bf16 %v4479, %v4478
        %v4557 = vpack.c.bf16 %v4481, %v4480
        %v4558 = vpack.c.bf16 %v4483, %v4482
        %v4559 = vpack.c.bf16 %v4485, %v4484
        %v4560 = vpack.c.bf16 %v4487, %v4486
        %v4561 = vpack.c.bf16 %v4489, %v4488
        %v4562 = vpack.c.bf16 %v4491, %v4490
        %v4563 = vpack.c.bf16 %v4493, %v4492
        %v4564 = vpack.c.bf16 %v4495, %v4494
        %v4565 = vpack.c.bf16 %v4497, %v4496
        %v4566 = vpack.c.bf16 %v4499, %v4498
        %v4567 = vpack.c.bf16 %v4501, %v4500
        %v4568 = vpack.c.bf16 %v4503, %v4502
        %v4569 = vpack.c.bf16 %v4505, %v4504
        %v4570 = vpack.c.bf16 %v4507, %v4506
        %v4571 = vpack.c.bf16 %v4509, %v4508
        %v4572 = vpack.c.bf16 %v4511, %v4510
        %v4573 = vpack.c.bf16 %v4513, %v4512
        %v4574 = vpack.c.bf16 %v4515, %v4514
        %v4575 = vpack.c.bf16 %v4517, %v4516
        %v4576 = vpack.c.bf16 %v4519, %v4518
        %v4577 = vpack.c.bf16 %v4521, %v4520
        %v4578 = vpack.c.bf16 %v4523, %v4522
        %v4579 = vpack.c.bf16 %v4525, %v4524
        %v4580 = vpack.c.bf16 %v4527, %v4526
        %v4581 = vpack.c.bf16 %v4529, %v4528
        %v4582 = vpack.c.bf16 %v4531, %v4530
        %v4583 = vpack.c.bf16 %v4533, %v4532
        %v4584 = vpack.c.bf16 %v4535, %v4534
        %v4586 = vperm.slane %v4552, 0
        %v4604 = vunpack.c.l.b16 %v4536
        %v4605 = vunpack.c.l.b16 %v4537
        %v4606 = vunpack.c.l.b16 %v4538
        %v4607 = vunpack.c.l.b16 %v4539
        %v4608 = vunpack.c.l.b16 %v4540
        %v4609 = vunpack.c.l.b16 %v4541
        %v4610 = vunpack.c.l.b16 %v4542
        %v4611 = vunpack.c.l.b16 %v4543
        %v4612 = vunpack.c.l.b16 %v4544
        %v4613 = vunpack.c.l.b16 %v4545
        %v4614 = vunpack.c.l.b16 %v4546
        %v4615 = vunpack.c.l.b16 %v4547
        %v4616 = vunpack.c.l.b16 %v4548
        %v4617 = vunpack.c.l.b16 %v4549
        %v4618 = vunpack.c.l.b16 %v4550
        %v4619 = vunpack.c.l.b16 %v4551
        %v4620 = vpack.c.b16 %v4605, %v4604
        %v4621 = vpack.c.b16 %v4607, %v4606
        %v4622 = vpack.c.b16 %v4609, %v4608
        %v4623 = vpack.c.b16 %v4611, %v4610
        %v4624 = vpack.c.b16 %v4613, %v4612
        %v4625 = vpack.c.b16 %v4615, %v4614
        %v4626 = vpack.c.b16 %v4617, %v4616
        %v4627 = vpack.c.b16 %v4619, %v4618
        %4636 = vmatpush.bf16.msra.mxu0 %v4627
        %4637 = vmatpush.bf16.msra.mxu0 %v4626
        %4638 = vmatpush.bf16.msra.mxu0 %v4625
        %4639 = vmatpush.bf16.msra.mxu0 %v4624
        %4640 = vmatpush.bf16.msra.mxu0 %v4623
        %4641 = vmatpush.bf16.msra.mxu0 %v4622
        %4642 = vmatpush.bf16.msra.mxu0 %v4621
        %4643 = vmatpush.bf16.msra.mxu0 %v4620
        %4644 = vmatmul.bf16.gmra.mxu0 %v4553
        %v4645 = vpop.f32.mrf.mxu0
        %v4646 = vadd.f32 %v4586, %v4645
        %v4647 = vpop.f32.mrf.mxu0
        %v4648 = vadd.f32 %v4586, %v4647
        %4649 = vmatmul.bf16.gmra.mxu0 %v4554
        %v4650 = vpop.f32.mrf.mxu0
        %v4651 = vadd.f32 %v4586, %v4650
        %v4652 = vpop.f32.mrf.mxu0
        %v4653 = vadd.f32 %v4586, %v4652
        %4654 = vmatmul.bf16.gmra.mxu0 %v4555
        %v4655 = vpop.f32.mrf.mxu0
        %v4656 = vadd.f32 %v4586, %v4655
        %v4657 = vpop.f32.mrf.mxu0
        %v4658 = vadd.f32 %v4586, %v4657
        %4659 = vmatmul.bf16.gmra.mxu0 %v4556
        %v4660 = vpop.f32.mrf.mxu0
        %v4661 = vadd.f32 %v4586, %v4660
        %v4662 = vpop.f32.mrf.mxu0
        %v4663 = vadd.f32 %v4586, %v4662
        %4664 = vmatmul.bf16.gmra.mxu0 %v4557
        %v4665 = vpop.f32.mrf.mxu0
        %v4666 = vadd.f32 %v4586, %v4665
        %v4667 = vpop.f32.mrf.mxu0
        %v4668 = vadd.f32 %v4586, %v4667
        %4669 = vmatmul.bf16.gmra.mxu0 %v4558
        %v4670 = vpop.f32.mrf.mxu0
        %v4671 = vadd.f32 %v4586, %v4670
        %v4672 = vpop.f32.mrf.mxu0
        %v4673 = vadd.f32 %v4586, %v4672
        %4674 = vmatmul.bf16.gmra.mxu0 %v4559
        %v4675 = vpop.f32.mrf.mxu0
        %v4676 = vadd.f32 %v4586, %v4675
        %v4677 = vpop.f32.mrf.mxu0
        %v4678 = vadd.f32 %v4586, %v4677
        %4679 = vmatmul.bf16.gmra.mxu0 %v4560
        %v4680 = vpop.f32.mrf.mxu0
        %v4681 = vadd.f32 %v4586, %v4680
        %v4682 = vpop.f32.mrf.mxu0
        %v4683 = vadd.f32 %v4586, %v4682
        %4684 = vmatmul.bf16.gmra.mxu0 %v4561
        %v4685 = vpop.f32.mrf.mxu0
        %v4686 = vadd.f32 %v4586, %v4685
        %v4687 = vpop.f32.mrf.mxu0
        %v4688 = vadd.f32 %v4586, %v4687
        %4689 = vmatmul.bf16.gmra.mxu0 %v4562
        %v4690 = vpop.f32.mrf.mxu0
        %v4691 = vadd.f32 %v4586, %v4690
        %v4692 = vpop.f32.mrf.mxu0
        %v4693 = vadd.f32 %v4586, %v4692
        %4694 = vmatmul.bf16.gmra.mxu0 %v4563
        %v4695 = vpop.f32.mrf.mxu0
        %v4696 = vadd.f32 %v4586, %v4695
        %v4697 = vpop.f32.mrf.mxu0
        %v4698 = vadd.f32 %v4586, %v4697
        %4699 = vmatmul.bf16.gmra.mxu0 %v4564
        %v4700 = vpop.f32.mrf.mxu0
        %v4701 = vadd.f32 %v4586, %v4700
        %v4702 = vpop.f32.mrf.mxu0
        %v4703 = vadd.f32 %v4586, %v4702
        %4704 = vmatmul.bf16.gmra.mxu0 %v4565
        %v4705 = vpop.f32.mrf.mxu0
        %v4706 = vadd.f32 %v4586, %v4705
        %v4707 = vpop.f32.mrf.mxu0
        %v4708 = vadd.f32 %v4586, %v4707
        %4709 = vmatmul.bf16.gmra.mxu0 %v4566
        %v4710 = vpop.f32.mrf.mxu0
        %v4711 = vadd.f32 %v4586, %v4710
        %v4712 = vpop.f32.mrf.mxu0
        %v4713 = vadd.f32 %v4586, %v4712
        %4714 = vmatmul.bf16.gmra.mxu0 %v4567
        %v4715 = vpop.f32.mrf.mxu0
        %v4716 = vadd.f32 %v4586, %v4715
        %v4717 = vpop.f32.mrf.mxu0
        %v4718 = vadd.f32 %v4586, %v4717
        %4719 = vmatmul.bf16.gmra.mxu0 %v4568
        %v4720 = vpop.f32.mrf.mxu0
        %v4721 = vadd.f32 %v4586, %v4720
        %v4722 = vpop.f32.mrf.mxu0
        %v4723 = vadd.f32 %v4586, %v4722
        %4724 = vmatmul.bf16.gmra.mxu0 %v4569
        %v4725 = vpop.f32.mrf.mxu0
        %v4726 = vadd.f32 %v4586, %v4725
        %v4727 = vpop.f32.mrf.mxu0
        %v4728 = vadd.f32 %v4586, %v4727
        %4729 = vmatmul.bf16.gmra.mxu0 %v4570
        %v4730 = vpop.f32.mrf.mxu0
        %v4731 = vadd.f32 %v4586, %v4730
        %v4732 = vpop.f32.mrf.mxu0
        %v4733 = vadd.f32 %v4586, %v4732
        %4734 = vmatmul.bf16.gmra.mxu0 %v4571
        %v4735 = vpop.f32.mrf.mxu0
        %v4736 = vadd.f32 %v4586, %v4735
        %v4737 = vpop.f32.mrf.mxu0
        %v4738 = vadd.f32 %v4586, %v4737
        %4739 = vmatmul.bf16.gmra.mxu0 %v4572
        %v4740 = vpop.f32.mrf.mxu0
        %v4741 = vadd.f32 %v4586, %v4740
        %v4742 = vpop.f32.mrf.mxu0
        %v4743 = vadd.f32 %v4586, %v4742
        %4744 = vmatmul.bf16.gmra.mxu0 %v4573
        %v4745 = vpop.f32.mrf.mxu0
        %v4746 = vadd.f32 %v4586, %v4745
        %v4747 = vpop.f32.mrf.mxu0
        %v4748 = vadd.f32 %v4586, %v4747
        %4749 = vmatmul.bf16.gmra.mxu0 %v4574
        %v4750 = vpop.f32.mrf.mxu0
        %v4751 = vadd.f32 %v4586, %v4750
        %v4752 = vpop.f32.mrf.mxu0
        %v4753 = vadd.f32 %v4586, %v4752
        %4754 = vmatmul.bf16.gmra.mxu0 %v4575
        %v4755 = vpop.f32.mrf.mxu0
        %v4756 = vadd.f32 %v4586, %v4755
        %v4757 = vpop.f32.mrf.mxu0
        %v4758 = vadd.f32 %v4586, %v4757
        %4759 = vmatmul.bf16.gmra.mxu0 %v4576
        %v4760 = vpop.f32.mrf.mxu0
        %v4761 = vadd.f32 %v4586, %v4760
        %v4762 = vpop.f32.mrf.mxu0
        %v4763 = vadd.f32 %v4586, %v4762
        %4764 = vmatmul.bf16.gmra.mxu0 %v4577
        %v4765 = vpop.f32.mrf.mxu0
        %v4766 = vadd.f32 %v4586, %v4765
        %v4767 = vpop.f32.mrf.mxu0
        %v4768 = vadd.f32 %v4586, %v4767
        %4769 = vmatmul.bf16.gmra.mxu0 %v4578
        %v4770 = vpop.f32.mrf.mxu0
        %v4771 = vadd.f32 %v4586, %v4770
        %v4772 = vpop.f32.mrf.mxu0
        %v4773 = vadd.f32 %v4586, %v4772
        %4774 = vmatmul.bf16.gmra.mxu0 %v4579
        %v4775 = vpop.f32.mrf.mxu0
        %v4776 = vadd.f32 %v4586, %v4775
        %v4777 = vpop.f32.mrf.mxu0
        %v4778 = vadd.f32 %v4586, %v4777
        %4779 = vmatmul.bf16.gmra.mxu0 %v4580
        %v4780 = vpop.f32.mrf.mxu0
        %v4781 = vadd.f32 %v4586, %v4780
        %v4782 = vpop.f32.mrf.mxu0
        %v4783 = vadd.f32 %v4586, %v4782
        %4784 = vmatmul.bf16.gmra.mxu0 %v4581
        %v4785 = vpop.f32.mrf.mxu0
        %v4786 = vadd.f32 %v4586, %v4785
        %v4787 = vpop.f32.mrf.mxu0
        %v4788 = vadd.f32 %v4586, %v4787
        %4789 = vmatmul.bf16.gmra.mxu0 %v4582
        %v4790 = vpop.f32.mrf.mxu0
        %v4791 = vadd.f32 %v4586, %v4790
        %v4792 = vpop.f32.mrf.mxu0
        %v4793 = vadd.f32 %v4586, %v4792
        %4794 = vmatmul.bf16.gmra.mxu0 %v4583
        %v4795 = vpop.f32.mrf.mxu0
        %v4796 = vadd.f32 %v4586, %v4795
        %v4797 = vpop.f32.mrf.mxu0
        %v4798 = vadd.f32 %v4586, %v4797
        %4799 = vmatmul.bf16.gmra.mxu0 %v4584
        %v4800 = vpop.f32.mrf.mxu0
        %v4801 = vadd.f32 %v4586, %v4800
        %v4802 = vpop.f32.mrf.mxu0
        %v4803 = vadd.f32 %v4586, %v4802
        %4804 = vdwg.mxu0
        %vm4805 = vcmask 31744
        %4806 = vst.msk [vmem:[%s1016] sm:$0xff] %vm4805, %v4646
        %4807 = vst.msk [vmem:[%s1016 + $0x8] sm:$0xff] %vm4805, %v4648
        %4808 = vst.msk [vmem:[%s1016 + $0x10] sm:$0xff] %vm4805, %v4651
        %4809 = vst.msk [vmem:[%s1016 + $0x18] sm:$0xff] %vm4805, %v4653
        %4810 = vst.msk [vmem:[%s1016 + $0x20] sm:$0xff] %vm4805, %v4656
        %4811 = vst.msk [vmem:[%s1016 + $0x28] sm:$0xff] %vm4805, %v4658
        %4812 = vst.msk [vmem:[%s1016 + $0x30] sm:$0xff] %vm4805, %v4661
        %4813 = vst.msk [vmem:[%s1016 + $0x38] sm:$0xff] %vm4805, %v4663
        %4814 = vst.msk [vmem:[%s1016 + $0x40] sm:$0xff] %vm4805, %v4666
        %4815 = vst.msk [vmem:[%s1016 + $0x48] sm:$0xff] %vm4805, %v4668
        %4816 = vst.msk [vmem:[%s1016 + $0x50] sm:$0xff] %vm4805, %v4671
        %4817 = vst.msk [vmem:[%s1016 + $0x58] sm:$0xff] %vm4805, %v4673
        %4818 = vst.msk [vmem:[%s1016 + $0x60] sm:$0xff] %vm4805, %v4676
        %4819 = vst.msk [vmem:[%s1016 + $0x68] sm:$0xff] %vm4805, %v4678
        %4820 = vst.msk [vmem:[%s1016 + $0x70] sm:$0xff] %vm4805, %v4681
        %4821 = vst.msk [vmem:[%s1016 + $0x78] sm:$0xff] %vm4805, %v4683
        %4822 = vst.msk [vmem:[%s1016 + $0x80] sm:$0xff] %vm4805, %v4686
        %4823 = vst.msk [vmem:[%s1016 + $0x88] sm:$0xff] %vm4805, %v4688
        %4824 = vst.msk [vmem:[%s1016 + $0x90] sm:$0xff] %vm4805, %v4691
        %4825 = vst.msk [vmem:[%s1016 + $0x98] sm:$0xff] %vm4805, %v4693
        %4826 = vst.msk [vmem:[%s1016 + $0xa0] sm:$0xff] %vm4805, %v4696
        %4827 = vst.msk [vmem:[%s1016 + $0xa8] sm:$0xff] %vm4805, %v4698
        %4828 = vst.msk [vmem:[%s1016 + $0xb0] sm:$0xff] %vm4805, %v4701
        %4829 = vst.msk [vmem:[%s1016 + $0xb8] sm:$0xff] %vm4805, %v4703
        %4830 = vst.msk [vmem:[%s1016 + $0xc0] sm:$0xff] %vm4805, %v4706
        %4831 = vst.msk [vmem:[%s1016 + $0xc8] sm:$0xff] %vm4805, %v4708
        %4832 = vst.msk [vmem:[%s1016 + $0xd0] sm:$0xff] %vm4805, %v4711
        %4833 = vst.msk [vmem:[%s1016 + $0xd8] sm:$0xff] %vm4805, %v4713
        %4834 = vst.msk [vmem:[%s1016 + $0xe0] sm:$0xff] %vm4805, %v4716
        %4835 = vst.msk [vmem:[%s1016 + $0xe8] sm:$0xff] %vm4805, %v4718
        %4836 = vst.msk [vmem:[%s1016 + $0xf0] sm:$0xff] %vm4805, %v4721
        %4837 = vst.msk [vmem:[%s1016 + $0xf8] sm:$0xff] %vm4805, %v4723
        %4838 = vst.msk [vmem:[%s1016 + $0x100] sm:$0xff] %vm4805, %v4726
        %4839 = vst.msk [vmem:[%s1016 + $0x108] sm:$0xff] %vm4805, %v4728
        %4840 = vst.msk [vmem:[%s1016 + $0x110] sm:$0xff] %vm4805, %v4731
        %4841 = vst.msk [vmem:[%s1016 + $0x118] sm:$0xff] %vm4805, %v4733
        %4842 = vst.msk [vmem:[%s1016 + $0x120] sm:$0xff] %vm4805, %v4736
        %4843 = vst.msk [vmem:[%s1016 + $0x128] sm:$0xff] %vm4805, %v4738
        %4844 = vst.msk [vmem:[%s1016 + $0x130] sm:$0xff] %vm4805, %v4741
        %4845 = vst.msk [vmem:[%s1016 + $0x138] sm:$0xff] %vm4805, %v4743
        %4846 = vst.msk [vmem:[%s1016 + $0x140] sm:$0xff] %vm4805, %v4746
        %4847 = vst.msk [vmem:[%s1016 + $0x148] sm:$0xff] %vm4805, %v4748
        %4848 = vst.msk [vmem:[%s1016 + $0x150] sm:$0xff] %vm4805, %v4751
        %4849 = vst.msk [vmem:[%s1016 + $0x158] sm:$0xff] %vm4805, %v4753
        %4850 = vst.msk [vmem:[%s1016 + $0x160] sm:$0xff] %vm4805, %v4756
        %4851 = vst.msk [vmem:[%s1016 + $0x168] sm:$0xff] %vm4805, %v4758
        %4852 = vst.msk [vmem:[%s1016 + $0x170] sm:$0xff] %vm4805, %v4761
        %4853 = vst.msk [vmem:[%s1016 + $0x178] sm:$0xff] %vm4805, %v4763
        %4854 = vst.msk [vmem:[%s1016 + $0x180] sm:$0xff] %vm4805, %v4766
        %4855 = vst.msk [vmem:[%s1016 + $0x188] sm:$0xff] %vm4805, %v4768
        %4856 = vst.msk [vmem:[%s1016 + $0x190] sm:$0xff] %vm4805, %v4771
        %4857 = vst.msk [vmem:[%s1016 + $0x198] sm:$0xff] %vm4805, %v4773
        %4858 = vst.msk [vmem:[%s1016 + $0x1a0] sm:$0xff] %vm4805, %v4776
        %4859 = vst.msk [vmem:[%s1016 + $0x1a8] sm:$0xff] %vm4805, %v4778
        %4860 = vst.msk [vmem:[%s1016 + $0x1b0] sm:$0xff] %vm4805, %v4781
        %4861 = vst.msk [vmem:[%s1016 + $0x1b8] sm:$0xff] %vm4805, %v4783
        %4862 = vst.msk [vmem:[%s1016 + $0x1c0] sm:$0xff] %vm4805, %v4786
        %4863 = vst.msk [vmem:[%s1016 + $0x1c8] sm:$0xff] %vm4805, %v4788
        %4864 = vst.msk [vmem:[%s1016 + $0x1d0] sm:$0xff] %vm4805, %v4791
        %4865 = vst.msk [vmem:[%s1016 + $0x1d8] sm:$0xff] %vm4805, %v4793
        %4866 = vst.msk [vmem:[%s1016 + $0x1e0] sm:$0xff] %vm4805, %v4796
        %4867 = vst.msk [vmem:[%s1016 + $0x1e8] sm:$0xff] %vm4805, %v4798
        %4868 = vst.msk [vmem:[%s1016 + $0x1f0] sm:$0xff] %vm4805, %v4801
        %4869 = vst.msk [vmem:[%s1016 + $0x1f8] sm:$0xff] %vm4805, %v4803
        %s4870 = smul.u32 64, %s46
        %p4871 = scmp.lt.s32.totalorder %s4870, 511
        %s4872 = scalar_select %p4871, %s4870, 511
        %s4873 = smul.addr %s4872, 8
        %s4874 = scalar_lea.vmem %s22, %s4873
        // Predicated region
        $region193: #{tpu_custom_call.1} parent=107 // pred_check
          %p4875 = pneg %p531
        $region194: #{tpu_custom_call.1} parent=107 // pred_check_branch
          %4877 = sbr.rel (%p4875) target = $region196
        $region195: #{tpu_custom_call.1} parent=107 // pred_region
          %s4878 = smul.u32 64, %s46
        $region196: #{tpu_custom_call.1} parent=107 // pred_fallthru
          _
      $region108: #{tpu_custom_call.1} parent=5 // pred_fallthru
        _
      %p4879 = scmp.le.s32.totalorder 2, %s41
      // Predicated region
      $region197: #{tpu_custom_call.1} parent=5 // pred_check
        %p4880 = pneg %p4879
      $region198: #{tpu_custom_call.1} parent=5 // pred_check_branch
        %4882 = sbr.rel (%p4880) target = $region200
      $region199: #{tpu_custom_call.1} parent=5 // pred_region
        %s4883 = ssub.s32 %s41, 2
        // Predicated region
        $region201: #{tpu_custom_call.1} parent=199 // pred_check
          %p4884 = pneg %p537
        $region202: #{tpu_custom_call.1} parent=199 // pred_check_branch
          %4886 = sbr.rel (%p4884) target = $region204
        $region203: #{tpu_custom_call.1} parent=199 // pred_region
          %s4887 = smul.u32 64, %s47
          %p4888 = scmp.lt.s32.totalorder %s4887, 511
          %s4889 = scalar_select %p4888, %s4887, 511
          %s4890 = smul.addr %s4889, 8
          %s4891 = scalar_lea.vmem %s22, %s4890
        $region204: #{tpu_custom_call.1} parent=199 // pred_fallthru
          _
      $region200: #{tpu_custom_call.1} parent=5 // pred_fallthru
        _
    $region6: #{tpu_custom_call.1} parent=1 // loop_footer
      %s45 = sadd.s32 1, %s41
    $region7: #{tpu_custom_call.1} parent=1 // loop_footer_branch
      %40 = sbr.rel target = $region3
    $region8: #{tpu_custom_call.1} parent=1 // loop_exit
      _
    %4892 = vsyncpa [#allocation3], 1
    %s4893 = scalar_lea.sflag [#allocation3], 1
    %4894 = vsyncpa %s4893, 1
    %4895 = vsyncpa [#allocation5], 1
    %4896 = vsyncpa [#allocation8], 1
    %4897 = vsyncpa [#allocation11], 1
    %4898 = vsyncpa [#allocation14], 1
    %4899 = vsyncpa [#allocation17], 1
    %4900 = vsyncpa [#allocation20], 1
    %4901 = vsyncpa [#allocation23], 1
    %4902 = vsyncpa [#allocation26], 1
    %4903 = vsyncpa [#allocation29], 1
    %4904 = vsyncpa [#allocation32], 1

</llo_original>
